<compile_context>
chip_gen: v7x
topology: tpu7x:2x2x1
jax: 0.10.0
libtpu: 0.0.40
codegen_flags: <defaults>
</compile_context>

<pallas_src>
import functools

import jax
import jax.numpy as jnp
from jax.experimental import pallas as pl
from jax.experimental.pallas import tpu as pltpu


# ------------------------------ fused forward kernel ------------------------------
def _sohlstm_fused_kernel(x_ref, *args, num_layers, hidden_size):
    H = hidden_size
    n_lstm = 3 * num_layers
    lstm_refs = args[:n_lstm]                               # (w_ih_t, w_hh_t, bias) / layer
    w1_ref, b1_ref, w2_ref, b2_ref = args[n_lstm:n_lstm + 4]
    out_ref = args[n_lstm + 4]

    T = x_ref.shape[0]
    B = x_ref.shape[1]

    # Layer inputs as SSA values (no VMEM scratch bounce between layers).
    xs = [x_ref[t] for t in range(T)]                       # T x (B, in0)

    h = None
    for layer in range(num_layers):                         # static unrolled layer loop
        wih = lstm_refs[3 * layer][...]                     # (in, 4H)
        whh = lstm_refs[3 * layer + 1][...]                 # (H, 4H)
        bias = lstm_refs[3 * layer + 2][...]                # (1, 4H)
        last_layer = layer == num_layers - 1

        # Hoisted input projections (+ fused bias): independent of the recurrence, so
        # they sit OFF the serial per-step chain and can overlap with the previous
        # layer's remaining steps (they only depend on that layer's h_t SSA values).
        gxs = [jnp.dot(x_t, wih, preferred_element_type=jnp.float32) + bias for x_t in xs]

        h = jnp.zeros((B, H), jnp.float32)
        c = jnp.zeros((B, H), jnp.float32)
        hs = []
        for t in range(T):                                  # static unroll; SSA-carried h,c
            if t == 0:
                gates = gxs[0]                              # h == 0 -> skip h @ W_hh
            else:
                gates = gxs[t] + jnp.dot(h, whh, preferred_element_type=jnp.float32)
            # Full-tile activations (2 EUP pushes per cell), then static lane slices.
            sig = jax.nn.sigmoid(gates)                     # (B, 4H)
            tnh = jnp.tanh(gates)                           # (B, 4H)
            i_g = sig[:, 0 * H:1 * H]
            f_g = sig[:, 1 * H:2 * H]
            g_g = tnh[:, 2 * H:3 * H]
            o_g = sig[:, 3 * H:4 * H]
            c = i_g * g_g if t == 0 else f_g * c + i_g * g_g
            h = o_g * jnp.tanh(c)
            if not last_layer:
                hs.append(h)                                # stays in vregs, never VMEM/HBM
        if not last_layer:
            xs = hs                                         # next layer's input sequence

    # FC head on the final hidden state of the last layer (Dropout = identity in eval).
    z = jnp.dot(h, w1_ref[...], preferred_element_type=jnp.float32) + b1_ref[...]
    z = jnp.where(z >= 0, z, 0.01 * z)                      # LeakyReLU(negative_slope=0.01)
    # Linear(Hh -> 1) as a lane reduction instead of a 1-column matmul.
    y = jnp.sum(z * w2_ref[...], axis=-1, keepdims=True) + b2_ref[0]
    out_ref[...] = y                                        # (B, 1)


def sohlstm_forward(params, x_bti, hidden_size):
    """x_bti: (B, T, input_size) -> (B,)  (matches SOHLSTM.forward in eval mode)."""
    x = jnp.transpose(x_bti, (1, 0, 2)).astype(jnp.float32)  # time-major (T, B, I)
    T, B, _ = x.shape
    H = hidden_size
    num_layers = len(params["lstm"])

    inputs = [x]
    vmem = pl.BlockSpec(memory_space=pltpu.MemorySpace.VMEM)
    in_specs = [vmem]
    for lp in params["lstm"]:
        inputs += [lp["w_ih_t"], lp["w_hh_t"], lp["bias"]]
        in_specs += [vmem, vmem, vmem]
    inputs += [params["fc"]["w1_t"], params["fc"]["b1"], params["fc"]["w2"],
               params["fc"]["b2"]]
    in_specs += [vmem, vmem, vmem,
                 pl.BlockSpec(memory_space=pltpu.MemorySpace.SMEM)]  # b2 scalar in SMEM

    kernel = functools.partial(_sohlstm_fused_kernel,
                               num_layers=num_layers, hidden_size=H)
    y = pl.pallas_call(
        kernel,
        out_shape=jax.ShapeDtypeStruct((B, 1), jnp.float32),
        in_specs=in_specs,
        out_specs=pl.BlockSpec(memory_space=pltpu.MemorySpace.VMEM),
    )(*inputs)
    return y[:, 0]  # squeeze(-1)


# --------------------------------- params / init ---------------------------------
def init_params(key, input_size, hidden_size, num_layers):
    """Deterministic init mimicking PyTorch: U(-1/sqrt(H), 1/sqrt(H))."""
    H = hidden_size
    params = {"lstm": [], "fc": {}}
    k = 1.0 / jnp.sqrt(jnp.float32(H))
    keys = jax.random.split(key, num_layers * 4 + 4)
    ki = 0
    for layer in range(num_layers):
        in_sz = input_size if layer == 0 else H
        w_ih = jax.random.uniform(keys[ki], (4 * H, in_sz), jnp.float32, -k, k); ki += 1
        w_hh = jax.random.uniform(keys[ki], (4 * H, H), jnp.float32, -k, k); ki += 1
        b_ih = jax.random.uniform(keys[ki], (4 * H,), jnp.float32, -k, k); ki += 1
        b_hh = jax.random.uniform(keys[ki], (4 * H,), jnp.float32, -k, k); ki += 1
        params["lstm"].append({
            "w_ih_t": jnp.transpose(w_ih),                 # (in, 4H)
            "w_hh_t": jnp.transpose(w_hh),                 # (H, 4H)
            "bias": (b_ih + b_hh).reshape(1, 4 * H),       # (1, 4H), gate order i,f,g,o
        })
    Hh = H // 2
    k1 = 1.0 / jnp.sqrt(jnp.float32(H))
    k2 = 1.0 / jnp.sqrt(jnp.float32(Hh))
    w1 = jax.random.uniform(keys[ki], (Hh, H), jnp.float32, -k1, k1); ki += 1
    b1 = jax.random.uniform(keys[ki], (Hh,), jnp.float32, -k1, k1); ki += 1
    w2 = jax.random.uniform(keys[ki], (1, Hh), jnp.float32, -k2, k2); ki += 1
    b2 = jax.random.uniform(keys[ki], (1,), jnp.float32, -k2, k2); ki += 1
    params["fc"] = {
        "w1_t": jnp.transpose(w1),          # (H, Hh)
        "b1": b1.reshape(1, Hh),            # (1, Hh)
        "w2": w2,                           # (1, Hh) row — used as a lane reduction
        "b2": b2,                           # (1,) SMEM scalar
    }
    return params


# ------------------------------ pure-JAX reference ------------------------------
def _ref_forward(params, x_bti, hidden_size):
    H = hidden_size
    x = jnp.transpose(x_bti, (1, 0, 2)).astype(jnp.float32)
    out = x
    for lp in params["lstm"]:
        B = out.shape[1]

        def step(carry, x_t, lp=lp):
            h, c = carry
            gates = x_t @ lp["w_ih_t"] + h @ lp["w_hh_t"] + lp["bias"]
            i = jax.nn.sigmoid(gates[:, 0*H:1*H])
            f = jax.nn.sigmoid(gates[:, 1*H:2*H])
            g = jnp.tanh(gates[:, 2*H:3*H])
            o = jax.nn.sigmoid(gates[:, 3*H:4*H])
            c = f * c + i * g
            h = o * jnp.tanh(c)
            return (h, c), h

        init = (jnp.zeros((B, H), jnp.float32), jnp.zeros((B, H), jnp.float32))
        _, out = jax.lax.scan(step, init, out)
    h_last = out[-1]
    z = h_last @ params["fc"]["w1_t"] + params["fc"]["b1"]
    z = jnp.where(z >= 0, z, 0.01 * z)
    y = z @ params["fc"]["w2"].T + params["fc"]["b2"]
    return y[:, 0]


if __name__ == "__main__":
    INPUT_SIZE = 4      # "4inputs"
    HIDDEN_SIZE = 32
    NUM_LAYERS = 2
    BATCH = 2           # TODO(synk): scale B >= 8 (ideally MXU-row width) for throughput
    SEQ = 8

    key = jax.random.PRNGKey(0)
    pkey, xkey = jax.random.split(key)
    params = init_params(pkey, INPUT_SIZE, HIDDEN_SIZE, NUM_LAYERS)
    x = jax.random.normal(xkey, (BATCH, SEQ, INPUT_SIZE), jnp.float32)

    fwd = jax.jit(functools.partial(sohlstm_forward, hidden_size=HIDDEN_SIZE))
    y = jax.block_until_ready(fwd(params, x))
    y_ref = jax.block_until_ready(_ref_forward(params, x, HIDDEN_SIZE))

    assert y.shape == (BATCH,), y.shape
    assert jnp.allclose(y, y_ref, atol=1e-4, rtol=1e-4), (y, y_ref)
    print("KERNEL_OK")
</pallas_src>

<mosaic_0001>
module attributes {stable_mosaic.version = 11 : i64} {
  func.func @_sohlstm_fused_kernel(%arg0: memref<8x2x4xf32, #tpu.memory_space<vmem>>, %arg1: memref<4x128xf32, #tpu.memory_space<vmem>>, %arg2: memref<32x128xf32, #tpu.memory_space<vmem>>, %arg3: memref<1x128xf32, #tpu.memory_space<vmem>>, %arg4: memref<32x128xf32, #tpu.memory_space<vmem>>, %arg5: memref<32x128xf32, #tpu.memory_space<vmem>>, %arg6: memref<1x128xf32, #tpu.memory_space<vmem>>, %arg7: memref<32x16xf32, #tpu.memory_space<vmem>>, %arg8: memref<1x16xf32, #tpu.memory_space<vmem>>, %arg9: memref<1x16xf32, #tpu.memory_space<vmem>>, %arg10: memref<1xf32, #tpu.memory_space<smem>>, %arg11: memref<2x1xf32, #tpu.memory_space<vmem>>) attributes {dimension_semantics = [], scalar_prefetch = 0 : i64, scratch_operands = 0 : i64, tpu.core_type = #tpu.core_type<tc>} {
    %c0 = arith.constant 0 : index
    %c0_0 = arith.constant 0 : index
    %c0_1 = arith.constant 0 : index
    %0 = vector.load %arg0[%c0, %c0_0, %c0_1] : memref<8x2x4xf32, #tpu.memory_space<vmem>>, vector<1x2x4xf32>
    %1 = vector.shape_cast %0 : vector<1x2x4xf32> to vector<2x4xf32>
    %c1 = arith.constant 1 : index
    %c0_2 = arith.constant 0 : index
    %c0_3 = arith.constant 0 : index
    %2 = vector.load %arg0[%c1, %c0_2, %c0_3] : memref<8x2x4xf32, #tpu.memory_space<vmem>>, vector<1x2x4xf32>
    %3 = vector.shape_cast %2 : vector<1x2x4xf32> to vector<2x4xf32>
    %c2 = arith.constant 2 : index
    %c0_4 = arith.constant 0 : index
    %c0_5 = arith.constant 0 : index
    %4 = vector.load %arg0[%c2, %c0_4, %c0_5] : memref<8x2x4xf32, #tpu.memory_space<vmem>>, vector<1x2x4xf32>
    %5 = vector.shape_cast %4 : vector<1x2x4xf32> to vector<2x4xf32>
    %c3 = arith.constant 3 : index
    %c0_6 = arith.constant 0 : index
    %c0_7 = arith.constant 0 : index
    %6 = vector.load %arg0[%c3, %c0_6, %c0_7] : memref<8x2x4xf32, #tpu.memory_space<vmem>>, vector<1x2x4xf32>
    %7 = vector.shape_cast %6 : vector<1x2x4xf32> to vector<2x4xf32>
    %c4 = arith.constant 4 : index
    %c0_8 = arith.constant 0 : index
    %c0_9 = arith.constant 0 : index
    %8 = vector.load %arg0[%c4, %c0_8, %c0_9] : memref<8x2x4xf32, #tpu.memory_space<vmem>>, vector<1x2x4xf32>
    %9 = vector.shape_cast %8 : vector<1x2x4xf32> to vector<2x4xf32>
    %c5 = arith.constant 5 : index
    %c0_10 = arith.constant 0 : index
    %c0_11 = arith.constant 0 : index
    %10 = vector.load %arg0[%c5, %c0_10, %c0_11] : memref<8x2x4xf32, #tpu.memory_space<vmem>>, vector<1x2x4xf32>
    %11 = vector.shape_cast %10 : vector<1x2x4xf32> to vector<2x4xf32>
    %c6 = arith.constant 6 : index
    %c0_12 = arith.constant 0 : index
    %c0_13 = arith.constant 0 : index
    %12 = vector.load %arg0[%c6, %c0_12, %c0_13] : memref<8x2x4xf32, #tpu.memory_space<vmem>>, vector<1x2x4xf32>
    %13 = vector.shape_cast %12 : vector<1x2x4xf32> to vector<2x4xf32>
    %c7 = arith.constant 7 : index
    %c0_14 = arith.constant 0 : index
    %c0_15 = arith.constant 0 : index
    %14 = vector.load %arg0[%c7, %c0_14, %c0_15] : memref<8x2x4xf32, #tpu.memory_space<vmem>>, vector<1x2x4xf32>
    %15 = vector.shape_cast %14 : vector<1x2x4xf32> to vector<2x4xf32>
    %c0_16 = arith.constant 0 : index
    %c0_17 = arith.constant 0 : index
    %16 = vector.load %arg1[%c0_16, %c0_17] : memref<4x128xf32, #tpu.memory_space<vmem>>, vector<4x128xf32>
    %c0_18 = arith.constant 0 : index
    %c0_19 = arith.constant 0 : index
    %17 = vector.load %arg2[%c0_18, %c0_19] : memref<32x128xf32, #tpu.memory_space<vmem>>, vector<32x128xf32>
    %c0_20 = arith.constant 0 : index
    %c0_21 = arith.constant 0 : index
    %18 = vector.load %arg3[%c0_20, %c0_21] : memref<1x128xf32, #tpu.memory_space<vmem>>, vector<1x128xf32>
    %cst = arith.constant dense<0.000000e+00> : vector<2x128xf32>
    %19 = tpu.matmul %1, %16, %cst {dimension_numbers = #tpu.dot_dimension_numbers<[1], [0], [0], [1], [0, 0, 1, 1], [], []>} : vector<2x4xf32>, vector<4x128xf32>, vector<2x128xf32> -> vector<2x128xf32>
    %20 = vector.broadcast %18 : vector<1x128xf32> to vector<2x128xf32>
    %21 = arith.addf %19, %20 : vector<2x128xf32>
    %cst_22 = arith.constant dense<0.000000e+00> : vector<2x128xf32>
    %22 = tpu.matmul %3, %16, %cst_22 {dimension_numbers = #tpu.dot_dimension_numbers<[1], [0], [0], [1], [0, 0, 1, 1], [], []>} : vector<2x4xf32>, vector<4x128xf32>, vector<2x128xf32> -> vector<2x128xf32>
    %23 = vector.broadcast %18 : vector<1x128xf32> to vector<2x128xf32>
    %24 = arith.addf %22, %23 : vector<2x128xf32>
    %cst_23 = arith.constant dense<0.000000e+00> : vector<2x128xf32>
    %25 = tpu.matmul %5, %16, %cst_23 {dimension_numbers = #tpu.dot_dimension_numbers<[1], [0], [0], [1], [0, 0, 1, 1], [], []>} : vector<2x4xf32>, vector<4x128xf32>, vector<2x128xf32> -> vector<2x128xf32>
    %26 = vector.broadcast %18 : vector<1x128xf32> to vector<2x128xf32>
    %27 = arith.addf %25, %26 : vector<2x128xf32>
    %cst_24 = arith.constant dense<0.000000e+00> : vector<2x128xf32>
    %28 = tpu.matmul %7, %16, %cst_24 {dimension_numbers = #tpu.dot_dimension_numbers<[1], [0], [0], [1], [0, 0, 1, 1], [], []>} : vector<2x4xf32>, vector<4x128xf32>, vector<2x128xf32> -> vector<2x128xf32>
    %29 = vector.broadcast %18 : vector<1x128xf32> to vector<2x128xf32>
    %30 = arith.addf %28, %29 : vector<2x128xf32>
    %cst_25 = arith.constant dense<0.000000e+00> : vector<2x128xf32>
    %31 = tpu.matmul %9, %16, %cst_25 {dimension_numbers = #tpu.dot_dimension_numbers<[1], [0], [0], [1], [0, 0, 1, 1], [], []>} : vector<2x4xf32>, vector<4x128xf32>, vector<2x128xf32> -> vector<2x128xf32>
    %32 = vector.broadcast %18 : vector<1x128xf32> to vector<2x128xf32>
    %33 = arith.addf %31, %32 : vector<2x128xf32>
    %cst_26 = arith.constant dense<0.000000e+00> : vector<2x128xf32>
    %34 = tpu.matmul %11, %16, %cst_26 {dimension_numbers = #tpu.dot_dimension_numbers<[1], [0], [0], [1], [0, 0, 1, 1], [], []>} : vector<2x4xf32>, vector<4x128xf32>, vector<2x128xf32> -> vector<2x128xf32>
    %35 = vector.broadcast %18 : vector<1x128xf32> to vector<2x128xf32>
    %36 = arith.addf %34, %35 : vector<2x128xf32>
    %cst_27 = arith.constant dense<0.000000e+00> : vector<2x128xf32>
    %37 = tpu.matmul %13, %16, %cst_27 {dimension_numbers = #tpu.dot_dimension_numbers<[1], [0], [0], [1], [0, 0, 1, 1], [], []>} : vector<2x4xf32>, vector<4x128xf32>, vector<2x128xf32> -> vector<2x128xf32>
    %38 = vector.broadcast %18 : vector<1x128xf32> to vector<2x128xf32>
    %39 = arith.addf %37, %38 : vector<2x128xf32>
    %cst_28 = arith.constant dense<0.000000e+00> : vector<2x128xf32>
    %40 = tpu.matmul %15, %16, %cst_28 {dimension_numbers = #tpu.dot_dimension_numbers<[1], [0], [0], [1], [0, 0, 1, 1], [], []>} : vector<2x4xf32>, vector<4x128xf32>, vector<2x128xf32> -> vector<2x128xf32>
    %41 = vector.broadcast %18 : vector<1x128xf32> to vector<2x128xf32>
    %42 = arith.addf %40, %41 : vector<2x128xf32>
    %43 = arith.negf %21 : vector<2x128xf32>
    %44 = math.exp %43 : vector<2x128xf32>
    %cst_29 = arith.constant 1.000000e+00 : f32
    %45 = vector.broadcast %cst_29 : f32 to vector<2x128xf32>
    %46 = arith.addf %45, %44 : vector<2x128xf32>
    %47 = arith.divf %45, %46 : vector<2x128xf32>
    %48 = math.tanh %21 : vector<2x128xf32>
    %49 = vector.extract_strided_slice %47 {offsets = [0, 0], sizes = [2, 32], strides = [1, 1]} : vector<2x128xf32> to vector<2x32xf32>
    %50 = vector.extract_strided_slice %48 {offsets = [0, 64], sizes = [2, 32], strides = [1, 1]} : vector<2x128xf32> to vector<2x32xf32>
    %51 = vector.extract_strided_slice %47 {offsets = [0, 96], sizes = [2, 32], strides = [1, 1]} : vector<2x128xf32> to vector<2x32xf32>
    %52 = arith.mulf %49, %50 : vector<2x32xf32>
    %53 = math.tanh %52 : vector<2x32xf32>
    %54 = arith.mulf %51, %53 : vector<2x32xf32>
    %cst_30 = arith.constant dense<0.000000e+00> : vector<2x128xf32>
    %55 = tpu.matmul %54, %17, %cst_30 {dimension_numbers = #tpu.dot_dimension_numbers<[1], [0], [0], [1], [0, 0, 1, 1], [], []>} : vector<2x32xf32>, vector<32x128xf32>, vector<2x128xf32> -> vector<2x128xf32>
    %56 = arith.addf %24, %55 : vector<2x128xf32>
    %57 = arith.negf %56 : vector<2x128xf32>
    %58 = math.exp %57 : vector<2x128xf32>
    %cst_31 = arith.constant 1.000000e+00 : f32
    %59 = vector.broadcast %cst_31 : f32 to vector<2x128xf32>
    %60 = arith.addf %59, %58 : vector<2x128xf32>
    %61 = arith.divf %59, %60 : vector<2x128xf32>
    %62 = math.tanh %56 : vector<2x128xf32>
    %63 = vector.extract_strided_slice %61 {offsets = [0, 0], sizes = [2, 32], strides = [1, 1]} : vector<2x128xf32> to vector<2x32xf32>
    %64 = vector.extract_strided_slice %61 {offsets = [0, 32], sizes = [2, 32], strides = [1, 1]} : vector<2x128xf32> to vector<2x32xf32>
    %65 = vector.extract_strided_slice %62 {offsets = [0, 64], sizes = [2, 32], strides = [1, 1]} : vector<2x128xf32> to vector<2x32xf32>
    %66 = vector.extract_strided_slice %61 {offsets = [0, 96], sizes = [2, 32], strides = [1, 1]} : vector<2x128xf32> to vector<2x32xf32>
    %67 = arith.mulf %64, %52 : vector<2x32xf32>
    %68 = arith.mulf %63, %65 : vector<2x32xf32>
    %69 = arith.addf %67, %68 : vector<2x32xf32>
    %70 = math.tanh %69 : vector<2x32xf32>
    %71 = arith.mulf %66, %70 : vector<2x32xf32>
    %cst_32 = arith.constant dense<0.000000e+00> : vector<2x128xf32>
    %72 = tpu.matmul %71, %17, %cst_32 {dimension_numbers = #tpu.dot_dimension_numbers<[1], [0], [0], [1], [0, 0, 1, 1], [], []>} : vector<2x32xf32>, vector<32x128xf32>, vector<2x128xf32> -> vector<2x128xf32>
    %73 = arith.addf %27, %72 : vector<2x128xf32>
    %74 = arith.negf %73 : vector<2x128xf32>
    %75 = math.exp %74 : vector<2x128xf32>
    %cst_33 = arith.constant 1.000000e+00 : f32
    %76 = vector.broadcast %cst_33 : f32 to vector<2x128xf32>
    %77 = arith.addf %76, %75 : vector<2x128xf32>
    %78 = arith.divf %76, %77 : vector<2x128xf32>
    %79 = math.tanh %73 : vector<2x128xf32>
    %80 = vector.extract_strided_slice %78 {offsets = [0, 0], sizes = [2, 32], strides = [1, 1]} : vector<2x128xf32> to vector<2x32xf32>
    %81 = vector.extract_strided_slice %78 {offsets = [0, 32], sizes = [2, 32], strides = [1, 1]} : vector<2x128xf32> to vector<2x32xf32>
    %82 = vector.extract_strided_slice %79 {offsets = [0, 64], sizes = [2, 32], strides = [1, 1]} : vector<2x128xf32> to vector<2x32xf32>
    %83 = vector.extract_strided_slice %78 {offsets = [0, 96], sizes = [2, 32], strides = [1, 1]} : vector<2x128xf32> to vector<2x32xf32>
    %84 = arith.mulf %81, %69 : vector<2x32xf32>
    %85 = arith.mulf %80, %82 : vector<2x32xf32>
    %86 = arith.addf %84, %85 : vector<2x32xf32>
    %87 = math.tanh %86 : vector<2x32xf32>
    %88 = arith.mulf %83, %87 : vector<2x32xf32>
    %cst_34 = arith.constant dense<0.000000e+00> : vector<2x128xf32>
    %89 = tpu.matmul %88, %17, %cst_34 {dimension_numbers = #tpu.dot_dimension_numbers<[1], [0], [0], [1], [0, 0, 1, 1], [], []>} : vector<2x32xf32>, vector<32x128xf32>, vector<2x128xf32> -> vector<2x128xf32>
    %90 = arith.addf %30, %89 : vector<2x128xf32>
    %91 = arith.negf %90 : vector<2x128xf32>
    %92 = math.exp %91 : vector<2x128xf32>
    %cst_35 = arith.constant 1.000000e+00 : f32
    %93 = vector.broadcast %cst_35 : f32 to vector<2x128xf32>
    %94 = arith.addf %93, %92 : vector<2x128xf32>
    %95 = arith.divf %93, %94 : vector<2x128xf32>
    %96 = math.tanh %90 : vector<2x128xf32>
    %97 = vector.extract_strided_slice %95 {offsets = [0, 0], sizes = [2, 32], strides = [1, 1]} : vector<2x128xf32> to vector<2x32xf32>
    %98 = vector.extract_strided_slice %95 {offsets = [0, 32], sizes = [2, 32], strides = [1, 1]} : vector<2x128xf32> to vector<2x32xf32>
    %99 = vector.extract_strided_slice %96 {offsets = [0, 64], sizes = [2, 32], strides = [1, 1]} : vector<2x128xf32> to vector<2x32xf32>
    %100 = vector.extract_strided_slice %95 {offsets = [0, 96], sizes = [2, 32], strides = [1, 1]} : vector<2x128xf32> to vector<2x32xf32>
    %101 = arith.mulf %98, %86 : vector<2x32xf32>
    %102 = arith.mulf %97, %99 : vector<2x32xf32>
    %103 = arith.addf %101, %102 : vector<2x32xf32>
    %104 = math.tanh %103 : vector<2x32xf32>
    %105 = arith.mulf %100, %104 : vector<2x32xf32>
    %cst_36 = arith.constant dense<0.000000e+00> : vector<2x128xf32>
    %106 = tpu.matmul %105, %17, %cst_36 {dimension_numbers = #tpu.dot_dimension_numbers<[1], [0], [0], [1], [0, 0, 1, 1], [], []>} : vector<2x32xf32>, vector<32x128xf32>, vector<2x128xf32> -> vector<2x128xf32>
    %107 = arith.addf %33, %106 : vector<2x128xf32>
    %108 = arith.negf %107 : vector<2x128xf32>
    %109 = math.exp %108 : vector<2x128xf32>
    %cst_37 = arith.constant 1.000000e+00 : f32
    %110 = vector.broadcast %cst_37 : f32 to vector<2x128xf32>
    %111 = arith.addf %110, %109 : vector<2x128xf32>
    %112 = arith.divf %110, %111 : vector<2x128xf32>
    %113 = math.tanh %107 : vector<2x128xf32>
    %114 = vector.extract_strided_slice %112 {offsets = [0, 0], sizes = [2, 32], strides = [1, 1]} : vector<2x128xf32> to vector<2x32xf32>
    %115 = vector.extract_strided_slice %112 {offsets = [0, 32], sizes = [2, 32], strides = [1, 1]} : vector<2x128xf32> to vector<2x32xf32>
    %116 = vector.extract_strided_slice %113 {offsets = [0, 64], sizes = [2, 32], strides = [1, 1]} : vector<2x128xf32> to vector<2x32xf32>
    %117 = vector.extract_strided_slice %112 {offsets = [0, 96], sizes = [2, 32], strides = [1, 1]} : vector<2x128xf32> to vector<2x32xf32>
    %118 = arith.mulf %115, %103 : vector<2x32xf32>
    %119 = arith.mulf %114, %116 : vector<2x32xf32>
    %120 = arith.addf %118, %119 : vector<2x32xf32>
    %121 = math.tanh %120 : vector<2x32xf32>
    %122 = arith.mulf %117, %121 : vector<2x32xf32>
    %cst_38 = arith.constant dense<0.000000e+00> : vector<2x128xf32>
    %123 = tpu.matmul %122, %17, %cst_38 {dimension_numbers = #tpu.dot_dimension_numbers<[1], [0], [0], [1], [0, 0, 1, 1], [], []>} : vector<2x32xf32>, vector<32x128xf32>, vector<2x128xf32> -> vector<2x128xf32>
    %124 = arith.addf %36, %123 : vector<2x128xf32>
    %125 = arith.negf %124 : vector<2x128xf32>
    %126 = math.exp %125 : vector<2x128xf32>
    %cst_39 = arith.constant 1.000000e+00 : f32
    %127 = vector.broadcast %cst_39 : f32 to vector<2x128xf32>
    %128 = arith.addf %127, %126 : vector<2x128xf32>
    %129 = arith.divf %127, %128 : vector<2x128xf32>
    %130 = math.tanh %124 : vector<2x128xf32>
    %131 = vector.extract_strided_slice %129 {offsets = [0, 0], sizes = [2, 32], strides = [1, 1]} : vector<2x128xf32> to vector<2x32xf32>
    %132 = vector.extract_strided_slice %129 {offsets = [0, 32], sizes = [2, 32], strides = [1, 1]} : vector<2x128xf32> to vector<2x32xf32>
    %133 = vector.extract_strided_slice %130 {offsets = [0, 64], sizes = [2, 32], strides = [1, 1]} : vector<2x128xf32> to vector<2x32xf32>
    %134 = vector.extract_strided_slice %129 {offsets = [0, 96], sizes = [2, 32], strides = [1, 1]} : vector<2x128xf32> to vector<2x32xf32>
    %135 = arith.mulf %132, %120 : vector<2x32xf32>
    %136 = arith.mulf %131, %133 : vector<2x32xf32>
    %137 = arith.addf %135, %136 : vector<2x32xf32>
    %138 = math.tanh %137 : vector<2x32xf32>
    %139 = arith.mulf %134, %138 : vector<2x32xf32>
    %cst_40 = arith.constant dense<0.000000e+00> : vector<2x128xf32>
    %140 = tpu.matmul %139, %17, %cst_40 {dimension_numbers = #tpu.dot_dimension_numbers<[1], [0], [0], [1], [0, 0, 1, 1], [], []>} : vector<2x32xf32>, vector<32x128xf32>, vector<2x128xf32> -> vector<2x128xf32>
    %141 = arith.addf %39, %140 : vector<2x128xf32>
    %142 = arith.negf %141 : vector<2x128xf32>
    %143 = math.exp %142 : vector<2x128xf32>
    %cst_41 = arith.constant 1.000000e+00 : f32
    %144 = vector.broadcast %cst_41 : f32 to vector<2x128xf32>
    %145 = arith.addf %144, %143 : vector<2x128xf32>
    %146 = arith.divf %144, %145 : vector<2x128xf32>
    %147 = math.tanh %141 : vector<2x128xf32>
    %148 = vector.extract_strided_slice %146 {offsets = [0, 0], sizes = [2, 32], strides = [1, 1]} : vector<2x128xf32> to vector<2x32xf32>
    %149 = vector.extract_strided_slice %146 {offsets = [0, 32], sizes = [2, 32], strides = [1, 1]} : vector<2x128xf32> to vector<2x32xf32>
    %150 = vector.extract_strided_slice %147 {offsets = [0, 64], sizes = [2, 32], strides = [1, 1]} : vector<2x128xf32> to vector<2x32xf32>
    %151 = vector.extract_strided_slice %146 {offsets = [0, 96], sizes = [2, 32], strides = [1, 1]} : vector<2x128xf32> to vector<2x32xf32>
    %152 = arith.mulf %149, %137 : vector<2x32xf32>
    %153 = arith.mulf %148, %150 : vector<2x32xf32>
    %154 = arith.addf %152, %153 : vector<2x32xf32>
    %155 = math.tanh %154 : vector<2x32xf32>
    %156 = arith.mulf %151, %155 : vector<2x32xf32>
    %cst_42 = arith.constant dense<0.000000e+00> : vector<2x128xf32>
    %157 = tpu.matmul %156, %17, %cst_42 {dimension_numbers = #tpu.dot_dimension_numbers<[1], [0], [0], [1], [0, 0, 1, 1], [], []>} : vector<2x32xf32>, vector<32x128xf32>, vector<2x128xf32> -> vector<2x128xf32>
    %158 = arith.addf %42, %157 : vector<2x128xf32>
    %159 = arith.negf %158 : vector<2x128xf32>
    %160 = math.exp %159 : vector<2x128xf32>
    %cst_43 = arith.constant 1.000000e+00 : f32
    %161 = vector.broadcast %cst_43 : f32 to vector<2x128xf32>
    %162 = arith.addf %161, %160 : vector<2x128xf32>
    %163 = arith.divf %161, %162 : vector<2x128xf32>
    %164 = math.tanh %158 : vector<2x128xf32>
    %165 = vector.extract_strided_slice %163 {offsets = [0, 0], sizes = [2, 32], strides = [1, 1]} : vector<2x128xf32> to vector<2x32xf32>
    %166 = vector.extract_strided_slice %163 {offsets = [0, 32], sizes = [2, 32], strides = [1, 1]} : vector<2x128xf32> to vector<2x32xf32>
    %167 = vector.extract_strided_slice %164 {offsets = [0, 64], sizes = [2, 32], strides = [1, 1]} : vector<2x128xf32> to vector<2x32xf32>
    %168 = vector.extract_strided_slice %163 {offsets = [0, 96], sizes = [2, 32], strides = [1, 1]} : vector<2x128xf32> to vector<2x32xf32>
    %169 = arith.mulf %166, %154 : vector<2x32xf32>
    %170 = arith.mulf %165, %167 : vector<2x32xf32>
    %171 = arith.addf %169, %170 : vector<2x32xf32>
    %172 = math.tanh %171 : vector<2x32xf32>
    %173 = arith.mulf %168, %172 : vector<2x32xf32>
    %c0_44 = arith.constant 0 : index
    %c0_45 = arith.constant 0 : index
    %174 = vector.load %arg4[%c0_44, %c0_45] : memref<32x128xf32, #tpu.memory_space<vmem>>, vector<32x128xf32>
    %c0_46 = arith.constant 0 : index
    %c0_47 = arith.constant 0 : index
    %175 = vector.load %arg5[%c0_46, %c0_47] : memref<32x128xf32, #tpu.memory_space<vmem>>, vector<32x128xf32>
    %c0_48 = arith.constant 0 : index
    %c0_49 = arith.constant 0 : index
    %176 = vector.load %arg6[%c0_48, %c0_49] : memref<1x128xf32, #tpu.memory_space<vmem>>, vector<1x128xf32>
    %cst_50 = arith.constant dense<0.000000e+00> : vector<2x128xf32>
    %177 = tpu.matmul %54, %174, %cst_50 {dimension_numbers = #tpu.dot_dimension_numbers<[1], [0], [0], [1], [0, 0, 1, 1], [], []>} : vector<2x32xf32>, vector<32x128xf32>, vector<2x128xf32> -> vector<2x128xf32>
    %178 = vector.broadcast %176 : vector<1x128xf32> to vector<2x128xf32>
    %179 = arith.addf %177, %178 : vector<2x128xf32>
    %cst_51 = arith.constant dense<0.000000e+00> : vector<2x128xf32>
    %180 = tpu.matmul %71, %174, %cst_51 {dimension_numbers = #tpu.dot_dimension_numbers<[1], [0], [0], [1], [0, 0, 1, 1], [], []>} : vector<2x32xf32>, vector<32x128xf32>, vector<2x128xf32> -> vector<2x128xf32>
    %181 = vector.broadcast %176 : vector<1x128xf32> to vector<2x128xf32>
    %182 = arith.addf %180, %181 : vector<2x128xf32>
    %cst_52 = arith.constant dense<0.000000e+00> : vector<2x128xf32>
    %183 = tpu.matmul %88, %174, %cst_52 {dimension_numbers = #tpu.dot_dimension_numbers<[1], [0], [0], [1], [0, 0, 1, 1], [], []>} : vector<2x32xf32>, vector<32x128xf32>, vector<2x128xf32> -> vector<2x128xf32>
    %184 = vector.broadcast %176 : vector<1x128xf32> to vector<2x128xf32>
    %185 = arith.addf %183, %184 : vector<2x128xf32>
    %cst_53 = arith.constant dense<0.000000e+00> : vector<2x128xf32>
    %186 = tpu.matmul %105, %174, %cst_53 {dimension_numbers = #tpu.dot_dimension_numbers<[1], [0], [0], [1], [0, 0, 1, 1], [], []>} : vector<2x32xf32>, vector<32x128xf32>, vector<2x128xf32> -> vector<2x128xf32>
    %187 = vector.broadcast %176 : vector<1x128xf32> to vector<2x128xf32>
    %188 = arith.addf %186, %187 : vector<2x128xf32>
    %cst_54 = arith.constant dense<0.000000e+00> : vector<2x128xf32>
    %189 = tpu.matmul %122, %174, %cst_54 {dimension_numbers = #tpu.dot_dimension_numbers<[1], [0], [0], [1], [0, 0, 1, 1], [], []>} : vector<2x32xf32>, vector<32x128xf32>, vector<2x128xf32> -> vector<2x128xf32>
    %190 = vector.broadcast %176 : vector<1x128xf32> to vector<2x128xf32>
    %191 = arith.addf %189, %190 : vector<2x128xf32>
    %cst_55 = arith.constant dense<0.000000e+00> : vector<2x128xf32>
    %192 = tpu.matmul %139, %174, %cst_55 {dimension_numbers = #tpu.dot_dimension_numbers<[1], [0], [0], [1], [0, 0, 1, 1], [], []>} : vector<2x32xf32>, vector<32x128xf32>, vector<2x128xf32> -> vector<2x128xf32>
    %193 = vector.broadcast %176 : vector<1x128xf32> to vector<2x128xf32>
    %194 = arith.addf %192, %193 : vector<2x128xf32>
    %cst_56 = arith.constant dense<0.000000e+00> : vector<2x128xf32>
    %195 = tpu.matmul %156, %174, %cst_56 {dimension_numbers = #tpu.dot_dimension_numbers<[1], [0], [0], [1], [0, 0, 1, 1], [], []>} : vector<2x32xf32>, vector<32x128xf32>, vector<2x128xf32> -> vector<2x128xf32>
    %196 = vector.broadcast %176 : vector<1x128xf32> to vector<2x128xf32>
    %197 = arith.addf %195, %196 : vector<2x128xf32>
    %cst_57 = arith.constant dense<0.000000e+00> : vector<2x128xf32>
    %198 = tpu.matmul %173, %174, %cst_57 {dimension_numbers = #tpu.dot_dimension_numbers<[1], [0], [0], [1], [0, 0, 1, 1], [], []>} : vector<2x32xf32>, vector<32x128xf32>, vector<2x128xf32> -> vector<2x128xf32>
    %199 = vector.broadcast %176 : vector<1x128xf32> to vector<2x128xf32>
    %200 = arith.addf %198, %199 : vector<2x128xf32>
    %201 = arith.negf %179 : vector<2x128xf32>
    %202 = math.exp %201 : vector<2x128xf32>
    %cst_58 = arith.constant 1.000000e+00 : f32
    %203 = vector.broadcast %cst_58 : f32 to vector<2x128xf32>
    %204 = arith.addf %203, %202 : vector<2x128xf32>
    %205 = arith.divf %203, %204 : vector<2x128xf32>
    %206 = math.tanh %179 : vector<2x128xf32>
    %207 = vector.extract_strided_slice %205 {offsets = [0, 0], sizes = [2, 32], strides = [1, 1]} : vector<2x128xf32> to vector<2x32xf32>
    %208 = vector.extract_strided_slice %206 {offsets = [0, 64], sizes = [2, 32], strides = [1, 1]} : vector<2x128xf32> to vector<2x32xf32>
    %209 = vector.extract_strided_slice %205 {offsets = [0, 96], sizes = [2, 32], strides = [1, 1]} : vector<2x128xf32> to vector<2x32xf32>
    %210 = arith.mulf %207, %208 : vector<2x32xf32>
    %211 = math.tanh %210 : vector<2x32xf32>
    %212 = arith.mulf %209, %211 : vector<2x32xf32>
    %cst_59 = arith.constant dense<0.000000e+00> : vector<2x128xf32>
    %213 = tpu.matmul %212, %175, %cst_59 {dimension_numbers = #tpu.dot_dimension_numbers<[1], [0], [0], [1], [0, 0, 1, 1], [], []>} : vector<2x32xf32>, vector<32x128xf32>, vector<2x128xf32> -> vector<2x128xf32>
    %214 = arith.addf %182, %213 : vector<2x128xf32>
    %215 = arith.negf %214 : vector<2x128xf32>
    %216 = math.exp %215 : vector<2x128xf32>
    %cst_60 = arith.constant 1.000000e+00 : f32
    %217 = vector.broadcast %cst_60 : f32 to vector<2x128xf32>
    %218 = arith.addf %217, %216 : vector<2x128xf32>
    %219 = arith.divf %217, %218 : vector<2x128xf32>
    %220 = math.tanh %214 : vector<2x128xf32>
    %221 = vector.extract_strided_slice %219 {offsets = [0, 0], sizes = [2, 32], strides = [1, 1]} : vector<2x128xf32> to vector<2x32xf32>
    %222 = vector.extract_strided_slice %219 {offsets = [0, 32], sizes = [2, 32], strides = [1, 1]} : vector<2x128xf32> to vector<2x32xf32>
    %223 = vector.extract_strided_slice %220 {offsets = [0, 64], sizes = [2, 32], strides = [1, 1]} : vector<2x128xf32> to vector<2x32xf32>
    %224 = vector.extract_strided_slice %219 {offsets = [0, 96], sizes = [2, 32], strides = [1, 1]} : vector<2x128xf32> to vector<2x32xf32>
    %225 = arith.mulf %222, %210 : vector<2x32xf32>
    %226 = arith.mulf %221, %223 : vector<2x32xf32>
    %227 = arith.addf %225, %226 : vector<2x32xf32>
    %228 = math.tanh %227 : vector<2x32xf32>
    %229 = arith.mulf %224, %228 : vector<2x32xf32>
    %cst_61 = arith.constant dense<0.000000e+00> : vector<2x128xf32>
    %230 = tpu.matmul %229, %175, %cst_61 {dimension_numbers = #tpu.dot_dimension_numbers<[1], [0], [0], [1], [0, 0, 1, 1], [], []>} : vector<2x32xf32>, vector<32x128xf32>, vector<2x128xf32> -> vector<2x128xf32>
    %231 = arith.addf %185, %230 : vector<2x128xf32>
    %232 = arith.negf %231 : vector<2x128xf32>
    %233 = math.exp %232 : vector<2x128xf32>
    %cst_62 = arith.constant 1.000000e+00 : f32
    %234 = vector.broadcast %cst_62 : f32 to vector<2x128xf32>
    %235 = arith.addf %234, %233 : vector<2x128xf32>
    %236 = arith.divf %234, %235 : vector<2x128xf32>
    %237 = math.tanh %231 : vector<2x128xf32>
    %238 = vector.extract_strided_slice %236 {offsets = [0, 0], sizes = [2, 32], strides = [1, 1]} : vector<2x128xf32> to vector<2x32xf32>
    %239 = vector.extract_strided_slice %236 {offsets = [0, 32], sizes = [2, 32], strides = [1, 1]} : vector<2x128xf32> to vector<2x32xf32>
    %240 = vector.extract_strided_slice %237 {offsets = [0, 64], sizes = [2, 32], strides = [1, 1]} : vector<2x128xf32> to vector<2x32xf32>
    %241 = vector.extract_strided_slice %236 {offsets = [0, 96], sizes = [2, 32], strides = [1, 1]} : vector<2x128xf32> to vector<2x32xf32>
    %242 = arith.mulf %239, %227 : vector<2x32xf32>
    %243 = arith.mulf %238, %240 : vector<2x32xf32>
    %244 = arith.addf %242, %243 : vector<2x32xf32>
    %245 = math.tanh %244 : vector<2x32xf32>
    %246 = arith.mulf %241, %245 : vector<2x32xf32>
    %cst_63 = arith.constant dense<0.000000e+00> : vector<2x128xf32>
    %247 = tpu.matmul %246, %175, %cst_63 {dimension_numbers = #tpu.dot_dimension_numbers<[1], [0], [0], [1], [0, 0, 1, 1], [], []>} : vector<2x32xf32>, vector<32x128xf32>, vector<2x128xf32> -> vector<2x128xf32>
    %248 = arith.addf %188, %247 : vector<2x128xf32>
    %249 = arith.negf %248 : vector<2x128xf32>
    %250 = math.exp %249 : vector<2x128xf32>
    %cst_64 = arith.constant 1.000000e+00 : f32
    %251 = vector.broadcast %cst_64 : f32 to vector<2x128xf32>
    %252 = arith.addf %251, %250 : vector<2x128xf32>
    %253 = arith.divf %251, %252 : vector<2x128xf32>
    %254 = math.tanh %248 : vector<2x128xf32>
    %255 = vector.extract_strided_slice %253 {offsets = [0, 0], sizes = [2, 32], strides = [1, 1]} : vector<2x128xf32> to vector<2x32xf32>
    %256 = vector.extract_strided_slice %253 {offsets = [0, 32], sizes = [2, 32], strides = [1, 1]} : vector<2x128xf32> to vector<2x32xf32>
    %257 = vector.extract_strided_slice %254 {offsets = [0, 64], sizes = [2, 32], strides = [1, 1]} : vector<2x128xf32> to vector<2x32xf32>
    %258 = vector.extract_strided_slice %253 {offsets = [0, 96], sizes = [2, 32], strides = [1, 1]} : vector<2x128xf32> to vector<2x32xf32>
    %259 = arith.mulf %256, %244 : vector<2x32xf32>
    %260 = arith.mulf %255, %257 : vector<2x32xf32>
    %261 = arith.addf %259, %260 : vector<2x32xf32>
    %262 = math.tanh %261 : vector<2x32xf32>
    %263 = arith.mulf %258, %262 : vector<2x32xf32>
    %cst_65 = arith.constant dense<0.000000e+00> : vector<2x128xf32>
    %264 = tpu.matmul %263, %175, %cst_65 {dimension_numbers = #tpu.dot_dimension_numbers<[1], [0], [0], [1], [0, 0, 1, 1], [], []>} : vector<2x32xf32>, vector<32x128xf32>, vector<2x128xf32> -> vector<2x128xf32>
    %265 = arith.addf %191, %264 : vector<2x128xf32>
    %266 = arith.negf %265 : vector<2x128xf32>
    %267 = math.exp %266 : vector<2x128xf32>
    %cst_66 = arith.constant 1.000000e+00 : f32
    %268 = vector.broadcast %cst_66 : f32 to vector<2x128xf32>
    %269 = arith.addf %268, %267 : vector<2x128xf32>
    %270 = arith.divf %268, %269 : vector<2x128xf32>
    %271 = math.tanh %265 : vector<2x128xf32>
    %272 = vector.extract_strided_slice %270 {offsets = [0, 0], sizes = [2, 32], strides = [1, 1]} : vector<2x128xf32> to vector<2x32xf32>
    %273 = vector.extract_strided_slice %270 {offsets = [0, 32], sizes = [2, 32], strides = [1, 1]} : vector<2x128xf32> to vector<2x32xf32>
    %274 = vector.extract_strided_slice %271 {offsets = [0, 64], sizes = [2, 32], strides = [1, 1]} : vector<2x128xf32> to vector<2x32xf32>
    %275 = vector.extract_strided_slice %270 {offsets = [0, 96], sizes = [2, 32], strides = [1, 1]} : vector<2x128xf32> to vector<2x32xf32>
    %276 = arith.mulf %273, %261 : vector<2x32xf32>
    %277 = arith.mulf %272, %274 : vector<2x32xf32>
    %278 = arith.addf %276, %277 : vector<2x32xf32>
    %279 = math.tanh %278 : vector<2x32xf32>
    %280 = arith.mulf %275, %279 : vector<2x32xf32>
    %cst_67 = arith.constant dense<0.000000e+00> : vector<2x128xf32>
    %281 = tpu.matmul %280, %175, %cst_67 {dimension_numbers = #tpu.dot_dimension_numbers<[1], [0], [0], [1], [0, 0, 1, 1], [], []>} : vector<2x32xf32>, vector<32x128xf32>, vector<2x128xf32> -> vector<2x128xf32>
    %282 = arith.addf %194, %281 : vector<2x128xf32>
    %283 = arith.negf %282 : vector<2x128xf32>
    %284 = math.exp %283 : vector<2x128xf32>
    %cst_68 = arith.constant 1.000000e+00 : f32
    %285 = vector.broadcast %cst_68 : f32 to vector<2x128xf32>
    %286 = arith.addf %285, %284 : vector<2x128xf32>
    %287 = arith.divf %285, %286 : vector<2x128xf32>
    %288 = math.tanh %282 : vector<2x128xf32>
    %289 = vector.extract_strided_slice %287 {offsets = [0, 0], sizes = [2, 32], strides = [1, 1]} : vector<2x128xf32> to vector<2x32xf32>
    %290 = vector.extract_strided_slice %287 {offsets = [0, 32], sizes = [2, 32], strides = [1, 1]} : vector<2x128xf32> to vector<2x32xf32>
    %291 = vector.extract_strided_slice %288 {offsets = [0, 64], sizes = [2, 32], strides = [1, 1]} : vector<2x128xf32> to vector<2x32xf32>
    %292 = vector.extract_strided_slice %287 {offsets = [0, 96], sizes = [2, 32], strides = [1, 1]} : vector<2x128xf32> to vector<2x32xf32>
    %293 = arith.mulf %290, %278 : vector<2x32xf32>
    %294 = arith.mulf %289, %291 : vector<2x32xf32>
    %295 = arith.addf %293, %294 : vector<2x32xf32>
    %296 = math.tanh %295 : vector<2x32xf32>
    %297 = arith.mulf %292, %296 : vector<2x32xf32>
    %cst_69 = arith.constant dense<0.000000e+00> : vector<2x128xf32>
    %298 = tpu.matmul %297, %175, %cst_69 {dimension_numbers = #tpu.dot_dimension_numbers<[1], [0], [0], [1], [0, 0, 1, 1], [], []>} : vector<2x32xf32>, vector<32x128xf32>, vector<2x128xf32> -> vector<2x128xf32>
    %299 = arith.addf %197, %298 : vector<2x128xf32>
    %300 = arith.negf %299 : vector<2x128xf32>
    %301 = math.exp %300 : vector<2x128xf32>
    %cst_70 = arith.constant 1.000000e+00 : f32
    %302 = vector.broadcast %cst_70 : f32 to vector<2x128xf32>
    %303 = arith.addf %302, %301 : vector<2x128xf32>
    %304 = arith.divf %302, %303 : vector<2x128xf32>
    %305 = math.tanh %299 : vector<2x128xf32>
    %306 = vector.extract_strided_slice %304 {offsets = [0, 0], sizes = [2, 32], strides = [1, 1]} : vector<2x128xf32> to vector<2x32xf32>
    %307 = vector.extract_strided_slice %304 {offsets = [0, 32], sizes = [2, 32], strides = [1, 1]} : vector<2x128xf32> to vector<2x32xf32>
    %308 = vector.extract_strided_slice %305 {offsets = [0, 64], sizes = [2, 32], strides = [1, 1]} : vector<2x128xf32> to vector<2x32xf32>
    %309 = vector.extract_strided_slice %304 {offsets = [0, 96], sizes = [2, 32], strides = [1, 1]} : vector<2x128xf32> to vector<2x32xf32>
    %310 = arith.mulf %307, %295 : vector<2x32xf32>
    %311 = arith.mulf %306, %308 : vector<2x32xf32>
    %312 = arith.addf %310, %311 : vector<2x32xf32>
    %313 = math.tanh %312 : vector<2x32xf32>
    %314 = arith.mulf %309, %313 : vector<2x32xf32>
    %cst_71 = arith.constant dense<0.000000e+00> : vector<2x128xf32>
    %315 = tpu.matmul %314, %175, %cst_71 {dimension_numbers = #tpu.dot_dimension_numbers<[1], [0], [0], [1], [0, 0, 1, 1], [], []>} : vector<2x32xf32>, vector<32x128xf32>, vector<2x128xf32> -> vector<2x128xf32>
    %316 = arith.addf %200, %315 : vector<2x128xf32>
    %317 = arith.negf %316 : vector<2x128xf32>
    %318 = math.exp %317 : vector<2x128xf32>
    %cst_72 = arith.constant 1.000000e+00 : f32
    %319 = vector.broadcast %cst_72 : f32 to vector<2x128xf32>
    %320 = arith.addf %319, %318 : vector<2x128xf32>
    %321 = arith.divf %319, %320 : vector<2x128xf32>
    %322 = math.tanh %316 : vector<2x128xf32>
    %323 = vector.extract_strided_slice %321 {offsets = [0, 0], sizes = [2, 32], strides = [1, 1]} : vector<2x128xf32> to vector<2x32xf32>
    %324 = vector.extract_strided_slice %321 {offsets = [0, 32], sizes = [2, 32], strides = [1, 1]} : vector<2x128xf32> to vector<2x32xf32>
    %325 = vector.extract_strided_slice %322 {offsets = [0, 64], sizes = [2, 32], strides = [1, 1]} : vector<2x128xf32> to vector<2x32xf32>
    %326 = vector.extract_strided_slice %321 {offsets = [0, 96], sizes = [2, 32], strides = [1, 1]} : vector<2x128xf32> to vector<2x32xf32>
    %327 = arith.mulf %324, %312 : vector<2x32xf32>
    %328 = arith.mulf %323, %325 : vector<2x32xf32>
    %329 = arith.addf %327, %328 : vector<2x32xf32>
    %330 = math.tanh %329 : vector<2x32xf32>
    %331 = arith.mulf %326, %330 : vector<2x32xf32>
    %c0_73 = arith.constant 0 : index
    %c0_74 = arith.constant 0 : index
    %332 = vector.load %arg7[%c0_73, %c0_74] : memref<32x16xf32, #tpu.memory_space<vmem>>, vector<32x16xf32>
    %cst_75 = arith.constant dense<0.000000e+00> : vector<2x16xf32>
    %333 = tpu.matmul %331, %332, %cst_75 {dimension_numbers = #tpu.dot_dimension_numbers<[1], [0], [0], [1], [0, 0, 1, 1], [], []>} : vector<2x32xf32>, vector<32x16xf32>, vector<2x16xf32> -> vector<2x16xf32>
    %c0_76 = arith.constant 0 : index
    %c0_77 = arith.constant 0 : index
    %334 = vector.load %arg8[%c0_76, %c0_77] : memref<1x16xf32, #tpu.memory_space<vmem>>, vector<1x16xf32>
    %335 = vector.broadcast %334 : vector<1x16xf32> to vector<2x16xf32>
    %336 = arith.addf %333, %335 : vector<2x16xf32>
    %cst_78 = arith.constant 0.000000e+00 : f32
    %337 = vector.broadcast %cst_78 : f32 to vector<2x16xf32>
    %338 = arith.cmpf oge, %336, %337 : vector<2x16xf32>
    %cst_79 = arith.constant 0.00999999977 : f32
    %339 = vector.broadcast %cst_79 : f32 to vector<2x16xf32>
    %340 = arith.mulf %339, %336 : vector<2x16xf32>
    %341 = arith.select %338, %336, %340 : vector<2x16xi1>, vector<2x16xf32>
    %c0_80 = arith.constant 0 : index
    %c0_81 = arith.constant 0 : index
    %342 = vector.load %arg9[%c0_80, %c0_81] : memref<1x16xf32, #tpu.memory_space<vmem>>, vector<1x16xf32>
    %343 = vector.broadcast %342 : vector<1x16xf32> to vector<2x16xf32>
    %344 = arith.mulf %341, %343 : vector<2x16xf32>
    %cst_82 = arith.constant dense<0.000000e+00> : vector<2xf32>
    %345 = vector.multi_reduction <add>, %344, %cst_82 [1] : vector<2x16xf32> to vector<2xf32>
    %346 = vector.shape_cast %345 : vector<2xf32> to vector<2x1xf32>
    %c0_83 = arith.constant 0 : index
    %347 = memref.load %arg10[%c0_83] : memref<1xf32, #tpu.memory_space<smem>>
    %348 = vector.broadcast %347 : f32 to vector<2x1xf32>
    %349 = arith.addf %346, %348 : vector<2x1xf32>
    %c0_84 = arith.constant 0 : index
    %c0_85 = arith.constant 0 : index
    %350 = vector.load %arg11[%c0_84, %c0_85] : memref<2x1xf32, #tpu.memory_space<vmem>>, vector<2x1xf32>
    tpu.vector_store %arg11[%c0_84, %c0_85], %349 {strides = array<i32>} : memref<2x1xf32, #tpu.memory_space<vmem>>, vector<2x1xf32>,
    return
  }
}

</mosaic_0001>

<llo_original>
// kernel: sohlstm_forward.1
$region0: #{sohlstm_forward.1}
  #allocation0 [shape = 'u32[]', space=smem, size = 0x4, offset = 0x4, fixed_abs, tag = 'smem constant byte address 0x4 - core index']
  #allocation1 [shape = 'u32[144,128]{1,0:T(1,128)}', space=vmem, size = 0x12000, scoped, tag = 'internal scratch']
  #allocation2 [shape = 'f32[1]{0:T(128)S(6)}', space=smem, size = 0x200, scoped, tag = 'scoped memory for sohlstm_forward.1']
  %s0 = inlined_call_operand.vmem [shape: f32[8,2,4], index: 0, kind: input, shape index: {}]
  %s1 = inlined_call_operand.hbm [shape: f32[4,128], index: 1, kind: input, shape index: {}]
  %s2 = inlined_call_operand.vmem [shape: f32[32,128], index: 2, kind: input, shape index: {}]
  %s3 = inlined_call_operand.vmem [shape: f32[1,128], index: 3, kind: input, shape index: {}]
  %s4 = inlined_call_operand.vmem [shape: f32[32,128], index: 4, kind: input, shape index: {}]
  %s5 = inlined_call_operand.vmem [shape: f32[32,128], index: 5, kind: input, shape index: {}]
  %s6 = inlined_call_operand.vmem [shape: f32[1,128], index: 6, kind: input, shape index: {}]
  %s7 = inlined_call_operand.vmem [shape: f32[32,16], index: 7, kind: input, shape index: {}]
  %s8 = inlined_call_operand.hbm [shape: f32[1,16], index: 8, kind: input, shape index: {}]
  %s9 = inlined_call_operand.hbm [shape: f32[1,16], index: 9, kind: input, shape index: {}]
  %s10 = inlined_call_operand.<no memory space> [shape: f32[1], index: 10, kind: input, shape index: {}]
  %s11 = inlined_call_operand.vmem [shape: f32[2,1], index: 11, kind: output, shape index: {}]
  %s12 = sld [smem:[#allocation0]]
  $region66: #{sohlstm_forward.1} parent=0
    _
  %s14 = ssub.s32 1, %s12
  %s15 = scalar_select 0, %s14, %s12
  %16 = sst [smem:[#allocation2]] %s10
  $region1: #{sohlstm_forward.1} parent=0
    #allocation3 [shape = 'u8[2048]{0}', space=vmem, size = 0x800, scoped, tag = 'input window, operand 1, single buffered']
    #allocation4 [shape = 's32[1]{0}', space=sflag, size = 0x4, scoped, tag = 'scoped memory for sohlstm_forward.1']
    #allocation5 [shape = 'u8[512]{0}', space=vmem, size = 0x400, scoped, tag = 'input window, operand 8, single buffered']
    #allocation6 [shape = 's32[1]{0}', space=sflag, size = 0x4, scoped, tag = 'scoped memory for sohlstm_forward.1']
    #allocation7 [shape = 'u8[512]{0}', space=vmem, size = 0x400, scoped, tag = 'input window, operand 9, single buffered']
    %17 = vsyncpa [#allocation4], 0
    %18 = vsyncpa [#allocation6], 0
    // Predicated region
    $region2: #{sohlstm_forward.1} parent=1 // pred_check
      _
    $region3: #{sohlstm_forward.1} parent=1 // pred_check_branch
      %20 = sbr.rel (0) target = $region5
    $region4: #{sohlstm_forward.1} parent=1 // pred_region
      _
    $region5: #{sohlstm_forward.1} parent=1 // pred_fallthru
      _
    // Predicated region
    $region6: #{sohlstm_forward.1} parent=1 // pred_check
      _
    $region7: #{sohlstm_forward.1} parent=1 // pred_check_branch
      %22 = sbr.rel (0) target = $region9
    $region8: #{sohlstm_forward.1} parent=1 // pred_region
      %s24 = ssub.s32 64, 64
      %25 = vsyncadd [#allocation4], %s24
      %s27 = sshll.u32 [#allocation3], 4
      %s28 = int_to_ptr.vmem [resolvable:$true] %s27
      %30 = dma.hbm_to_vmem [thread:$0]  %s1, 64, %s28, [#allocation4]
    $region9: #{sohlstm_forward.1} parent=1 // pred_fallthru
      _
    // Predicated region
    $region10: #{sohlstm_forward.1} parent=1 // pred_check
      _
    $region11: #{sohlstm_forward.1} parent=1 // pred_check_branch
      %32 = sbr.rel (0) target = $region13
    $region12: #{sohlstm_forward.1} parent=1 // pred_region
      _
    $region13: #{sohlstm_forward.1} parent=1 // pred_fallthru
      _
    // Predicated region
    $region14: #{sohlstm_forward.1} parent=1 // pred_check
      _
    $region15: #{sohlstm_forward.1} parent=1 // pred_check_branch
      %34 = sbr.rel (0) target = $region17
    $region16: #{sohlstm_forward.1} parent=1 // pred_region
      _
    $region17: #{sohlstm_forward.1} parent=1 // pred_fallthru
      _
    // Predicated region
    $region18: #{sohlstm_forward.1} parent=1 // pred_check
      _
    $region19: #{sohlstm_forward.1} parent=1 // pred_check_branch
      %36 = sbr.rel (0) target = $region21
    $region20: #{sohlstm_forward.1} parent=1 // pred_region
      _
    $region21: #{sohlstm_forward.1} parent=1 // pred_fallthru
      _
    // Predicated region
    $region22: #{sohlstm_forward.1} parent=1 // pred_check
      _
    $region23: #{sohlstm_forward.1} parent=1 // pred_check_branch
      %38 = sbr.rel (0) target = $region25
    $region24: #{sohlstm_forward.1} parent=1 // pred_region
      _
    $region25: #{sohlstm_forward.1} parent=1 // pred_fallthru
      _
    // Predicated region
    $region26: #{sohlstm_forward.1} parent=1 // pred_check
      _
    $region27: #{sohlstm_forward.1} parent=1 // pred_check_branch
      %40 = sbr.rel (0) target = $region29
    $region28: #{sohlstm_forward.1} parent=1 // pred_region
      _
    $region29: #{sohlstm_forward.1} parent=1 // pred_fallthru
      _
    // Predicated region
    $region30: #{sohlstm_forward.1} parent=1 // pred_check
      _
    $region31: #{sohlstm_forward.1} parent=1 // pred_check_branch
      %42 = sbr.rel (0) target = $region33
    $region32: #{sohlstm_forward.1} parent=1 // pred_region
      _
    $region33: #{sohlstm_forward.1} parent=1 // pred_fallthru
      _
    // Predicated region
    $region34: #{sohlstm_forward.1} parent=1 // pred_check
      _
    $region35: #{sohlstm_forward.1} parent=1 // pred_check_branch
      %44 = sbr.rel (0) target = $region37
    $region36: #{sohlstm_forward.1} parent=1 // pred_region
      %s46 = ssub.s32 16, 16
      %47 = vsyncadd [#allocation6], %s46
      %s49 = sshll.u32 [#allocation5], 4
      %s50 = int_to_ptr.vmem [resolvable:$true] %s49
      %52 = dma.hbm_to_vmem [thread:$0]  %s8, 16, %s50, [#allocation6]
    $region37: #{sohlstm_forward.1} parent=1 // pred_fallthru
      _
    // Predicated region
    $region38: #{sohlstm_forward.1} parent=1 // pred_check
      _
    $region39: #{sohlstm_forward.1} parent=1 // pred_check_branch
      %54 = sbr.rel (0) target = $region41
    $region40: #{sohlstm_forward.1} parent=1 // pred_region
      %s56 = ssub.s32 16, 16
      %57 = vsyncadd [#allocation6], %s56
      %s59 = sshll.u32 [#allocation7], 4
      %s60 = int_to_ptr.vmem [resolvable:$true] %s59
      %62 = dma.hbm_to_vmem [thread:$0]  %s9, 16, %s60, [#allocation6]
    $region41: #{sohlstm_forward.1} parent=1 // pred_fallthru
      _
    // Predicated region
    $region42: #{sohlstm_forward.1} parent=1 // pred_check
      _
    $region43: #{sohlstm_forward.1} parent=1 // pred_check_branch
      %64 = sbr.rel (0) target = $region45
    $region44: #{sohlstm_forward.1} parent=1 // pred_region
      _
    $region45: #{sohlstm_forward.1} parent=1 // pred_fallthru
      _
    // Predicated region
    $region46: #{sohlstm_forward.1} parent=1 // pred_check
      _
    $region47: #{sohlstm_forward.1} parent=1 // pred_check_branch
      %66 = sbr.rel (0) target = $region49
    $region48: #{sohlstm_forward.1} parent=1 // pred_region
      %67 = dma.done [#allocation4], 64
    $region49: #{sohlstm_forward.1} parent=1 // pred_fallthru
      _
    // Predicated region
    $region50: #{sohlstm_forward.1} parent=1 // pred_check
      _
    $region51: #{sohlstm_forward.1} parent=1 // pred_check_branch
      %69 = sbr.rel (0) target = $region53
    $region52: #{sohlstm_forward.1} parent=1 // pred_region
      %70 = dma.done [#allocation6], 16
    $region53: #{sohlstm_forward.1} parent=1 // pred_fallthru
      _
    // Predicated region
    $region54: #{sohlstm_forward.1} parent=1 // pred_check
      _
    $region55: #{sohlstm_forward.1} parent=1 // pred_check_branch
      %72 = sbr.rel (0) target = $region57
    $region56: #{sohlstm_forward.1} parent=1 // pred_region
      %73 = dma.done [#allocation6], 16
    $region57: #{sohlstm_forward.1} parent=1 // pred_fallthru
      _
    %v74 = vld [vmem:[%s0] sm:$0x3]
    %s75 = scalar_lea.vmem %s0, 2
    %v76 = vld [vmem:[%s75] sm:$0x3]
    %s77 = scalar_lea.vmem %s0, 4
    %v78 = vld [vmem:[%s77] sm:$0x3]
    %s79 = scalar_lea.vmem %s0, 6
    %v80 = vld [vmem:[%s79] sm:$0x3]
    %s81 = scalar_lea.vmem %s0, 8
    %v82 = vld [vmem:[%s81] sm:$0x3]
    %s83 = scalar_lea.vmem %s0, 10
    %v84 = vld [vmem:[%s83] sm:$0x3]
    %s85 = scalar_lea.vmem %s0, 12
    %v86 = vld [vmem:[%s85] sm:$0x3]
    %s87 = scalar_lea.vmem %s0, 14
    %v88 = vld [vmem:[%s87] sm:$0x3]
    %v89 = vld [vmem:[#allocation3] sm:$0xf]
    %v90 = vld [vmem:[%s2] sm:$0xff]
    %v91 = vld [vmem:[%s2 + $0x8] sm:$0xff]
    %v92 = vld [vmem:[%s2 + $0x10] sm:$0xff]
    %v93 = vld [vmem:[%s2 + $0x18] sm:$0xff]
    %v94 = vld [vmem:[%s3] sm:$0x1]
    %v96 = vlaneseq
    %v97 = vshrl.u32 %v96, 7
    %v98 = vsub.s32 0, %v97
    %v99 = vrot.slane %v94, %v98
    %vm101 = vcmask 31744
    %v103 = vsel %vm101, %v74, 0
    %vm105 = vcmask 1043456
    %v107 = vsel %vm105, %v89, 0
    %109 = vmatprep.subr.mxu0 0.0
    %110 = vmatpush1.msra.mxu0 %v107
    %111 = vmatprep.subr.mxu0 0.0
    %112 = vmatpush1.msra.mxu0 0.0
    %113 = vmatprep.subr.mxu0 0.0
    %114 = vmatpush1.msra.mxu0 0.0
    %115 = vmatprep.subr.mxu0 0.0
    %116 = vmatpush1.msra.mxu0 0.0
    %117 = vmatprep.subr.mxu0 0.0
    %118 = vmatpush1.msra.mxu0 0.0
    %119 = vmatprep.subr.mxu0 0.0
    %120 = vmatpush1.msra.mxu0 0.0
    %121 = vmatprep.subr.mxu0 0.0
    %122 = vmatpush1.msra.mxu0 0.0
    %123 = vmatprep.subr.mxu0 0.0
    %124 = vmatpush1.msra.mxu0 0.0
    %125 = vmatprep.subr.mxu0 0.0
    %126 = vmatpush1.msra.mxu0 0.0
    %127 = vmatprep.subr.mxu0 0.0
    %128 = vmatpush1.msra.mxu0 0.0
    %129 = vmatprep.subr.mxu0 0.0
    %130 = vmatpush1.msra.mxu0 0.0
    %131 = vmatprep.subr.mxu0 0.0
    %132 = vmatpush1.msra.mxu0 0.0
    %133 = vmatprep.subr.mxu0 0.0
    %134 = vmatpush1.msra.mxu0 0.0
    %135 = vmatprep.subr.mxu0 0.0
    %136 = vmatpush1.msra.mxu0 0.0
    %137 = vmatprep.subr.mxu0 0.0
    %138 = vmatpush1.msra.mxu0 0.0
    %139 = vmatprep.subr.mxu0 0.0
    %140 = vmatpush1.msra.mxu0 0.0
    %141 = vmatprep.subr.mxu0 0.0
    %142 = vmatpush1.msra.mxu0 0.0
    %143 = vmatprep.subr.mxu0 0.0
    %144 = vmatpush1.msra.mxu0 0.0
    %145 = vmatprep.subr.mxu0 0.0
    %146 = vmatpush1.msra.mxu0 0.0
    %147 = vmatprep.subr.mxu0 0.0
    %148 = vmatpush1.msra.mxu0 0.0
    %149 = vmatprep.subr.mxu0 0.0
    %150 = vmatpush1.msra.mxu0 0.0
    %151 = vmatprep.subr.mxu0 0.0
    %152 = vmatpush1.msra.mxu0 0.0
    %153 = vmatprep.subr.mxu0 0.0
    %154 = vmatpush1.msra.mxu0 0.0
    %155 = vmatprep.subr.mxu0 0.0
    %156 = vmatpush1.msra.mxu0 0.0
    %157 = vmatprep.subr.mxu0 0.0
    %158 = vmatpush1.msra.mxu0 0.0
    %159 = vmatprep.subr.mxu0 0.0
    %160 = vmatpush1.msra.mxu0 0.0
    %161 = vmatprep.subr.mxu0 0.0
    %162 = vmatpush1.msra.mxu0 0.0
    %163 = vmatprep.subr.mxu0 0.0
    %164 = vmatpush1.msra.mxu0 0.0
    %165 = vmatprep.subr.mxu0 0.0
    %166 = vmatpush1.msra.mxu0 0.0
    %167 = vmatprep.subr.mxu0 0.0
    %168 = vmatpush1.msra.mxu0 0.0
    %169 = vmatprep.subr.mxu0 0.0
    %170 = vmatpush1.msra.mxu0 0.0
    %171 = vmatprep.subr.mxu0 0.0
    %172 = vmatpush1.msra.mxu0 0.0
    %173 = vmatprep.mubr.f32.mxu0 0.0
    %174 = vmatmul.mubr.f32.gmra.mrb[0].mxu0 %v103
    %v175 = vpop.f32.mrb[0].mxu0
    %v176 = vadd.f32 %v99, %v175
    %v177 = vpop.f32.mrb[0].mxu0
    %178 = vdwg.mxu0
    %v180 = vsel %vm101, %v76, 0
    %182 = vmatprep.subr.mxu0 0.0
    %183 = vmatpush1.msra.mxu0 %v107
    %184 = vmatprep.subr.mxu0 0.0
    %185 = vmatpush1.msra.mxu0 0.0
    %186 = vmatprep.subr.mxu0 0.0
    %187 = vmatpush1.msra.mxu0 0.0
    %188 = vmatprep.subr.mxu0 0.0
    %189 = vmatpush1.msra.mxu0 0.0
    %190 = vmatprep.subr.mxu0 0.0
    %191 = vmatpush1.msra.mxu0 0.0
    %192 = vmatprep.subr.mxu0 0.0
    %193 = vmatpush1.msra.mxu0 0.0
    %194 = vmatprep.subr.mxu0 0.0
    %195 = vmatpush1.msra.mxu0 0.0
    %196 = vmatprep.subr.mxu0 0.0
    %197 = vmatpush1.msra.mxu0 0.0
    %198 = vmatprep.subr.mxu0 0.0
    %199 = vmatpush1.msra.mxu0 0.0
    %200 = vmatprep.subr.mxu0 0.0
    %201 = vmatpush1.msra.mxu0 0.0
    %202 = vmatprep.subr.mxu0 0.0
    %203 = vmatpush1.msra.mxu0 0.0
    %204 = vmatprep.subr.mxu0 0.0
    %205 = vmatpush1.msra.mxu0 0.0
    %206 = vmatprep.subr.mxu0 0.0
    %207 = vmatpush1.msra.mxu0 0.0
    %208 = vmatprep.subr.mxu0 0.0
    %209 = vmatpush1.msra.mxu0 0.0
    %210 = vmatprep.subr.mxu0 0.0
    %211 = vmatpush1.msra.mxu0 0.0
    %212 = vmatprep.subr.mxu0 0.0
    %213 = vmatpush1.msra.mxu0 0.0
    %214 = vmatprep.subr.mxu0 0.0
    %215 = vmatpush1.msra.mxu0 0.0
    %216 = vmatprep.subr.mxu0 0.0
    %217 = vmatpush1.msra.mxu0 0.0
    %218 = vmatprep.subr.mxu0 0.0
    %219 = vmatpush1.msra.mxu0 0.0
    %220 = vmatprep.subr.mxu0 0.0
    %221 = vmatpush1.msra.mxu0 0.0
    %222 = vmatprep.subr.mxu0 0.0
    %223 = vmatpush1.msra.mxu0 0.0
    %224 = vmatprep.subr.mxu0 0.0
    %225 = vmatpush1.msra.mxu0 0.0
    %226 = vmatprep.subr.mxu0 0.0
    %227 = vmatpush1.msra.mxu0 0.0
    %228 = vmatprep.subr.mxu0 0.0
    %229 = vmatpush1.msra.mxu0 0.0
    %230 = vmatprep.subr.mxu0 0.0
    %231 = vmatpush1.msra.mxu0 0.0
    %232 = vmatprep.subr.mxu0 0.0
    %233 = vmatpush1.msra.mxu0 0.0
    %234 = vmatprep.subr.mxu0 0.0
    %235 = vmatpush1.msra.mxu0 0.0
    %236 = vmatprep.subr.mxu0 0.0
    %237 = vmatpush1.msra.mxu0 0.0
    %238 = vmatprep.subr.mxu0 0.0
    %239 = vmatpush1.msra.mxu0 0.0
    %240 = vmatprep.subr.mxu0 0.0
    %241 = vmatpush1.msra.mxu0 0.0
    %242 = vmatprep.subr.mxu0 0.0
    %243 = vmatpush1.msra.mxu0 0.0
    %244 = vmatprep.subr.mxu0 0.0
    %245 = vmatpush1.msra.mxu0 0.0
    %246 = vmatprep.mubr.f32.mxu0 0.0
    %247 = vmatmul.mubr.f32.gmra.mrb[0].mxu0 %v180
    %v248 = vpop.f32.mrb[0].mxu0
    %v249 = vadd.f32 %v99, %v248
    %v250 = vpop.f32.mrb[0].mxu0
    %251 = vdwg.mxu0
    %v253 = vsel %vm101, %v78, 0
    %255 = vmatprep.subr.mxu0 0.0
    %256 = vmatpush1.msra.mxu0 %v107
    %257 = vmatprep.subr.mxu0 0.0
    %258 = vmatpush1.msra.mxu0 0.0
    %259 = vmatprep.subr.mxu0 0.0
    %260 = vmatpush1.msra.mxu0 0.0
    %261 = vmatprep.subr.mxu0 0.0
    %262 = vmatpush1.msra.mxu0 0.0
    %263 = vmatprep.subr.mxu0 0.0
    %264 = vmatpush1.msra.mxu0 0.0
    %265 = vmatprep.subr.mxu0 0.0
    %266 = vmatpush1.msra.mxu0 0.0
    %267 = vmatprep.subr.mxu0 0.0
    %268 = vmatpush1.msra.mxu0 0.0
    %269 = vmatprep.subr.mxu0 0.0
    %270 = vmatpush1.msra.mxu0 0.0
    %271 = vmatprep.subr.mxu0 0.0
    %272 = vmatpush1.msra.mxu0 0.0
    %273 = vmatprep.subr.mxu0 0.0
    %274 = vmatpush1.msra.mxu0 0.0
    %275 = vmatprep.subr.mxu0 0.0
    %276 = vmatpush1.msra.mxu0 0.0
    %277 = vmatprep.subr.mxu0 0.0
    %278 = vmatpush1.msra.mxu0 0.0
    %279 = vmatprep.subr.mxu0 0.0
    %280 = vmatpush1.msra.mxu0 0.0
    %281 = vmatprep.subr.mxu0 0.0
    %282 = vmatpush1.msra.mxu0 0.0
    %283 = vmatprep.subr.mxu0 0.0
    %284 = vmatpush1.msra.mxu0 0.0
    %285 = vmatprep.subr.mxu0 0.0
    %286 = vmatpush1.msra.mxu0 0.0
    %287 = vmatprep.subr.mxu0 0.0
    %288 = vmatpush1.msra.mxu0 0.0
    %289 = vmatprep.subr.mxu0 0.0
    %290 = vmatpush1.msra.mxu0 0.0
    %291 = vmatprep.subr.mxu0 0.0
    %292 = vmatpush1.msra.mxu0 0.0
    %293 = vmatprep.subr.mxu0 0.0
    %294 = vmatpush1.msra.mxu0 0.0
    %295 = vmatprep.subr.mxu0 0.0
    %296 = vmatpush1.msra.mxu0 0.0
    %297 = vmatprep.subr.mxu0 0.0
    %298 = vmatpush1.msra.mxu0 0.0
    %299 = vmatprep.subr.mxu0 0.0
    %300 = vmatpush1.msra.mxu0 0.0
    %301 = vmatprep.subr.mxu0 0.0
    %302 = vmatpush1.msra.mxu0 0.0
    %303 = vmatprep.subr.mxu0 0.0
    %304 = vmatpush1.msra.mxu0 0.0
    %305 = vmatprep.subr.mxu0 0.0
    %306 = vmatpush1.msra.mxu0 0.0
    %307 = vmatprep.subr.mxu0 0.0
    %308 = vmatpush1.msra.mxu0 0.0
    %309 = vmatprep.subr.mxu0 0.0
    %310 = vmatpush1.msra.mxu0 0.0
    %311 = vmatprep.subr.mxu0 0.0
    %312 = vmatpush1.msra.mxu0 0.0
    %313 = vmatprep.subr.mxu0 0.0
    %314 = vmatpush1.msra.mxu0 0.0
    %315 = vmatprep.subr.mxu0 0.0
    %316 = vmatpush1.msra.mxu0 0.0
    %317 = vmatprep.subr.mxu0 0.0
    %318 = vmatpush1.msra.mxu0 0.0
    %319 = vmatprep.mubr.f32.mxu0 0.0
    %320 = vmatmul.mubr.f32.gmra.mrb[0].mxu0 %v253
    %v321 = vpop.f32.mrb[0].mxu0
    %v322 = vadd.f32 %v99, %v321
    %v323 = vpop.f32.mrb[0].mxu0
    %324 = vdwg.mxu0
    %v326 = vsel %vm101, %v80, 0
    %328 = vmatprep.subr.mxu0 0.0
    %329 = vmatpush1.msra.mxu0 %v107
    %330 = vmatprep.subr.mxu0 0.0
    %331 = vmatpush1.msra.mxu0 0.0
    %332 = vmatprep.subr.mxu0 0.0
    %333 = vmatpush1.msra.mxu0 0.0
    %334 = vmatprep.subr.mxu0 0.0
    %335 = vmatpush1.msra.mxu0 0.0
    %336 = vmatprep.subr.mxu0 0.0
    %337 = vmatpush1.msra.mxu0 0.0
    %338 = vmatprep.subr.mxu0 0.0
    %339 = vmatpush1.msra.mxu0 0.0
    %340 = vmatprep.subr.mxu0 0.0
    %341 = vmatpush1.msra.mxu0 0.0
    %342 = vmatprep.subr.mxu0 0.0
    %343 = vmatpush1.msra.mxu0 0.0
    %344 = vmatprep.subr.mxu0 0.0
    %345 = vmatpush1.msra.mxu0 0.0
    %346 = vmatprep.subr.mxu0 0.0
    %347 = vmatpush1.msra.mxu0 0.0
    %348 = vmatprep.subr.mxu0 0.0
    %349 = vmatpush1.msra.mxu0 0.0
    %350 = vmatprep.subr.mxu0 0.0
    %351 = vmatpush1.msra.mxu0 0.0
    %352 = vmatprep.subr.mxu0 0.0
    %353 = vmatpush1.msra.mxu0 0.0
    %354 = vmatprep.subr.mxu0 0.0
    %355 = vmatpush1.msra.mxu0 0.0
    %356 = vmatprep.subr.mxu0 0.0
    %357 = vmatpush1.msra.mxu0 0.0
    %358 = vmatprep.subr.mxu0 0.0
    %359 = vmatpush1.msra.mxu0 0.0
    %360 = vmatprep.subr.mxu0 0.0
    %361 = vmatpush1.msra.mxu0 0.0
    %362 = vmatprep.subr.mxu0 0.0
    %363 = vmatpush1.msra.mxu0 0.0
    %364 = vmatprep.subr.mxu0 0.0
    %365 = vmatpush1.msra.mxu0 0.0
    %366 = vmatprep.subr.mxu0 0.0
    %367 = vmatpush1.msra.mxu0 0.0
    %368 = vmatprep.subr.mxu0 0.0
    %369 = vmatpush1.msra.mxu0 0.0
    %370 = vmatprep.subr.mxu0 0.0
    %371 = vmatpush1.msra.mxu0 0.0
    %372 = vmatprep.subr.mxu0 0.0
    %373 = vmatpush1.msra.mxu0 0.0
    %374 = vmatprep.subr.mxu0 0.0
    %375 = vmatpush1.msra.mxu0 0.0
    %376 = vmatprep.subr.mxu0 0.0
    %377 = vmatpush1.msra.mxu0 0.0
    %378 = vmatprep.subr.mxu0 0.0
    %379 = vmatpush1.msra.mxu0 0.0
    %380 = vmatprep.subr.mxu0 0.0
    %381 = vmatpush1.msra.mxu0 0.0
    %382 = vmatprep.subr.mxu0 0.0
    %383 = vmatpush1.msra.mxu0 0.0
    %384 = vmatprep.subr.mxu0 0.0
    %385 = vmatpush1.msra.mxu0 0.0
    %386 = vmatprep.subr.mxu0 0.0
    %387 = vmatpush1.msra.mxu0 0.0
    %388 = vmatprep.subr.mxu0 0.0
    %389 = vmatpush1.msra.mxu0 0.0
    %390 = vmatprep.subr.mxu0 0.0
    %391 = vmatpush1.msra.mxu0 0.0
    %392 = vmatprep.mubr.f32.mxu0 0.0
    %393 = vmatmul.mubr.f32.gmra.mrb[0].mxu0 %v326
    %v394 = vpop.f32.mrb[0].mxu0
    %v395 = vadd.f32 %v99, %v394
    %v396 = vpop.f32.mrb[0].mxu0
    %397 = vdwg.mxu0
    %v399 = vsel %vm101, %v82, 0
    %401 = vmatprep.subr.mxu0 0.0
    %402 = vmatpush1.msra.mxu0 %v107
    %403 = vmatprep.subr.mxu0 0.0
    %404 = vmatpush1.msra.mxu0 0.0
    %405 = vmatprep.subr.mxu0 0.0
    %406 = vmatpush1.msra.mxu0 0.0
    %407 = vmatprep.subr.mxu0 0.0
    %408 = vmatpush1.msra.mxu0 0.0
    %409 = vmatprep.subr.mxu0 0.0
    %410 = vmatpush1.msra.mxu0 0.0
    %411 = vmatprep.subr.mxu0 0.0
    %412 = vmatpush1.msra.mxu0 0.0
    %413 = vmatprep.subr.mxu0 0.0
    %414 = vmatpush1.msra.mxu0 0.0
    %415 = vmatprep.subr.mxu0 0.0
    %416 = vmatpush1.msra.mxu0 0.0
    %417 = vmatprep.subr.mxu0 0.0
    %418 = vmatpush1.msra.mxu0 0.0
    %419 = vmatprep.subr.mxu0 0.0
    %420 = vmatpush1.msra.mxu0 0.0
    %421 = vmatprep.subr.mxu0 0.0
    %422 = vmatpush1.msra.mxu0 0.0
    %423 = vmatprep.subr.mxu0 0.0
    %424 = vmatpush1.msra.mxu0 0.0
    %425 = vmatprep.subr.mxu0 0.0
    %426 = vmatpush1.msra.mxu0 0.0
    %427 = vmatprep.subr.mxu0 0.0
    %428 = vmatpush1.msra.mxu0 0.0
    %429 = vmatprep.subr.mxu0 0.0
    %430 = vmatpush1.msra.mxu0 0.0
    %431 = vmatprep.subr.mxu0 0.0
    %432 = vmatpush1.msra.mxu0 0.0
    %433 = vmatprep.subr.mxu0 0.0
    %434 = vmatpush1.msra.mxu0 0.0
    %435 = vmatprep.subr.mxu0 0.0
    %436 = vmatpush1.msra.mxu0 0.0
    %437 = vmatprep.subr.mxu0 0.0
    %438 = vmatpush1.msra.mxu0 0.0
    %439 = vmatprep.subr.mxu0 0.0
    %440 = vmatpush1.msra.mxu0 0.0
    %441 = vmatprep.subr.mxu0 0.0
    %442 = vmatpush1.msra.mxu0 0.0
    %443 = vmatprep.subr.mxu0 0.0
    %444 = vmatpush1.msra.mxu0 0.0
    %445 = vmatprep.subr.mxu0 0.0
    %446 = vmatpush1.msra.mxu0 0.0
    %447 = vmatprep.subr.mxu0 0.0
    %448 = vmatpush1.msra.mxu0 0.0
    %449 = vmatprep.subr.mxu0 0.0
    %450 = vmatpush1.msra.mxu0 0.0
    %451 = vmatprep.subr.mxu0 0.0
    %452 = vmatpush1.msra.mxu0 0.0
    %453 = vmatprep.subr.mxu0 0.0
    %454 = vmatpush1.msra.mxu0 0.0
    %455 = vmatprep.subr.mxu0 0.0
    %456 = vmatpush1.msra.mxu0 0.0
    %457 = vmatprep.subr.mxu0 0.0
    %458 = vmatpush1.msra.mxu0 0.0
    %459 = vmatprep.subr.mxu0 0.0
    %460 = vmatpush1.msra.mxu0 0.0
    %461 = vmatprep.subr.mxu0 0.0
    %462 = vmatpush1.msra.mxu0 0.0
    %463 = vmatprep.subr.mxu0 0.0
    %464 = vmatpush1.msra.mxu0 0.0
    %465 = vmatprep.mubr.f32.mxu0 0.0
    %466 = vmatmul.mubr.f32.gmra.mrb[0].mxu0 %v399
    %v467 = vpop.f32.mrb[0].mxu0
    %v468 = vadd.f32 %v99, %v467
    %v469 = vpop.f32.mrb[0].mxu0
    %470 = vdwg.mxu0
    %v472 = vsel %vm101, %v84, 0
    %474 = vmatprep.subr.mxu0 0.0
    %475 = vmatpush1.msra.mxu0 %v107
    %476 = vmatprep.subr.mxu0 0.0
    %477 = vmatpush1.msra.mxu0 0.0
    %478 = vmatprep.subr.mxu0 0.0
    %479 = vmatpush1.msra.mxu0 0.0
    %480 = vmatprep.subr.mxu0 0.0
    %481 = vmatpush1.msra.mxu0 0.0
    %482 = vmatprep.subr.mxu0 0.0
    %483 = vmatpush1.msra.mxu0 0.0
    %484 = vmatprep.subr.mxu0 0.0
    %485 = vmatpush1.msra.mxu0 0.0
    %486 = vmatprep.subr.mxu0 0.0
    %487 = vmatpush1.msra.mxu0 0.0
    %488 = vmatprep.subr.mxu0 0.0
    %489 = vmatpush1.msra.mxu0 0.0
    %490 = vmatprep.subr.mxu0 0.0
    %491 = vmatpush1.msra.mxu0 0.0
    %492 = vmatprep.subr.mxu0 0.0
    %493 = vmatpush1.msra.mxu0 0.0
    %494 = vmatprep.subr.mxu0 0.0
    %495 = vmatpush1.msra.mxu0 0.0
    %496 = vmatprep.subr.mxu0 0.0
    %497 = vmatpush1.msra.mxu0 0.0
    %498 = vmatprep.subr.mxu0 0.0
    %499 = vmatpush1.msra.mxu0 0.0
    %500 = vmatprep.subr.mxu0 0.0
    %501 = vmatpush1.msra.mxu0 0.0
    %502 = vmatprep.subr.mxu0 0.0
    %503 = vmatpush1.msra.mxu0 0.0
    %504 = vmatprep.subr.mxu0 0.0
    %505 = vmatpush1.msra.mxu0 0.0
    %506 = vmatprep.subr.mxu0 0.0
    %507 = vmatpush1.msra.mxu0 0.0
    %508 = vmatprep.subr.mxu0 0.0
    %509 = vmatpush1.msra.mxu0 0.0
    %510 = vmatprep.subr.mxu0 0.0
    %511 = vmatpush1.msra.mxu0 0.0
    %512 = vmatprep.subr.mxu0 0.0
    %513 = vmatpush1.msra.mxu0 0.0
    %514 = vmatprep.subr.mxu0 0.0
    %515 = vmatpush1.msra.mxu0 0.0
    %516 = vmatprep.subr.mxu0 0.0
    %517 = vmatpush1.msra.mxu0 0.0
    %518 = vmatprep.subr.mxu0 0.0
    %519 = vmatpush1.msra.mxu0 0.0
    %520 = vmatprep.subr.mxu0 0.0
    %521 = vmatpush1.msra.mxu0 0.0
    %522 = vmatprep.subr.mxu0 0.0
    %523 = vmatpush1.msra.mxu0 0.0
    %524 = vmatprep.subr.mxu0 0.0
    %525 = vmatpush1.msra.mxu0 0.0
    %526 = vmatprep.subr.mxu0 0.0
    %527 = vmatpush1.msra.mxu0 0.0
    %528 = vmatprep.subr.mxu0 0.0
    %529 = vmatpush1.msra.mxu0 0.0
    %530 = vmatprep.subr.mxu0 0.0
    %531 = vmatpush1.msra.mxu0 0.0
    %532 = vmatprep.subr.mxu0 0.0
    %533 = vmatpush1.msra.mxu0 0.0
    %534 = vmatprep.subr.mxu0 0.0
    %535 = vmatpush1.msra.mxu0 0.0
    %536 = vmatprep.subr.mxu0 0.0
    %537 = vmatpush1.msra.mxu0 0.0
    %538 = vmatprep.mubr.f32.mxu0 0.0
    %539 = vmatmul.mubr.f32.gmra.mrb[0].mxu0 %v472
    %v540 = vpop.f32.mrb[0].mxu0
    %v541 = vadd.f32 %v99, %v540
    %v542 = vpop.f32.mrb[0].mxu0
    %543 = vdwg.mxu0
    %v545 = vsel %vm101, %v86, 0
    %547 = vmatprep.subr.mxu0 0.0
    %548 = vmatpush1.msra.mxu0 %v107
    %549 = vmatprep.subr.mxu0 0.0
    %550 = vmatpush1.msra.mxu0 0.0
    %551 = vmatprep.subr.mxu0 0.0
    %552 = vmatpush1.msra.mxu0 0.0
    %553 = vmatprep.subr.mxu0 0.0
    %554 = vmatpush1.msra.mxu0 0.0
    %555 = vmatprep.subr.mxu0 0.0
    %556 = vmatpush1.msra.mxu0 0.0
    %557 = vmatprep.subr.mxu0 0.0
    %558 = vmatpush1.msra.mxu0 0.0
    %559 = vmatprep.subr.mxu0 0.0
    %560 = vmatpush1.msra.mxu0 0.0
    %561 = vmatprep.subr.mxu0 0.0
    %562 = vmatpush1.msra.mxu0 0.0
    %563 = vmatprep.subr.mxu0 0.0
    %564 = vmatpush1.msra.mxu0 0.0
    %565 = vmatprep.subr.mxu0 0.0
    %566 = vmatpush1.msra.mxu0 0.0
    %567 = vmatprep.subr.mxu0 0.0
    %568 = vmatpush1.msra.mxu0 0.0
    %569 = vmatprep.subr.mxu0 0.0
    %570 = vmatpush1.msra.mxu0 0.0
    %571 = vmatprep.subr.mxu0 0.0
    %572 = vmatpush1.msra.mxu0 0.0
    %573 = vmatprep.subr.mxu0 0.0
    %574 = vmatpush1.msra.mxu0 0.0
    %575 = vmatprep.subr.mxu0 0.0
    %576 = vmatpush1.msra.mxu0 0.0
    %577 = vmatprep.subr.mxu0 0.0
    %578 = vmatpush1.msra.mxu0 0.0
    %579 = vmatprep.subr.mxu0 0.0
    %580 = vmatpush1.msra.mxu0 0.0
    %581 = vmatprep.subr.mxu0 0.0
    %582 = vmatpush1.msra.mxu0 0.0
    %583 = vmatprep.subr.mxu0 0.0
    %584 = vmatpush1.msra.mxu0 0.0
    %585 = vmatprep.subr.mxu0 0.0
    %586 = vmatpush1.msra.mxu0 0.0
    %587 = vmatprep.subr.mxu0 0.0
    %588 = vmatpush1.msra.mxu0 0.0
    %589 = vmatprep.subr.mxu0 0.0
    %590 = vmatpush1.msra.mxu0 0.0
    %591 = vmatprep.subr.mxu0 0.0
    %592 = vmatpush1.msra.mxu0 0.0
    %593 = vmatprep.subr.mxu0 0.0
    %594 = vmatpush1.msra.mxu0 0.0
    %595 = vmatprep.subr.mxu0 0.0
    %596 = vmatpush1.msra.mxu0 0.0
    %597 = vmatprep.subr.mxu0 0.0
    %598 = vmatpush1.msra.mxu0 0.0
    %599 = vmatprep.subr.mxu0 0.0
    %600 = vmatpush1.msra.mxu0 0.0
    %601 = vmatprep.subr.mxu0 0.0
    %602 = vmatpush1.msra.mxu0 0.0
    %603 = vmatprep.subr.mxu0 0.0
    %604 = vmatpush1.msra.mxu0 0.0
    %605 = vmatprep.subr.mxu0 0.0
    %606 = vmatpush1.msra.mxu0 0.0
    %607 = vmatprep.subr.mxu0 0.0
    %608 = vmatpush1.msra.mxu0 0.0
    %609 = vmatprep.subr.mxu0 0.0
    %610 = vmatpush1.msra.mxu0 0.0
    %611 = vmatprep.mubr.f32.mxu0 0.0
    %612 = vmatmul.mubr.f32.gmra.mrb[0].mxu0 %v545
    %v613 = vpop.f32.mrb[0].mxu0
    %v614 = vadd.f32 %v99, %v613
    %v615 = vpop.f32.mrb[0].mxu0
    %616 = vdwg.mxu0
    %v618 = vsel %vm101, %v88, 0
    %620 = vmatprep.subr.mxu0 0.0
    %621 = vmatpush1.msra.mxu0 %v107
    %622 = vmatprep.subr.mxu0 0.0
    %623 = vmatpush1.msra.mxu0 0.0
    %624 = vmatprep.subr.mxu0 0.0
    %625 = vmatpush1.msra.mxu0 0.0
    %626 = vmatprep.subr.mxu0 0.0
    %627 = vmatpush1.msra.mxu0 0.0
    %628 = vmatprep.subr.mxu0 0.0
    %629 = vmatpush1.msra.mxu0 0.0
    %630 = vmatprep.subr.mxu0 0.0
    %631 = vmatpush1.msra.mxu0 0.0
    %632 = vmatprep.subr.mxu0 0.0
    %633 = vmatpush1.msra.mxu0 0.0
    %634 = vmatprep.subr.mxu0 0.0
    %635 = vmatpush1.msra.mxu0 0.0
    %636 = vmatprep.subr.mxu0 0.0
    %637 = vmatpush1.msra.mxu0 0.0
    %638 = vmatprep.subr.mxu0 0.0
    %639 = vmatpush1.msra.mxu0 0.0
    %640 = vmatprep.subr.mxu0 0.0
    %641 = vmatpush1.msra.mxu0 0.0
    %642 = vmatprep.subr.mxu0 0.0
    %643 = vmatpush1.msra.mxu0 0.0
    %644 = vmatprep.subr.mxu0 0.0
    %645 = vmatpush1.msra.mxu0 0.0
    %646 = vmatprep.subr.mxu0 0.0
    %647 = vmatpush1.msra.mxu0 0.0
    %648 = vmatprep.subr.mxu0 0.0
    %649 = vmatpush1.msra.mxu0 0.0
    %650 = vmatprep.subr.mxu0 0.0
    %651 = vmatpush1.msra.mxu0 0.0
    %652 = vmatprep.subr.mxu0 0.0
    %653 = vmatpush1.msra.mxu0 0.0
    %654 = vmatprep.subr.mxu0 0.0
    %655 = vmatpush1.msra.mxu0 0.0
    %656 = vmatprep.subr.mxu0 0.0
    %657 = vmatpush1.msra.mxu0 0.0
    %658 = vmatprep.subr.mxu0 0.0
    %659 = vmatpush1.msra.mxu0 0.0
    %660 = vmatprep.subr.mxu0 0.0
    %661 = vmatpush1.msra.mxu0 0.0
    %662 = vmatprep.subr.mxu0 0.0
    %663 = vmatpush1.msra.mxu0 0.0
    %664 = vmatprep.subr.mxu0 0.0
    %665 = vmatpush1.msra.mxu0 0.0
    %666 = vmatprep.subr.mxu0 0.0
    %667 = vmatpush1.msra.mxu0 0.0
    %668 = vmatprep.subr.mxu0 0.0
    %669 = vmatpush1.msra.mxu0 0.0
    %670 = vmatprep.subr.mxu0 0.0
    %671 = vmatpush1.msra.mxu0 0.0
    %672 = vmatprep.subr.mxu0 0.0
    %673 = vmatpush1.msra.mxu0 0.0
    %674 = vmatprep.subr.mxu0 0.0
    %675 = vmatpush1.msra.mxu0 0.0
    %676 = vmatprep.subr.mxu0 0.0
    %677 = vmatpush1.msra.mxu0 0.0
    %678 = vmatprep.subr.mxu0 0.0
    %679 = vmatpush1.msra.mxu0 0.0
    %680 = vmatprep.subr.mxu0 0.0
    %681 = vmatpush1.msra.mxu0 0.0
    %682 = vmatprep.subr.mxu0 0.0
    %683 = vmatpush1.msra.mxu0 0.0
    %684 = vmatprep.mubr.f32.mxu0 0.0
    %685 = vmatmul.mubr.f32.gmra.mrb[0].mxu0 %v618
    %v686 = vpop.f32.mrb[0].mxu0
    %v687 = vadd.f32 %v99, %v686
    %v688 = vpop.f32.mrb[0].mxu0
    %689 = vdwg.mxu0
    %v690 = vxor.u32 %v176, 2147483648
    %v691 = vmul.f32 %v690, 1.442695
    %v692 = vpow.pop %v691
    %v693 = vadd.f32 %v692, 1.0
    %v694 = vrcp.pop %v693
    %v695 = vmul.f32 1.0, %v694
    %v696 = vtanh.pop %v176
    %698 = vrot.lane.b32.xlu0 %v696, 64
    %v699 = vpop.permute.xlu0 %698
    %v701 = vmul.f32 %v695, %v699
    %v702 = vtanh.pop %v701
    %704 = vrot.lane.b32.xlu0 %v702, 96
    %v705 = vpop.permute.xlu0 %704
    %v707 = vmul.f32 %v695, %v705
    %709 = vrot.lane.b32.xlu0 %v707, 32
    %v710 = vpop.permute.xlu0 %709
    %vm711 = vcmask 261120
    %v712 = vsel %vm711, %v710, 0
    %714 = vmatprep.subr.mxu0 0.0
    %715 = vmatpush1.msra.mxu0 %v90
    %716 = vmatprep.subr.mxu0 0.0
    %717 = vmatpush1.msra.mxu0 %v91
    %718 = vmatprep.subr.mxu0 0.0
    %719 = vmatpush1.msra.mxu0 %v92
    %720 = vmatprep.subr.mxu0 0.0
    %721 = vmatpush1.msra.mxu0 %v93
    %722 = vmatprep.subr.mxu0 0.0
    %723 = vmatpush1.msra.mxu0 0.0
    %724 = vmatprep.subr.mxu0 0.0
    %725 = vmatpush1.msra.mxu0 0.0
    %726 = vmatprep.subr.mxu0 0.0
    %727 = vmatpush1.msra.mxu0 0.0
    %728 = vmatprep.subr.mxu0 0.0
    %729 = vmatpush1.msra.mxu0 0.0
    %730 = vmatprep.subr.mxu0 0.0
    %731 = vmatpush1.msra.mxu0 0.0
    %732 = vmatprep.subr.mxu0 0.0
    %733 = vmatpush1.msra.mxu0 0.0
    %734 = vmatprep.subr.mxu0 0.0
    %735 = vmatpush1.msra.mxu0 0.0
    %736 = vmatprep.subr.mxu0 0.0
    %737 = vmatpush1.msra.mxu0 0.0
    %738 = vmatprep.subr.mxu0 0.0
    %739 = vmatpush1.msra.mxu0 0.0
    %740 = vmatprep.subr.mxu0 0.0
    %741 = vmatpush1.msra.mxu0 0.0
    %742 = vmatprep.subr.mxu0 0.0
    %743 = vmatpush1.msra.mxu0 0.0
    %744 = vmatprep.subr.mxu0 0.0
    %745 = vmatpush1.msra.mxu0 0.0
    %746 = vmatprep.subr.mxu0 0.0
    %747 = vmatpush1.msra.mxu0 0.0
    %748 = vmatprep.subr.mxu0 0.0
    %749 = vmatpush1.msra.mxu0 0.0
    %750 = vmatprep.subr.mxu0 0.0
    %751 = vmatpush1.msra.mxu0 0.0
    %752 = vmatprep.subr.mxu0 0.0
    %753 = vmatpush1.msra.mxu0 0.0
    %754 = vmatprep.subr.mxu0 0.0
    %755 = vmatpush1.msra.mxu0 0.0
    %756 = vmatprep.subr.mxu0 0.0
    %757 = vmatpush1.msra.mxu0 0.0
    %758 = vmatprep.subr.mxu0 0.0
    %759 = vmatpush1.msra.mxu0 0.0
    %760 = vmatprep.subr.mxu0 0.0
    %761 = vmatpush1.msra.mxu0 0.0
    %762 = vmatprep.subr.mxu0 0.0
    %763 = vmatpush1.msra.mxu0 0.0
    %764 = vmatprep.subr.mxu0 0.0
    %765 = vmatpush1.msra.mxu0 0.0
    %766 = vmatprep.subr.mxu0 0.0
    %767 = vmatpush1.msra.mxu0 0.0
    %768 = vmatprep.subr.mxu0 0.0
    %769 = vmatpush1.msra.mxu0 0.0
    %770 = vmatprep.subr.mxu0 0.0
    %771 = vmatpush1.msra.mxu0 0.0
    %772 = vmatprep.subr.mxu0 0.0
    %773 = vmatpush1.msra.mxu0 0.0
    %774 = vmatprep.subr.mxu0 0.0
    %775 = vmatpush1.msra.mxu0 0.0
    %776 = vmatprep.subr.mxu0 0.0
    %777 = vmatpush1.msra.mxu0 0.0
    %778 = vmatprep.mubr.f32.mxu0 0.0
    %779 = vmatmul.mubr.f32.gmra.mrb[0].mxu0 %v712
    %v780 = vpop.f32.mrb[0].mxu0
    %v781 = vadd.f32 0.0, %v780
    %v782 = vpop.f32.mrb[0].mxu0
    %783 = vdwg.mxu0
    %v784 = vadd.f32 %v249, %v781
    %v785 = vxor.u32 %v784, 2147483648
    %v786 = vmul.f32 %v785, 1.442695
    %v787 = vpow.pop %v786
    %v788 = vadd.f32 %v787, 1.0
    %v789 = vrcp.pop %v788
    %v790 = vmul.f32 1.0, %v789
    %v791 = vtanh.pop %v784
    %793 = vrot.lane.b32.xlu0 %v701, 32
    %v794 = vpop.permute.xlu0 %793
    %v796 = vmul.f32 %v790, %v794
    %798 = vrot.lane.b32.xlu0 %v791, 64
    %v799 = vpop.permute.xlu0 %798
    %v801 = vmul.f32 %v790, %v799
    %803 = vrot.lane.b32.xlu0 %v801, 32
    %v804 = vpop.permute.xlu0 %803
    %v806 = vadd.f32 %v796, %v804
    %v807 = vtanh.pop %v806
    %809 = vrot.lane.b32.xlu0 %v807, 64
    %v810 = vpop.permute.xlu0 %809
    %v812 = vmul.f32 %v790, %v810
    %814 = vrot.lane.b32.xlu0 %v812, 32
    %v815 = vpop.permute.xlu0 %814
    %v816 = vsel %vm711, %v815, 0
    %818 = vmatprep.subr.mxu0 0.0
    %819 = vmatpush1.msra.mxu0 %v90
    %820 = vmatprep.subr.mxu0 0.0
    %821 = vmatpush1.msra.mxu0 %v91
    %822 = vmatprep.subr.mxu0 0.0
    %823 = vmatpush1.msra.mxu0 %v92
    %824 = vmatprep.subr.mxu0 0.0
    %825 = vmatpush1.msra.mxu0 %v93
    %826 = vmatprep.subr.mxu0 0.0
    %827 = vmatpush1.msra.mxu0 0.0
    %828 = vmatprep.subr.mxu0 0.0
    %829 = vmatpush1.msra.mxu0 0.0
    %830 = vmatprep.subr.mxu0 0.0
    %831 = vmatpush1.msra.mxu0 0.0
    %832 = vmatprep.subr.mxu0 0.0
    %833 = vmatpush1.msra.mxu0 0.0
    %834 = vmatprep.subr.mxu0 0.0
    %835 = vmatpush1.msra.mxu0 0.0
    %836 = vmatprep.subr.mxu0 0.0
    %837 = vmatpush1.msra.mxu0 0.0
    %838 = vmatprep.subr.mxu0 0.0
    %839 = vmatpush1.msra.mxu0 0.0
    %840 = vmatprep.subr.mxu0 0.0
    %841 = vmatpush1.msra.mxu0 0.0
    %842 = vmatprep.subr.mxu0 0.0
    %843 = vmatpush1.msra.mxu0 0.0
    %844 = vmatprep.subr.mxu0 0.0
    %845 = vmatpush1.msra.mxu0 0.0
    %846 = vmatprep.subr.mxu0 0.0
    %847 = vmatpush1.msra.mxu0 0.0
    %848 = vmatprep.subr.mxu0 0.0
    %849 = vmatpush1.msra.mxu0 0.0
    %850 = vmatprep.subr.mxu0 0.0
    %851 = vmatpush1.msra.mxu0 0.0
    %852 = vmatprep.subr.mxu0 0.0
    %853 = vmatpush1.msra.mxu0 0.0
    %854 = vmatprep.subr.mxu0 0.0
    %855 = vmatpush1.msra.mxu0 0.0
    %856 = vmatprep.subr.mxu0 0.0
    %857 = vmatpush1.msra.mxu0 0.0
    %858 = vmatprep.subr.mxu0 0.0
    %859 = vmatpush1.msra.mxu0 0.0
    %860 = vmatprep.subr.mxu0 0.0
    %861 = vmatpush1.msra.mxu0 0.0
    %862 = vmatprep.subr.mxu0 0.0
    %863 = vmatpush1.msra.mxu0 0.0
    %864 = vmatprep.subr.mxu0 0.0
    %865 = vmatpush1.msra.mxu0 0.0
    %866 = vmatprep.subr.mxu0 0.0
    %867 = vmatpush1.msra.mxu0 0.0
    %868 = vmatprep.subr.mxu0 0.0
    %869 = vmatpush1.msra.mxu0 0.0
    %870 = vmatprep.subr.mxu0 0.0
    %871 = vmatpush1.msra.mxu0 0.0
    %872 = vmatprep.subr.mxu0 0.0
    %873 = vmatpush1.msra.mxu0 0.0
    %874 = vmatprep.subr.mxu0 0.0
    %875 = vmatpush1.msra.mxu0 0.0
    %876 = vmatprep.subr.mxu0 0.0
    %877 = vmatpush1.msra.mxu0 0.0
    %878 = vmatprep.subr.mxu0 0.0
    %879 = vmatpush1.msra.mxu0 0.0
    %880 = vmatprep.subr.mxu0 0.0
    %881 = vmatpush1.msra.mxu0 0.0
    %882 = vmatprep.mubr.f32.mxu0 0.0
    %883 = vmatmul.mubr.f32.gmra.mrb[0].mxu0 %v816
    %v884 = vpop.f32.mrb[0].mxu0
    %v885 = vadd.f32 0.0, %v884
    %v886 = vpop.f32.mrb[0].mxu0
    %887 = vdwg.mxu0
    %v888 = vadd.f32 %v322, %v885
    %v889 = vxor.u32 %v888, 2147483648
    %v890 = vmul.f32 %v889, 1.442695
    %v891 = vpow.pop %v890
    %v892 = vadd.f32 %v891, 1.0
    %v893 = vrcp.pop %v892
    %v894 = vmul.f32 1.0, %v893
    %v895 = vtanh.pop %v888
    %v896 = vmul.f32 %v894, %v806
    %898 = vrot.lane.b32.xlu0 %v895, 64
    %v899 = vpop.permute.xlu0 %898
    %v901 = vmul.f32 %v894, %v899
    %903 = vrot.lane.b32.xlu0 %v901, 32
    %v904 = vpop.permute.xlu0 %903
    %v906 = vadd.f32 %v896, %v904
    %v907 = vtanh.pop %v906
    %909 = vrot.lane.b32.xlu0 %v907, 64
    %v910 = vpop.permute.xlu0 %909
    %v912 = vmul.f32 %v894, %v910
    %914 = vrot.lane.b32.xlu0 %v912, 32
    %v915 = vpop.permute.xlu0 %914
    %v916 = vsel %vm711, %v915, 0
    %918 = vmatprep.subr.mxu0 0.0
    %919 = vmatpush1.msra.mxu0 %v90
    %920 = vmatprep.subr.mxu0 0.0
    %921 = vmatpush1.msra.mxu0 %v91
    %922 = vmatprep.subr.mxu0 0.0
    %923 = vmatpush1.msra.mxu0 %v92
    %924 = vmatprep.subr.mxu0 0.0
    %925 = vmatpush1.msra.mxu0 %v93
    %926 = vmatprep.subr.mxu0 0.0
    %927 = vmatpush1.msra.mxu0 0.0
    %928 = vmatprep.subr.mxu0 0.0
    %929 = vmatpush1.msra.mxu0 0.0
    %930 = vmatprep.subr.mxu0 0.0
    %931 = vmatpush1.msra.mxu0 0.0
    %932 = vmatprep.subr.mxu0 0.0
    %933 = vmatpush1.msra.mxu0 0.0
    %934 = vmatprep.subr.mxu0 0.0
    %935 = vmatpush1.msra.mxu0 0.0
    %936 = vmatprep.subr.mxu0 0.0
    %937 = vmatpush1.msra.mxu0 0.0
    %938 = vmatprep.subr.mxu0 0.0
    %939 = vmatpush1.msra.mxu0 0.0
    %940 = vmatprep.subr.mxu0 0.0
    %941 = vmatpush1.msra.mxu0 0.0
    %942 = vmatprep.subr.mxu0 0.0
    %943 = vmatpush1.msra.mxu0 0.0
    %944 = vmatprep.subr.mxu0 0.0
    %945 = vmatpush1.msra.mxu0 0.0
    %946 = vmatprep.subr.mxu0 0.0
    %947 = vmatpush1.msra.mxu0 0.0
    %948 = vmatprep.subr.mxu0 0.0
    %949 = vmatpush1.msra.mxu0 0.0
    %950 = vmatprep.subr.mxu0 0.0
    %951 = vmatpush1.msra.mxu0 0.0
    %952 = vmatprep.subr.mxu0 0.0
    %953 = vmatpush1.msra.mxu0 0.0
    %954 = vmatprep.subr.mxu0 0.0
    %955 = vmatpush1.msra.mxu0 0.0
    %956 = vmatprep.subr.mxu0 0.0
    %957 = vmatpush1.msra.mxu0 0.0
    %958 = vmatprep.subr.mxu0 0.0
    %959 = vmatpush1.msra.mxu0 0.0
    %960 = vmatprep.subr.mxu0 0.0
    %961 = vmatpush1.msra.mxu0 0.0
    %962 = vmatprep.subr.mxu0 0.0
    %963 = vmatpush1.msra.mxu0 0.0
    %964 = vmatprep.subr.mxu0 0.0
    %965 = vmatpush1.msra.mxu0 0.0
    %966 = vmatprep.subr.mxu0 0.0
    %967 = vmatpush1.msra.mxu0 0.0
    %968 = vmatprep.subr.mxu0 0.0
    %969 = vmatpush1.msra.mxu0 0.0
    %970 = vmatprep.subr.mxu0 0.0
    %971 = vmatpush1.msra.mxu0 0.0
    %972 = vmatprep.subr.mxu0 0.0
    %973 = vmatpush1.msra.mxu0 0.0
    %974 = vmatprep.subr.mxu0 0.0
    %975 = vmatpush1.msra.mxu0 0.0
    %976 = vmatprep.subr.mxu0 0.0
    %977 = vmatpush1.msra.mxu0 0.0
    %978 = vmatprep.subr.mxu0 0.0
    %979 = vmatpush1.msra.mxu0 0.0
    %980 = vmatprep.subr.mxu0 0.0
    %981 = vmatpush1.msra.mxu0 0.0
    %982 = vmatprep.mubr.f32.mxu0 0.0
    %983 = vmatmul.mubr.f32.gmra.mrb[0].mxu0 %v916
    %v984 = vpop.f32.mrb[0].mxu0
    %v985 = vadd.f32 0.0, %v984
    %v986 = vpop.f32.mrb[0].mxu0
    %987 = vdwg.mxu0
    %v988 = vadd.f32 %v395, %v985
    %v989 = vxor.u32 %v988, 2147483648
    %v990 = vmul.f32 %v989, 1.442695
    %v991 = vpow.pop %v990
    %v992 = vadd.f32 %v991, 1.0
    %v993 = vrcp.pop %v992
    %v994 = vmul.f32 1.0, %v993
    %v995 = vtanh.pop %v988
    %v996 = vmul.f32 %v994, %v906
    %998 = vrot.lane.b32.xlu0 %v995, 64
    %v999 = vpop.permute.xlu0 %998
    %v1001 = vmul.f32 %v994, %v999
    %1003 = vrot.lane.b32.xlu0 %v1001, 32
    %v1004 = vpop.permute.xlu0 %1003
    %v1006 = vadd.f32 %v996, %v1004
    %v1007 = vtanh.pop %v1006
    %1009 = vrot.lane.b32.xlu0 %v1007, 64
    %v1010 = vpop.permute.xlu0 %1009
    %v1012 = vmul.f32 %v994, %v1010
    %1014 = vrot.lane.b32.xlu0 %v1012, 32
    %v1015 = vpop.permute.xlu0 %1014
    %v1016 = vsel %vm711, %v1015, 0
    %1018 = vmatprep.subr.mxu0 0.0
    %1019 = vmatpush1.msra.mxu0 %v90
    %1020 = vmatprep.subr.mxu0 0.0
    %1021 = vmatpush1.msra.mxu0 %v91
    %1022 = vmatprep.subr.mxu0 0.0
    %1023 = vmatpush1.msra.mxu0 %v92
    %1024 = vmatprep.subr.mxu0 0.0
    %1025 = vmatpush1.msra.mxu0 %v93
    %1026 = vmatprep.subr.mxu0 0.0
    %1027 = vmatpush1.msra.mxu0 0.0
    %1028 = vmatprep.subr.mxu0 0.0
    %1029 = vmatpush1.msra.mxu0 0.0
    %1030 = vmatprep.subr.mxu0 0.0
    %1031 = vmatpush1.msra.mxu0 0.0
    %1032 = vmatprep.subr.mxu0 0.0
    %1033 = vmatpush1.msra.mxu0 0.0
    %1034 = vmatprep.subr.mxu0 0.0
    %1035 = vmatpush1.msra.mxu0 0.0
    %1036 = vmatprep.subr.mxu0 0.0
    %1037 = vmatpush1.msra.mxu0 0.0
    %1038 = vmatprep.subr.mxu0 0.0
    %1039 = vmatpush1.msra.mxu0 0.0
    %1040 = vmatprep.subr.mxu0 0.0
    %1041 = vmatpush1.msra.mxu0 0.0
    %1042 = vmatprep.subr.mxu0 0.0
    %1043 = vmatpush1.msra.mxu0 0.0
    %1044 = vmatprep.subr.mxu0 0.0
    %1045 = vmatpush1.msra.mxu0 0.0
    %1046 = vmatprep.subr.mxu0 0.0
    %1047 = vmatpush1.msra.mxu0 0.0
    %1048 = vmatprep.subr.mxu0 0.0
    %1049 = vmatpush1.msra.mxu0 0.0
    %1050 = vmatprep.subr.mxu0 0.0
    %1051 = vmatpush1.msra.mxu0 0.0
    %1052 = vmatprep.subr.mxu0 0.0
    %1053 = vmatpush1.msra.mxu0 0.0
    %1054 = vmatprep.subr.mxu0 0.0
    %1055 = vmatpush1.msra.mxu0 0.0
    %1056 = vmatprep.subr.mxu0 0.0
    %1057 = vmatpush1.msra.mxu0 0.0
    %1058 = vmatprep.subr.mxu0 0.0
    %1059 = vmatpush1.msra.mxu0 0.0
    %1060 = vmatprep.subr.mxu0 0.0
    %1061 = vmatpush1.msra.mxu0 0.0
    %1062 = vmatprep.subr.mxu0 0.0
    %1063 = vmatpush1.msra.mxu0 0.0
    %1064 = vmatprep.subr.mxu0 0.0
    %1065 = vmatpush1.msra.mxu0 0.0
    %1066 = vmatprep.subr.mxu0 0.0
    %1067 = vmatpush1.msra.mxu0 0.0
    %1068 = vmatprep.subr.mxu0 0.0
    %1069 = vmatpush1.msra.mxu0 0.0
    %1070 = vmatprep.subr.mxu0 0.0
    %1071 = vmatpush1.msra.mxu0 0.0
    %1072 = vmatprep.subr.mxu0 0.0
    %1073 = vmatpush1.msra.mxu0 0.0
    %1074 = vmatprep.subr.mxu0 0.0
    %1075 = vmatpush1.msra.mxu0 0.0
    %1076 = vmatprep.subr.mxu0 0.0
    %1077 = vmatpush1.msra.mxu0 0.0
    %1078 = vmatprep.subr.mxu0 0.0
    %1079 = vmatpush1.msra.mxu0 0.0
    %1080 = vmatprep.subr.mxu0 0.0
    %1081 = vmatpush1.msra.mxu0 0.0
    %1082 = vmatprep.mubr.f32.mxu0 0.0
    %1083 = vmatmul.mubr.f32.gmra.mrb[0].mxu0 %v1016
    %v1084 = vpop.f32.mrb[0].mxu0
    %v1085 = vadd.f32 0.0, %v1084
    %v1086 = vpop.f32.mrb[0].mxu0
    %1087 = vdwg.mxu0
    %v1088 = vadd.f32 %v468, %v1085
    %v1089 = vxor.u32 %v1088, 2147483648
    %v1090 = vmul.f32 %v1089, 1.442695
    %v1091 = vpow.pop %v1090
    %v1092 = vadd.f32 %v1091, 1.0
    %v1093 = vrcp.pop %v1092
    %v1094 = vmul.f32 1.0, %v1093
    %v1095 = vtanh.pop %v1088
    %v1096 = vmul.f32 %v1094, %v1006
    %1098 = vrot.lane.b32.xlu0 %v1095, 64
    %v1099 = vpop.permute.xlu0 %1098
    %v1101 = vmul.f32 %v1094, %v1099
    %1103 = vrot.lane.b32.xlu0 %v1101, 32
    %v1104 = vpop.permute.xlu0 %1103
    %v1106 = vadd.f32 %v1096, %v1104
    %v1107 = vtanh.pop %v1106
    %1109 = vrot.lane.b32.xlu0 %v1107, 64
    %v1110 = vpop.permute.xlu0 %1109
    %v1112 = vmul.f32 %v1094, %v1110
    %1114 = vrot.lane.b32.xlu0 %v1112, 32
    %v1115 = vpop.permute.xlu0 %1114
    %v1116 = vsel %vm711, %v1115, 0
    %1118 = vmatprep.subr.mxu0 0.0
    %1119 = vmatpush1.msra.mxu0 %v90
    %1120 = vmatprep.subr.mxu0 0.0
    %1121 = vmatpush1.msra.mxu0 %v91
    %1122 = vmatprep.subr.mxu0 0.0
    %1123 = vmatpush1.msra.mxu0 %v92
    %1124 = vmatprep.subr.mxu0 0.0
    %1125 = vmatpush1.msra.mxu0 %v93
    %1126 = vmatprep.subr.mxu0 0.0
    %1127 = vmatpush1.msra.mxu0 0.0
    %1128 = vmatprep.subr.mxu0 0.0
    %1129 = vmatpush1.msra.mxu0 0.0
    %1130 = vmatprep.subr.mxu0 0.0
    %1131 = vmatpush1.msra.mxu0 0.0
    %1132 = vmatprep.subr.mxu0 0.0
    %1133 = vmatpush1.msra.mxu0 0.0
    %1134 = vmatprep.subr.mxu0 0.0
    %1135 = vmatpush1.msra.mxu0 0.0
    %1136 = vmatprep.subr.mxu0 0.0
    %1137 = vmatpush1.msra.mxu0 0.0
    %1138 = vmatprep.subr.mxu0 0.0
    %1139 = vmatpush1.msra.mxu0 0.0
    %1140 = vmatprep.subr.mxu0 0.0
    %1141 = vmatpush1.msra.mxu0 0.0
    %1142 = vmatprep.subr.mxu0 0.0
    %1143 = vmatpush1.msra.mxu0 0.0
    %1144 = vmatprep.subr.mxu0 0.0
    %1145 = vmatpush1.msra.mxu0 0.0
    %1146 = vmatprep.subr.mxu0 0.0
    %1147 = vmatpush1.msra.mxu0 0.0
    %1148 = vmatprep.subr.mxu0 0.0
    %1149 = vmatpush1.msra.mxu0 0.0
    %1150 = vmatprep.subr.mxu0 0.0
    %1151 = vmatpush1.msra.mxu0 0.0
    %1152 = vmatprep.subr.mxu0 0.0
    %1153 = vmatpush1.msra.mxu0 0.0
    %1154 = vmatprep.subr.mxu0 0.0
    %1155 = vmatpush1.msra.mxu0 0.0
    %1156 = vmatprep.subr.mxu0 0.0
    %1157 = vmatpush1.msra.mxu0 0.0
    %1158 = vmatprep.subr.mxu0 0.0
    %1159 = vmatpush1.msra.mxu0 0.0
    %1160 = vmatprep.subr.mxu0 0.0
    %1161 = vmatpush1.msra.mxu0 0.0
    %1162 = vmatprep.subr.mxu0 0.0
    %1163 = vmatpush1.msra.mxu0 0.0
    %1164 = vmatprep.subr.mxu0 0.0
    %1165 = vmatpush1.msra.mxu0 0.0
    %1166 = vmatprep.subr.mxu0 0.0
    %1167 = vmatpush1.msra.mxu0 0.0
    %1168 = vmatprep.subr.mxu0 0.0
    %1169 = vmatpush1.msra.mxu0 0.0
    %1170 = vmatprep.subr.mxu0 0.0
    %1171 = vmatpush1.msra.mxu0 0.0
    %1172 = vmatprep.subr.mxu0 0.0
    %1173 = vmatpush1.msra.mxu0 0.0
    %1174 = vmatprep.subr.mxu0 0.0
    %1175 = vmatpush1.msra.mxu0 0.0
    %1176 = vmatprep.subr.mxu0 0.0
    %1177 = vmatpush1.msra.mxu0 0.0
    %1178 = vmatprep.subr.mxu0 0.0
    %1179 = vmatpush1.msra.mxu0 0.0
    %1180 = vmatprep.subr.mxu0 0.0
    %1181 = vmatpush1.msra.mxu0 0.0
    %1182 = vmatprep.mubr.f32.mxu0 0.0
    %1183 = vmatmul.mubr.f32.gmra.mrb[0].mxu0 %v1116
    %v1184 = vpop.f32.mrb[0].mxu0
    %v1185 = vadd.f32 0.0, %v1184
    %v1186 = vpop.f32.mrb[0].mxu0
    %1187 = vdwg.mxu0
    %v1188 = vadd.f32 %v541, %v1185
    %v1189 = vxor.u32 %v1188, 2147483648
    %v1190 = vmul.f32 %v1189, 1.442695
    %v1191 = vpow.pop %v1190
    %v1192 = vadd.f32 %v1191, 1.0
    %v1193 = vrcp.pop %v1192
    %v1194 = vmul.f32 1.0, %v1193
    %v1195 = vtanh.pop %v1188
    %v1196 = vmul.f32 %v1194, %v1106
    %1198 = vrot.lane.b32.xlu0 %v1195, 64
    %v1199 = vpop.permute.xlu0 %1198
    %v1201 = vmul.f32 %v1194, %v1199
    %1203 = vrot.lane.b32.xlu0 %v1201, 32
    %v1204 = vpop.permute.xlu0 %1203
    %v1206 = vadd.f32 %v1196, %v1204
    %v1207 = vtanh.pop %v1206
    %1209 = vrot.lane.b32.xlu0 %v1207, 64
    %v1210 = vpop.permute.xlu0 %1209
    %v1212 = vmul.f32 %v1194, %v1210
    %1214 = vrot.lane.b32.xlu0 %v1212, 32
    %v1215 = vpop.permute.xlu0 %1214
    %v1216 = vsel %vm711, %v1215, 0
    %1218 = vmatprep.subr.mxu0 0.0
    %1219 = vmatpush1.msra.mxu0 %v90
    %1220 = vmatprep.subr.mxu0 0.0
    %1221 = vmatpush1.msra.mxu0 %v91
    %1222 = vmatprep.subr.mxu0 0.0
    %1223 = vmatpush1.msra.mxu0 %v92
    %1224 = vmatprep.subr.mxu0 0.0
    %1225 = vmatpush1.msra.mxu0 %v93
    %1226 = vmatprep.subr.mxu0 0.0
    %1227 = vmatpush1.msra.mxu0 0.0
    %1228 = vmatprep.subr.mxu0 0.0
    %1229 = vmatpush1.msra.mxu0 0.0
    %1230 = vmatprep.subr.mxu0 0.0
    %1231 = vmatpush1.msra.mxu0 0.0
    %1232 = vmatprep.subr.mxu0 0.0
    %1233 = vmatpush1.msra.mxu0 0.0
    %1234 = vmatprep.subr.mxu0 0.0
    %1235 = vmatpush1.msra.mxu0 0.0
    %1236 = vmatprep.subr.mxu0 0.0
    %1237 = vmatpush1.msra.mxu0 0.0
    %1238 = vmatprep.subr.mxu0 0.0
    %1239 = vmatpush1.msra.mxu0 0.0
    %1240 = vmatprep.subr.mxu0 0.0
    %1241 = vmatpush1.msra.mxu0 0.0
    %1242 = vmatprep.subr.mxu0 0.0
    %1243 = vmatpush1.msra.mxu0 0.0
    %1244 = vmatprep.subr.mxu0 0.0
    %1245 = vmatpush1.msra.mxu0 0.0
    %1246 = vmatprep.subr.mxu0 0.0
    %1247 = vmatpush1.msra.mxu0 0.0
    %1248 = vmatprep.subr.mxu0 0.0
    %1249 = vmatpush1.msra.mxu0 0.0
    %1250 = vmatprep.subr.mxu0 0.0
    %1251 = vmatpush1.msra.mxu0 0.0
    %1252 = vmatprep.subr.mxu0 0.0
    %1253 = vmatpush1.msra.mxu0 0.0
    %1254 = vmatprep.subr.mxu0 0.0
    %1255 = vmatpush1.msra.mxu0 0.0
    %1256 = vmatprep.subr.mxu0 0.0
    %1257 = vmatpush1.msra.mxu0 0.0
    %1258 = vmatprep.subr.mxu0 0.0
    %1259 = vmatpush1.msra.mxu0 0.0
    %1260 = vmatprep.subr.mxu0 0.0
    %1261 = vmatpush1.msra.mxu0 0.0
    %1262 = vmatprep.subr.mxu0 0.0
    %1263 = vmatpush1.msra.mxu0 0.0
    %1264 = vmatprep.subr.mxu0 0.0
    %1265 = vmatpush1.msra.mxu0 0.0
    %1266 = vmatprep.subr.mxu0 0.0
    %1267 = vmatpush1.msra.mxu0 0.0
    %1268 = vmatprep.subr.mxu0 0.0
    %1269 = vmatpush1.msra.mxu0 0.0
    %1270 = vmatprep.subr.mxu0 0.0
    %1271 = vmatpush1.msra.mxu0 0.0
    %1272 = vmatprep.subr.mxu0 0.0
    %1273 = vmatpush1.msra.mxu0 0.0
    %1274 = vmatprep.subr.mxu0 0.0
    %1275 = vmatpush1.msra.mxu0 0.0
    %1276 = vmatprep.subr.mxu0 0.0
    %1277 = vmatpush1.msra.mxu0 0.0
    %1278 = vmatprep.subr.mxu0 0.0
    %1279 = vmatpush1.msra.mxu0 0.0
    %1280 = vmatprep.subr.mxu0 0.0
    %1281 = vmatpush1.msra.mxu0 0.0
    %1282 = vmatprep.mubr.f32.mxu0 0.0
    %1283 = vmatmul.mubr.f32.gmra.mrb[0].mxu0 %v1216
    %v1284 = vpop.f32.mrb[0].mxu0
    %v1285 = vadd.f32 0.0, %v1284
    %v1286 = vpop.f32.mrb[0].mxu0
    %1287 = vdwg.mxu0
    %v1288 = vadd.f32 %v614, %v1285
    %v1289 = vxor.u32 %v1288, 2147483648
    %v1290 = vmul.f32 %v1289, 1.442695
    %v1291 = vpow.pop %v1290
    %v1292 = vadd.f32 %v1291, 1.0
    %v1293 = vrcp.pop %v1292
    %v1294 = vmul.f32 1.0, %v1293
    %v1295 = vtanh.pop %v1288
    %v1296 = vmul.f32 %v1294, %v1206
    %1298 = vrot.lane.b32.xlu0 %v1295, 64
    %v1299 = vpop.permute.xlu0 %1298
    %v1301 = vmul.f32 %v1294, %v1299
    %1303 = vrot.lane.b32.xlu0 %v1301, 32
    %v1304 = vpop.permute.xlu0 %1303
    %v1306 = vadd.f32 %v1296, %v1304
    %v1307 = vtanh.pop %v1306
    %1309 = vrot.lane.b32.xlu0 %v1307, 64
    %v1310 = vpop.permute.xlu0 %1309
    %v1312 = vmul.f32 %v1294, %v1310
    %1314 = vrot.lane.b32.xlu0 %v1312, 32
    %v1315 = vpop.permute.xlu0 %1314
    %v1316 = vsel %vm711, %v1315, 0
    %1318 = vmatprep.subr.mxu0 0.0
    %1319 = vmatpush1.msra.mxu0 %v90
    %1320 = vmatprep.subr.mxu0 0.0
    %1321 = vmatpush1.msra.mxu0 %v91
    %1322 = vmatprep.subr.mxu0 0.0
    %1323 = vmatpush1.msra.mxu0 %v92
    %1324 = vmatprep.subr.mxu0 0.0
    %1325 = vmatpush1.msra.mxu0 %v93
    %1326 = vmatprep.subr.mxu0 0.0
    %1327 = vmatpush1.msra.mxu0 0.0
    %1328 = vmatprep.subr.mxu0 0.0
    %1329 = vmatpush1.msra.mxu0 0.0
    %1330 = vmatprep.subr.mxu0 0.0
    %1331 = vmatpush1.msra.mxu0 0.0
    %1332 = vmatprep.subr.mxu0 0.0
    %1333 = vmatpush1.msra.mxu0 0.0
    %1334 = vmatprep.subr.mxu0 0.0
    %1335 = vmatpush1.msra.mxu0 0.0
    %1336 = vmatprep.subr.mxu0 0.0
    %1337 = vmatpush1.msra.mxu0 0.0
    %1338 = vmatprep.subr.mxu0 0.0
    %1339 = vmatpush1.msra.mxu0 0.0
    %1340 = vmatprep.subr.mxu0 0.0
    %1341 = vmatpush1.msra.mxu0 0.0
    %1342 = vmatprep.subr.mxu0 0.0
    %1343 = vmatpush1.msra.mxu0 0.0
    %1344 = vmatprep.subr.mxu0 0.0
    %1345 = vmatpush1.msra.mxu0 0.0
    %1346 = vmatprep.subr.mxu0 0.0
    %1347 = vmatpush1.msra.mxu0 0.0
    %1348 = vmatprep.subr.mxu0 0.0
    %1349 = vmatpush1.msra.mxu0 0.0
    %1350 = vmatprep.subr.mxu0 0.0
    %1351 = vmatpush1.msra.mxu0 0.0
    %1352 = vmatprep.subr.mxu0 0.0
    %1353 = vmatpush1.msra.mxu0 0.0
    %1354 = vmatprep.subr.mxu0 0.0
    %1355 = vmatpush1.msra.mxu0 0.0
    %1356 = vmatprep.subr.mxu0 0.0
    %1357 = vmatpush1.msra.mxu0 0.0
    %1358 = vmatprep.subr.mxu0 0.0
    %1359 = vmatpush1.msra.mxu0 0.0
    %1360 = vmatprep.subr.mxu0 0.0
    %1361 = vmatpush1.msra.mxu0 0.0
    %1362 = vmatprep.subr.mxu0 0.0
    %1363 = vmatpush1.msra.mxu0 0.0
    %1364 = vmatprep.subr.mxu0 0.0
    %1365 = vmatpush1.msra.mxu0 0.0
    %1366 = vmatprep.subr.mxu0 0.0
    %1367 = vmatpush1.msra.mxu0 0.0
    %1368 = vmatprep.subr.mxu0 0.0
    %1369 = vmatpush1.msra.mxu0 0.0
    %1370 = vmatprep.subr.mxu0 0.0
    %1371 = vmatpush1.msra.mxu0 0.0
    %1372 = vmatprep.subr.mxu0 0.0
    %1373 = vmatpush1.msra.mxu0 0.0
    %1374 = vmatprep.subr.mxu0 0.0
    %1375 = vmatpush1.msra.mxu0 0.0
    %1376 = vmatprep.subr.mxu0 0.0
    %1377 = vmatpush1.msra.mxu0 0.0
    %1378 = vmatprep.subr.mxu0 0.0
    %1379 = vmatpush1.msra.mxu0 0.0
    %1380 = vmatprep.subr.mxu0 0.0
    %1381 = vmatpush1.msra.mxu0 0.0
    %1382 = vmatprep.mubr.f32.mxu0 0.0
    %1383 = vmatmul.mubr.f32.gmra.mrb[0].mxu0 %v1316
    %v1384 = vpop.f32.mrb[0].mxu0
    %v1385 = vadd.f32 0.0, %v1384
    %v1386 = vpop.f32.mrb[0].mxu0
    %1387 = vdwg.mxu0
    %v1388 = vadd.f32 %v687, %v1385
    %v1389 = vxor.u32 %v1388, 2147483648
    %v1390 = vmul.f32 %v1389, 1.442695
    %v1391 = vpow.pop %v1390
    %v1392 = vadd.f32 %v1391, 1.0
    %v1393 = vrcp.pop %v1392
    %v1394 = vmul.f32 1.0, %v1393
    %v1395 = vtanh.pop %v1388
    %v1396 = vmul.f32 %v1394, %v1306
    %1398 = vrot.lane.b32.xlu0 %v1395, 64
    %v1399 = vpop.permute.xlu0 %1398
    %v1401 = vmul.f32 %v1394, %v1399
    %1403 = vrot.lane.b32.xlu0 %v1401, 32
    %v1404 = vpop.permute.xlu0 %1403
    %v1406 = vadd.f32 %v1396, %v1404
    %v1407 = vtanh.pop %v1406
    %1409 = vrot.lane.b32.xlu0 %v1407, 64
    %v1410 = vpop.permute.xlu0 %1409
    %v1412 = vmul.f32 %v1394, %v1410
    %v1413 = vld [vmem:[%s4] sm:$0xff]
    %v1414 = vld [vmem:[%s4 + $0x8] sm:$0xff]
    %v1415 = vld [vmem:[%s4 + $0x10] sm:$0xff]
    %v1416 = vld [vmem:[%s4 + $0x18] sm:$0xff]
    %v1417 = vld [vmem:[%s5] sm:$0xff]
    %v1418 = vld [vmem:[%s5 + $0x8] sm:$0xff]
    %v1419 = vld [vmem:[%s5 + $0x10] sm:$0xff]
    %v1420 = vld [vmem:[%s5 + $0x18] sm:$0xff]
    %v1421 = vld [vmem:[%s6] sm:$0x1]
    %v1423 = vlaneseq
    %v1424 = vshrl.u32 %v1423, 7
    %v1425 = vsub.s32 0, %v1424
    %v1426 = vrot.slane %v1421, %v1425
    %1428 = vmatprep.subr.mxu0 0.0
    %1429 = vmatpush1.msra.mxu0 %v1413
    %1430 = vmatprep.subr.mxu0 0.0
    %1431 = vmatpush1.msra.mxu0 %v1414
    %1432 = vmatprep.subr.mxu0 0.0
    %1433 = vmatpush1.msra.mxu0 %v1415
    %1434 = vmatprep.subr.mxu0 0.0
    %1435 = vmatpush1.msra.mxu0 %v1416
    %1436 = vmatprep.subr.mxu0 0.0
    %1437 = vmatpush1.msra.mxu0 0.0
    %1438 = vmatprep.subr.mxu0 0.0
    %1439 = vmatpush1.msra.mxu0 0.0
    %1440 = vmatprep.subr.mxu0 0.0
    %1441 = vmatpush1.msra.mxu0 0.0
    %1442 = vmatprep.subr.mxu0 0.0
    %1443 = vmatpush1.msra.mxu0 0.0
    %1444 = vmatprep.subr.mxu0 0.0
    %1445 = vmatpush1.msra.mxu0 0.0
    %1446 = vmatprep.subr.mxu0 0.0
    %1447 = vmatpush1.msra.mxu0 0.0
    %1448 = vmatprep.subr.mxu0 0.0
    %1449 = vmatpush1.msra.mxu0 0.0
    %1450 = vmatprep.subr.mxu0 0.0
    %1451 = vmatpush1.msra.mxu0 0.0
    %1452 = vmatprep.subr.mxu0 0.0
    %1453 = vmatpush1.msra.mxu0 0.0
    %1454 = vmatprep.subr.mxu0 0.0
    %1455 = vmatpush1.msra.mxu0 0.0
    %1456 = vmatprep.subr.mxu0 0.0
    %1457 = vmatpush1.msra.mxu0 0.0
    %1458 = vmatprep.subr.mxu0 0.0
    %1459 = vmatpush1.msra.mxu0 0.0
    %1460 = vmatprep.subr.mxu0 0.0
    %1461 = vmatpush1.msra.mxu0 0.0
    %1462 = vmatprep.subr.mxu0 0.0
    %1463 = vmatpush1.msra.mxu0 0.0
    %1464 = vmatprep.subr.mxu0 0.0
    %1465 = vmatpush1.msra.mxu0 0.0
    %1466 = vmatprep.subr.mxu0 0.0
    %1467 = vmatpush1.msra.mxu0 0.0
    %1468 = vmatprep.subr.mxu0 0.0
    %1469 = vmatpush1.msra.mxu0 0.0
    %1470 = vmatprep.subr.mxu0 0.0
    %1471 = vmatpush1.msra.mxu0 0.0
    %1472 = vmatprep.subr.mxu0 0.0
    %1473 = vmatpush1.msra.mxu0 0.0
    %1474 = vmatprep.subr.mxu0 0.0
    %1475 = vmatpush1.msra.mxu0 0.0
    %1476 = vmatprep.subr.mxu0 0.0
    %1477 = vmatpush1.msra.mxu0 0.0
    %1478 = vmatprep.subr.mxu0 0.0
    %1479 = vmatpush1.msra.mxu0 0.0
    %1480 = vmatprep.subr.mxu0 0.0
    %1481 = vmatpush1.msra.mxu0 0.0
    %1482 = vmatprep.subr.mxu0 0.0
    %1483 = vmatpush1.msra.mxu0 0.0
    %1484 = vmatprep.subr.mxu0 0.0
    %1485 = vmatpush1.msra.mxu0 0.0
    %1486 = vmatprep.subr.mxu0 0.0
    %1487 = vmatpush1.msra.mxu0 0.0
    %1488 = vmatprep.subr.mxu0 0.0
    %1489 = vmatpush1.msra.mxu0 0.0
    %1490 = vmatprep.subr.mxu0 0.0
    %1491 = vmatpush1.msra.mxu0 0.0
    %1492 = vmatprep.mubr.f32.mxu0 0.0
    %1493 = vmatmul.mubr.f32.gmra.mrb[0].mxu0 %v712
    %v1494 = vpop.f32.mrb[0].mxu0
    %v1495 = vadd.f32 %v1426, %v1494
    %v1496 = vpop.f32.mrb[0].mxu0
    %1497 = vdwg.mxu0
    %1498 = vmatprep.subr.mxu0 0.0
    %1499 = vmatpush1.msra.mxu0 %v1413
    %1500 = vmatprep.subr.mxu0 0.0
    %1501 = vmatpush1.msra.mxu0 %v1414
    %1502 = vmatprep.subr.mxu0 0.0
    %1503 = vmatpush1.msra.mxu0 %v1415
    %1504 = vmatprep.subr.mxu0 0.0
    %1505 = vmatpush1.msra.mxu0 %v1416
    %1506 = vmatprep.subr.mxu0 0.0
    %1507 = vmatpush1.msra.mxu0 0.0
    %1508 = vmatprep.subr.mxu0 0.0
    %1509 = vmatpush1.msra.mxu0 0.0
    %1510 = vmatprep.subr.mxu0 0.0
    %1511 = vmatpush1.msra.mxu0 0.0
    %1512 = vmatprep.subr.mxu0 0.0
    %1513 = vmatpush1.msra.mxu0 0.0
    %1514 = vmatprep.subr.mxu0 0.0
    %1515 = vmatpush1.msra.mxu0 0.0
    %1516 = vmatprep.subr.mxu0 0.0
    %1517 = vmatpush1.msra.mxu0 0.0
    %1518 = vmatprep.subr.mxu0 0.0
    %1519 = vmatpush1.msra.mxu0 0.0
    %1520 = vmatprep.subr.mxu0 0.0
    %1521 = vmatpush1.msra.mxu0 0.0
    %1522 = vmatprep.subr.mxu0 0.0
    %1523 = vmatpush1.msra.mxu0 0.0
    %1524 = vmatprep.subr.mxu0 0.0
    %1525 = vmatpush1.msra.mxu0 0.0
    %1526 = vmatprep.subr.mxu0 0.0
    %1527 = vmatpush1.msra.mxu0 0.0
    %1528 = vmatprep.subr.mxu0 0.0
    %1529 = vmatpush1.msra.mxu0 0.0
    %1530 = vmatprep.subr.mxu0 0.0
    %1531 = vmatpush1.msra.mxu0 0.0
    %1532 = vmatprep.subr.mxu0 0.0
    %1533 = vmatpush1.msra.mxu0 0.0
    %1534 = vmatprep.subr.mxu0 0.0
    %1535 = vmatpush1.msra.mxu0 0.0
    %1536 = vmatprep.subr.mxu0 0.0
    %1537 = vmatpush1.msra.mxu0 0.0
    %1538 = vmatprep.subr.mxu0 0.0
    %1539 = vmatpush1.msra.mxu0 0.0
    %1540 = vmatprep.subr.mxu0 0.0
    %1541 = vmatpush1.msra.mxu0 0.0
    %1542 = vmatprep.subr.mxu0 0.0
    %1543 = vmatpush1.msra.mxu0 0.0
    %1544 = vmatprep.subr.mxu0 0.0
    %1545 = vmatpush1.msra.mxu0 0.0
    %1546 = vmatprep.subr.mxu0 0.0
    %1547 = vmatpush1.msra.mxu0 0.0
    %1548 = vmatprep.subr.mxu0 0.0
    %1549 = vmatpush1.msra.mxu0 0.0
    %1550 = vmatprep.subr.mxu0 0.0
    %1551 = vmatpush1.msra.mxu0 0.0
    %1552 = vmatprep.subr.mxu0 0.0
    %1553 = vmatpush1.msra.mxu0 0.0
    %1554 = vmatprep.subr.mxu0 0.0
    %1555 = vmatpush1.msra.mxu0 0.0
    %1556 = vmatprep.subr.mxu0 0.0
    %1557 = vmatpush1.msra.mxu0 0.0
    %1558 = vmatprep.subr.mxu0 0.0
    %1559 = vmatpush1.msra.mxu0 0.0
    %1560 = vmatprep.subr.mxu0 0.0
    %1561 = vmatpush1.msra.mxu0 0.0
    %1562 = vmatprep.mubr.f32.mxu0 0.0
    %1563 = vmatmul.mubr.f32.gmra.mrb[0].mxu0 %v816
    %v1564 = vpop.f32.mrb[0].mxu0
    %v1565 = vadd.f32 %v1426, %v1564
    %v1566 = vpop.f32.mrb[0].mxu0
    %1567 = vdwg.mxu0
    %1568 = vmatprep.subr.mxu0 0.0
    %1569 = vmatpush1.msra.mxu0 %v1413
    %1570 = vmatprep.subr.mxu0 0.0
    %1571 = vmatpush1.msra.mxu0 %v1414
    %1572 = vmatprep.subr.mxu0 0.0
    %1573 = vmatpush1.msra.mxu0 %v1415
    %1574 = vmatprep.subr.mxu0 0.0
    %1575 = vmatpush1.msra.mxu0 %v1416
    %1576 = vmatprep.subr.mxu0 0.0
    %1577 = vmatpush1.msra.mxu0 0.0
    %1578 = vmatprep.subr.mxu0 0.0
    %1579 = vmatpush1.msra.mxu0 0.0
    %1580 = vmatprep.subr.mxu0 0.0
    %1581 = vmatpush1.msra.mxu0 0.0
    %1582 = vmatprep.subr.mxu0 0.0
    %1583 = vmatpush1.msra.mxu0 0.0
    %1584 = vmatprep.subr.mxu0 0.0
    %1585 = vmatpush1.msra.mxu0 0.0
    %1586 = vmatprep.subr.mxu0 0.0
    %1587 = vmatpush1.msra.mxu0 0.0
    %1588 = vmatprep.subr.mxu0 0.0
    %1589 = vmatpush1.msra.mxu0 0.0
    %1590 = vmatprep.subr.mxu0 0.0
    %1591 = vmatpush1.msra.mxu0 0.0
    %1592 = vmatprep.subr.mxu0 0.0
    %1593 = vmatpush1.msra.mxu0 0.0
    %1594 = vmatprep.subr.mxu0 0.0
    %1595 = vmatpush1.msra.mxu0 0.0
    %1596 = vmatprep.subr.mxu0 0.0
    %1597 = vmatpush1.msra.mxu0 0.0
    %1598 = vmatprep.subr.mxu0 0.0
    %1599 = vmatpush1.msra.mxu0 0.0
    %1600 = vmatprep.subr.mxu0 0.0
    %1601 = vmatpush1.msra.mxu0 0.0
    %1602 = vmatprep.subr.mxu0 0.0
    %1603 = vmatpush1.msra.mxu0 0.0
    %1604 = vmatprep.subr.mxu0 0.0
    %1605 = vmatpush1.msra.mxu0 0.0
    %1606 = vmatprep.subr.mxu0 0.0
    %1607 = vmatpush1.msra.mxu0 0.0
    %1608 = vmatprep.subr.mxu0 0.0
    %1609 = vmatpush1.msra.mxu0 0.0
    %1610 = vmatprep.subr.mxu0 0.0
    %1611 = vmatpush1.msra.mxu0 0.0
    %1612 = vmatprep.subr.mxu0 0.0
    %1613 = vmatpush1.msra.mxu0 0.0
    %1614 = vmatprep.subr.mxu0 0.0
    %1615 = vmatpush1.msra.mxu0 0.0
    %1616 = vmatprep.subr.mxu0 0.0
    %1617 = vmatpush1.msra.mxu0 0.0
    %1618 = vmatprep.subr.mxu0 0.0
    %1619 = vmatpush1.msra.mxu0 0.0
    %1620 = vmatprep.subr.mxu0 0.0
    %1621 = vmatpush1.msra.mxu0 0.0
    %1622 = vmatprep.subr.mxu0 0.0
    %1623 = vmatpush1.msra.mxu0 0.0
    %1624 = vmatprep.subr.mxu0 0.0
    %1625 = vmatpush1.msra.mxu0 0.0
    %1626 = vmatprep.subr.mxu0 0.0
    %1627 = vmatpush1.msra.mxu0 0.0
    %1628 = vmatprep.subr.mxu0 0.0
    %1629 = vmatpush1.msra.mxu0 0.0
    %1630 = vmatprep.subr.mxu0 0.0
    %1631 = vmatpush1.msra.mxu0 0.0
    %1632 = vmatprep.mubr.f32.mxu0 0.0
    %1633 = vmatmul.mubr.f32.gmra.mrb[0].mxu0 %v916
    %v1634 = vpop.f32.mrb[0].mxu0
    %v1635 = vadd.f32 %v1426, %v1634
    %v1636 = vpop.f32.mrb[0].mxu0
    %1637 = vdwg.mxu0
    %1638 = vmatprep.subr.mxu0 0.0
    %1639 = vmatpush1.msra.mxu0 %v1413
    %1640 = vmatprep.subr.mxu0 0.0
    %1641 = vmatpush1.msra.mxu0 %v1414
    %1642 = vmatprep.subr.mxu0 0.0
    %1643 = vmatpush1.msra.mxu0 %v1415
    %1644 = vmatprep.subr.mxu0 0.0
    %1645 = vmatpush1.msra.mxu0 %v1416
    %1646 = vmatprep.subr.mxu0 0.0
    %1647 = vmatpush1.msra.mxu0 0.0
    %1648 = vmatprep.subr.mxu0 0.0
    %1649 = vmatpush1.msra.mxu0 0.0
    %1650 = vmatprep.subr.mxu0 0.0
    %1651 = vmatpush1.msra.mxu0 0.0
    %1652 = vmatprep.subr.mxu0 0.0
    %1653 = vmatpush1.msra.mxu0 0.0
    %1654 = vmatprep.subr.mxu0 0.0
    %1655 = vmatpush1.msra.mxu0 0.0
    %1656 = vmatprep.subr.mxu0 0.0
    %1657 = vmatpush1.msra.mxu0 0.0
    %1658 = vmatprep.subr.mxu0 0.0
    %1659 = vmatpush1.msra.mxu0 0.0
    %1660 = vmatprep.subr.mxu0 0.0
    %1661 = vmatpush1.msra.mxu0 0.0
    %1662 = vmatprep.subr.mxu0 0.0
    %1663 = vmatpush1.msra.mxu0 0.0
    %1664 = vmatprep.subr.mxu0 0.0
    %1665 = vmatpush1.msra.mxu0 0.0
    %1666 = vmatprep.subr.mxu0 0.0
    %1667 = vmatpush1.msra.mxu0 0.0
    %1668 = vmatprep.subr.mxu0 0.0
    %1669 = vmatpush1.msra.mxu0 0.0
    %1670 = vmatprep.subr.mxu0 0.0
    %1671 = vmatpush1.msra.mxu0 0.0
    %1672 = vmatprep.subr.mxu0 0.0
    %1673 = vmatpush1.msra.mxu0 0.0
    %1674 = vmatprep.subr.mxu0 0.0
    %1675 = vmatpush1.msra.mxu0 0.0
    %1676 = vmatprep.subr.mxu0 0.0
    %1677 = vmatpush1.msra.mxu0 0.0
    %1678 = vmatprep.subr.mxu0 0.0
    %1679 = vmatpush1.msra.mxu0 0.0
    %1680 = vmatprep.subr.mxu0 0.0
    %1681 = vmatpush1.msra.mxu0 0.0
    %1682 = vmatprep.subr.mxu0 0.0
    %1683 = vmatpush1.msra.mxu0 0.0
    %1684 = vmatprep.subr.mxu0 0.0
    %1685 = vmatpush1.msra.mxu0 0.0
    %1686 = vmatprep.subr.mxu0 0.0
    %1687 = vmatpush1.msra.mxu0 0.0
    %1688 = vmatprep.subr.mxu0 0.0
    %1689 = vmatpush1.msra.mxu0 0.0
    %1690 = vmatprep.subr.mxu0 0.0
    %1691 = vmatpush1.msra.mxu0 0.0
    %1692 = vmatprep.subr.mxu0 0.0
    %1693 = vmatpush1.msra.mxu0 0.0
    %1694 = vmatprep.subr.mxu0 0.0
    %1695 = vmatpush1.msra.mxu0 0.0
    %1696 = vmatprep.subr.mxu0 0.0
    %1697 = vmatpush1.msra.mxu0 0.0
    %1698 = vmatprep.subr.mxu0 0.0
    %1699 = vmatpush1.msra.mxu0 0.0
    %1700 = vmatprep.subr.mxu0 0.0
    %1701 = vmatpush1.msra.mxu0 0.0
    %1702 = vmatprep.mubr.f32.mxu0 0.0
    %1703 = vmatmul.mubr.f32.gmra.mrb[0].mxu0 %v1016
    %v1704 = vpop.f32.mrb[0].mxu0
    %v1705 = vadd.f32 %v1426, %v1704
    %v1706 = vpop.f32.mrb[0].mxu0
    %1707 = vdwg.mxu0
    %1708 = vmatprep.subr.mxu0 0.0
    %1709 = vmatpush1.msra.mxu0 %v1413
    %1710 = vmatprep.subr.mxu0 0.0
    %1711 = vmatpush1.msra.mxu0 %v1414
    %1712 = vmatprep.subr.mxu0 0.0
    %1713 = vmatpush1.msra.mxu0 %v1415
    %1714 = vmatprep.subr.mxu0 0.0
    %1715 = vmatpush1.msra.mxu0 %v1416
    %1716 = vmatprep.subr.mxu0 0.0
    %1717 = vmatpush1.msra.mxu0 0.0
    %1718 = vmatprep.subr.mxu0 0.0
    %1719 = vmatpush1.msra.mxu0 0.0
    %1720 = vmatprep.subr.mxu0 0.0
    %1721 = vmatpush1.msra.mxu0 0.0
    %1722 = vmatprep.subr.mxu0 0.0
    %1723 = vmatpush1.msra.mxu0 0.0
    %1724 = vmatprep.subr.mxu0 0.0
    %1725 = vmatpush1.msra.mxu0 0.0
    %1726 = vmatprep.subr.mxu0 0.0
    %1727 = vmatpush1.msra.mxu0 0.0
    %1728 = vmatprep.subr.mxu0 0.0
    %1729 = vmatpush1.msra.mxu0 0.0
    %1730 = vmatprep.subr.mxu0 0.0
    %1731 = vmatpush1.msra.mxu0 0.0
    %1732 = vmatprep.subr.mxu0 0.0
    %1733 = vmatpush1.msra.mxu0 0.0
    %1734 = vmatprep.subr.mxu0 0.0
    %1735 = vmatpush1.msra.mxu0 0.0
    %1736 = vmatprep.subr.mxu0 0.0
    %1737 = vmatpush1.msra.mxu0 0.0
    %1738 = vmatprep.subr.mxu0 0.0
    %1739 = vmatpush1.msra.mxu0 0.0
    %1740 = vmatprep.subr.mxu0 0.0
    %1741 = vmatpush1.msra.mxu0 0.0
    %1742 = vmatprep.subr.mxu0 0.0
    %1743 = vmatpush1.msra.mxu0 0.0
    %1744 = vmatprep.subr.mxu0 0.0
    %1745 = vmatpush1.msra.mxu0 0.0
    %1746 = vmatprep.subr.mxu0 0.0
    %1747 = vmatpush1.msra.mxu0 0.0
    %1748 = vmatprep.subr.mxu0 0.0
    %1749 = vmatpush1.msra.mxu0 0.0
    %1750 = vmatprep.subr.mxu0 0.0
    %1751 = vmatpush1.msra.mxu0 0.0
    %1752 = vmatprep.subr.mxu0 0.0
    %1753 = vmatpush1.msra.mxu0 0.0
    %1754 = vmatprep.subr.mxu0 0.0
    %1755 = vmatpush1.msra.mxu0 0.0
    %1756 = vmatprep.subr.mxu0 0.0
    %1757 = vmatpush1.msra.mxu0 0.0
    %1758 = vmatprep.subr.mxu0 0.0
    %1759 = vmatpush1.msra.mxu0 0.0
    %1760 = vmatprep.subr.mxu0 0.0
    %1761 = vmatpush1.msra.mxu0 0.0
    %1762 = vmatprep.subr.mxu0 0.0
    %1763 = vmatpush1.msra.mxu0 0.0
    %1764 = vmatprep.subr.mxu0 0.0
    %1765 = vmatpush1.msra.mxu0 0.0
    %1766 = vmatprep.subr.mxu0 0.0
    %1767 = vmatpush1.msra.mxu0 0.0
    %1768 = vmatprep.subr.mxu0 0.0
    %1769 = vmatpush1.msra.mxu0 0.0
    %1770 = vmatprep.subr.mxu0 0.0
    %1771 = vmatpush1.msra.mxu0 0.0
    %1772 = vmatprep.mubr.f32.mxu0 0.0
    %1773 = vmatmul.mubr.f32.gmra.mrb[0].mxu0 %v1116
    %v1774 = vpop.f32.mrb[0].mxu0
    %v1775 = vadd.f32 %v1426, %v1774
    %v1776 = vpop.f32.mrb[0].mxu0
    %1777 = vdwg.mxu0
    %1778 = vmatprep.subr.mxu0 0.0
    %1779 = vmatpush1.msra.mxu0 %v1413
    %1780 = vmatprep.subr.mxu0 0.0
    %1781 = vmatpush1.msra.mxu0 %v1414
    %1782 = vmatprep.subr.mxu0 0.0
    %1783 = vmatpush1.msra.mxu0 %v1415
    %1784 = vmatprep.subr.mxu0 0.0
    %1785 = vmatpush1.msra.mxu0 %v1416
    %1786 = vmatprep.subr.mxu0 0.0
    %1787 = vmatpush1.msra.mxu0 0.0
    %1788 = vmatprep.subr.mxu0 0.0
    %1789 = vmatpush1.msra.mxu0 0.0
    %1790 = vmatprep.subr.mxu0 0.0
    %1791 = vmatpush1.msra.mxu0 0.0
    %1792 = vmatprep.subr.mxu0 0.0
    %1793 = vmatpush1.msra.mxu0 0.0
    %1794 = vmatprep.subr.mxu0 0.0
    %1795 = vmatpush1.msra.mxu0 0.0
    %1796 = vmatprep.subr.mxu0 0.0
    %1797 = vmatpush1.msra.mxu0 0.0
    %1798 = vmatprep.subr.mxu0 0.0
    %1799 = vmatpush1.msra.mxu0 0.0
    %1800 = vmatprep.subr.mxu0 0.0
    %1801 = vmatpush1.msra.mxu0 0.0
    %1802 = vmatprep.subr.mxu0 0.0
    %1803 = vmatpush1.msra.mxu0 0.0
    %1804 = vmatprep.subr.mxu0 0.0
    %1805 = vmatpush1.msra.mxu0 0.0
    %1806 = vmatprep.subr.mxu0 0.0
    %1807 = vmatpush1.msra.mxu0 0.0
    %1808 = vmatprep.subr.mxu0 0.0
    %1809 = vmatpush1.msra.mxu0 0.0
    %1810 = vmatprep.subr.mxu0 0.0
    %1811 = vmatpush1.msra.mxu0 0.0
    %1812 = vmatprep.subr.mxu0 0.0
    %1813 = vmatpush1.msra.mxu0 0.0
    %1814 = vmatprep.subr.mxu0 0.0
    %1815 = vmatpush1.msra.mxu0 0.0
    %1816 = vmatprep.subr.mxu0 0.0
    %1817 = vmatpush1.msra.mxu0 0.0
    %1818 = vmatprep.subr.mxu0 0.0
    %1819 = vmatpush1.msra.mxu0 0.0
    %1820 = vmatprep.subr.mxu0 0.0
    %1821 = vmatpush1.msra.mxu0 0.0
    %1822 = vmatprep.subr.mxu0 0.0
    %1823 = vmatpush1.msra.mxu0 0.0
    %1824 = vmatprep.subr.mxu0 0.0
    %1825 = vmatpush1.msra.mxu0 0.0
    %1826 = vmatprep.subr.mxu0 0.0
    %1827 = vmatpush1.msra.mxu0 0.0
    %1828 = vmatprep.subr.mxu0 0.0
    %1829 = vmatpush1.msra.mxu0 0.0
    %1830 = vmatprep.subr.mxu0 0.0
    %1831 = vmatpush1.msra.mxu0 0.0
    %1832 = vmatprep.subr.mxu0 0.0
    %1833 = vmatpush1.msra.mxu0 0.0
    %1834 = vmatprep.subr.mxu0 0.0
    %1835 = vmatpush1.msra.mxu0 0.0
    %1836 = vmatprep.subr.mxu0 0.0
    %1837 = vmatpush1.msra.mxu0 0.0
    %1838 = vmatprep.subr.mxu0 0.0
    %1839 = vmatpush1.msra.mxu0 0.0
    %1840 = vmatprep.subr.mxu0 0.0
    %1841 = vmatpush1.msra.mxu0 0.0
    %1842 = vmatprep.mubr.f32.mxu0 0.0
    %1843 = vmatmul.mubr.f32.gmra.mrb[0].mxu0 %v1216
    %v1844 = vpop.f32.mrb[0].mxu0
    %v1845 = vadd.f32 %v1426, %v1844
    %v1846 = vpop.f32.mrb[0].mxu0
    %1847 = vdwg.mxu0
    %1848 = vmatprep.subr.mxu0 0.0
    %1849 = vmatpush1.msra.mxu0 %v1413
    %1850 = vmatprep.subr.mxu0 0.0
    %1851 = vmatpush1.msra.mxu0 %v1414
    %1852 = vmatprep.subr.mxu0 0.0
    %1853 = vmatpush1.msra.mxu0 %v1415
    %1854 = vmatprep.subr.mxu0 0.0
    %1855 = vmatpush1.msra.mxu0 %v1416
    %1856 = vmatprep.subr.mxu0 0.0
    %1857 = vmatpush1.msra.mxu0 0.0
    %1858 = vmatprep.subr.mxu0 0.0
    %1859 = vmatpush1.msra.mxu0 0.0
    %1860 = vmatprep.subr.mxu0 0.0
    %1861 = vmatpush1.msra.mxu0 0.0
    %1862 = vmatprep.subr.mxu0 0.0
    %1863 = vmatpush1.msra.mxu0 0.0
    %1864 = vmatprep.subr.mxu0 0.0
    %1865 = vmatpush1.msra.mxu0 0.0
    %1866 = vmatprep.subr.mxu0 0.0
    %1867 = vmatpush1.msra.mxu0 0.0
    %1868 = vmatprep.subr.mxu0 0.0
    %1869 = vmatpush1.msra.mxu0 0.0
    %1870 = vmatprep.subr.mxu0 0.0
    %1871 = vmatpush1.msra.mxu0 0.0
    %1872 = vmatprep.subr.mxu0 0.0
    %1873 = vmatpush1.msra.mxu0 0.0
    %1874 = vmatprep.subr.mxu0 0.0
    %1875 = vmatpush1.msra.mxu0 0.0
    %1876 = vmatprep.subr.mxu0 0.0
    %1877 = vmatpush1.msra.mxu0 0.0
    %1878 = vmatprep.subr.mxu0 0.0
    %1879 = vmatpush1.msra.mxu0 0.0
    %1880 = vmatprep.subr.mxu0 0.0
    %1881 = vmatpush1.msra.mxu0 0.0
    %1882 = vmatprep.subr.mxu0 0.0
    %1883 = vmatpush1.msra.mxu0 0.0
    %1884 = vmatprep.subr.mxu0 0.0
    %1885 = vmatpush1.msra.mxu0 0.0
    %1886 = vmatprep.subr.mxu0 0.0
    %1887 = vmatpush1.msra.mxu0 0.0
    %1888 = vmatprep.subr.mxu0 0.0
    %1889 = vmatpush1.msra.mxu0 0.0
    %1890 = vmatprep.subr.mxu0 0.0
    %1891 = vmatpush1.msra.mxu0 0.0
    %1892 = vmatprep.subr.mxu0 0.0
    %1893 = vmatpush1.msra.mxu0 0.0
    %1894 = vmatprep.subr.mxu0 0.0
    %1895 = vmatpush1.msra.mxu0 0.0
    %1896 = vmatprep.subr.mxu0 0.0
    %1897 = vmatpush1.msra.mxu0 0.0
    %1898 = vmatprep.subr.mxu0 0.0
    %1899 = vmatpush1.msra.mxu0 0.0
    %1900 = vmatprep.subr.mxu0 0.0
    %1901 = vmatpush1.msra.mxu0 0.0
    %1902 = vmatprep.subr.mxu0 0.0
    %1903 = vmatpush1.msra.mxu0 0.0
    %1904 = vmatprep.subr.mxu0 0.0
    %1905 = vmatpush1.msra.mxu0 0.0
    %1906 = vmatprep.subr.mxu0 0.0
    %1907 = vmatpush1.msra.mxu0 0.0
    %1908 = vmatprep.subr.mxu0 0.0
    %1909 = vmatpush1.msra.mxu0 0.0
    %1910 = vmatprep.subr.mxu0 0.0
    %1911 = vmatpush1.msra.mxu0 0.0
    %1912 = vmatprep.mubr.f32.mxu0 0.0
    %1913 = vmatmul.mubr.f32.gmra.mrb[0].mxu0 %v1316
    %v1914 = vpop.f32.mrb[0].mxu0
    %v1915 = vadd.f32 %v1426, %v1914
    %v1916 = vpop.f32.mrb[0].mxu0
    %1917 = vdwg.mxu0
    %1919 = vrot.lane.b32.xlu0 %v1412, 32
    %v1920 = vpop.permute.xlu0 %1919
    %v1921 = vsel %vm711, %v1920, 0
    %1923 = vmatprep.subr.mxu0 0.0
    %1924 = vmatpush1.msra.mxu0 %v1413
    %1925 = vmatprep.subr.mxu0 0.0
    %1926 = vmatpush1.msra.mxu0 %v1414
    %1927 = vmatprep.subr.mxu0 0.0
    %1928 = vmatpush1.msra.mxu0 %v1415
    %1929 = vmatprep.subr.mxu0 0.0
    %1930 = vmatpush1.msra.mxu0 %v1416
    %1931 = vmatprep.subr.mxu0 0.0
    %1932 = vmatpush1.msra.mxu0 0.0
    %1933 = vmatprep.subr.mxu0 0.0
    %1934 = vmatpush1.msra.mxu0 0.0
    %1935 = vmatprep.subr.mxu0 0.0
    %1936 = vmatpush1.msra.mxu0 0.0
    %1937 = vmatprep.subr.mxu0 0.0
    %1938 = vmatpush1.msra.mxu0 0.0
    %1939 = vmatprep.subr.mxu0 0.0
    %1940 = vmatpush1.msra.mxu0 0.0
    %1941 = vmatprep.subr.mxu0 0.0
    %1942 = vmatpush1.msra.mxu0 0.0
    %1943 = vmatprep.subr.mxu0 0.0
    %1944 = vmatpush1.msra.mxu0 0.0
    %1945 = vmatprep.subr.mxu0 0.0
    %1946 = vmatpush1.msra.mxu0 0.0
    %1947 = vmatprep.subr.mxu0 0.0
    %1948 = vmatpush1.msra.mxu0 0.0
    %1949 = vmatprep.subr.mxu0 0.0
    %1950 = vmatpush1.msra.mxu0 0.0
    %1951 = vmatprep.subr.mxu0 0.0
    %1952 = vmatpush1.msra.mxu0 0.0
    %1953 = vmatprep.subr.mxu0 0.0
    %1954 = vmatpush1.msra.mxu0 0.0
    %1955 = vmatprep.subr.mxu0 0.0
    %1956 = vmatpush1.msra.mxu0 0.0
    %1957 = vmatprep.subr.mxu0 0.0
    %1958 = vmatpush1.msra.mxu0 0.0
    %1959 = vmatprep.subr.mxu0 0.0
    %1960 = vmatpush1.msra.mxu0 0.0
    %1961 = vmatprep.subr.mxu0 0.0
    %1962 = vmatpush1.msra.mxu0 0.0
    %1963 = vmatprep.subr.mxu0 0.0
    %1964 = vmatpush1.msra.mxu0 0.0
    %1965 = vmatprep.subr.mxu0 0.0
    %1966 = vmatpush1.msra.mxu0 0.0
    %1967 = vmatprep.subr.mxu0 0.0
    %1968 = vmatpush1.msra.mxu0 0.0
    %1969 = vmatprep.subr.mxu0 0.0
    %1970 = vmatpush1.msra.mxu0 0.0
    %1971 = vmatprep.subr.mxu0 0.0
    %1972 = vmatpush1.msra.mxu0 0.0
    %1973 = vmatprep.subr.mxu0 0.0
    %1974 = vmatpush1.msra.mxu0 0.0
    %1975 = vmatprep.subr.mxu0 0.0
    %1976 = vmatpush1.msra.mxu0 0.0
    %1977 = vmatprep.subr.mxu0 0.0
    %1978 = vmatpush1.msra.mxu0 0.0
    %1979 = vmatprep.subr.mxu0 0.0
    %1980 = vmatpush1.msra.mxu0 0.0
    %1981 = vmatprep.subr.mxu0 0.0
    %1982 = vmatpush1.msra.mxu0 0.0
    %1983 = vmatprep.subr.mxu0 0.0
    %1984 = vmatpush1.msra.mxu0 0.0
    %1985 = vmatprep.subr.mxu0 0.0
    %1986 = vmatpush1.msra.mxu0 0.0
    %1987 = vmatprep.mubr.f32.mxu0 0.0
    %1988 = vmatmul.mubr.f32.gmra.mrb[0].mxu0 %v1921
    %v1989 = vpop.f32.mrb[0].mxu0
    %v1990 = vadd.f32 %v1426, %v1989
    %v1991 = vpop.f32.mrb[0].mxu0
    %1992 = vdwg.mxu0
    %v1993 = vxor.u32 %v1495, 2147483648
    %v1994 = vmul.f32 %v1993, 1.442695
    %v1995 = vpow.pop %v1994
    %v1996 = vadd.f32 %v1995, 1.0
    %v1997 = vrcp.pop %v1996
    %v1998 = vmul.f32 1.0, %v1997
    %v1999 = vtanh.pop %v1495
    %2001 = vrot.lane.b32.xlu0 %v1999, 64
    %v2002 = vpop.permute.xlu0 %2001
    %v2004 = vmul.f32 %v1998, %v2002
    %v2005 = vtanh.pop %v2004
    %2007 = vrot.lane.b32.xlu0 %v2005, 96
    %v2008 = vpop.permute.xlu0 %2007
    %v2010 = vmul.f32 %v1998, %v2008
    %2012 = vrot.lane.b32.xlu0 %v2010, 32
    %v2013 = vpop.permute.xlu0 %2012
    %v2014 = vsel %vm711, %v2013, 0
    %2016 = vmatprep.subr.mxu0 0.0
    %2017 = vmatpush1.msra.mxu0 %v1417
    %2018 = vmatprep.subr.mxu0 0.0
    %2019 = vmatpush1.msra.mxu0 %v1418
    %2020 = vmatprep.subr.mxu0 0.0
    %2021 = vmatpush1.msra.mxu0 %v1419
    %2022 = vmatprep.subr.mxu0 0.0
    %2023 = vmatpush1.msra.mxu0 %v1420
    %2024 = vmatprep.subr.mxu0 0.0
    %2025 = vmatpush1.msra.mxu0 0.0
    %2026 = vmatprep.subr.mxu0 0.0
    %2027 = vmatpush1.msra.mxu0 0.0
    %2028 = vmatprep.subr.mxu0 0.0
    %2029 = vmatpush1.msra.mxu0 0.0
    %2030 = vmatprep.subr.mxu0 0.0
    %2031 = vmatpush1.msra.mxu0 0.0
    %2032 = vmatprep.subr.mxu0 0.0
    %2033 = vmatpush1.msra.mxu0 0.0
    %2034 = vmatprep.subr.mxu0 0.0
    %2035 = vmatpush1.msra.mxu0 0.0
    %2036 = vmatprep.subr.mxu0 0.0
    %2037 = vmatpush1.msra.mxu0 0.0
    %2038 = vmatprep.subr.mxu0 0.0
    %2039 = vmatpush1.msra.mxu0 0.0
    %2040 = vmatprep.subr.mxu0 0.0
    %2041 = vmatpush1.msra.mxu0 0.0
    %2042 = vmatprep.subr.mxu0 0.0
    %2043 = vmatpush1.msra.mxu0 0.0
    %2044 = vmatprep.subr.mxu0 0.0
    %2045 = vmatpush1.msra.mxu0 0.0
    %2046 = vmatprep.subr.mxu0 0.0
    %2047 = vmatpush1.msra.mxu0 0.0
    %2048 = vmatprep.subr.mxu0 0.0
    %2049 = vmatpush1.msra.mxu0 0.0
    %2050 = vmatprep.subr.mxu0 0.0
    %2051 = vmatpush1.msra.mxu0 0.0
    %2052 = vmatprep.subr.mxu0 0.0
    %2053 = vmatpush1.msra.mxu0 0.0
    %2054 = vmatprep.subr.mxu0 0.0
    %2055 = vmatpush1.msra.mxu0 0.0
    %2056 = vmatprep.subr.mxu0 0.0
    %2057 = vmatpush1.msra.mxu0 0.0
    %2058 = vmatprep.subr.mxu0 0.0
    %2059 = vmatpush1.msra.mxu0 0.0
    %2060 = vmatprep.subr.mxu0 0.0
    %2061 = vmatpush1.msra.mxu0 0.0
    %2062 = vmatprep.subr.mxu0 0.0
    %2063 = vmatpush1.msra.mxu0 0.0
    %2064 = vmatprep.subr.mxu0 0.0
    %2065 = vmatpush1.msra.mxu0 0.0
    %2066 = vmatprep.subr.mxu0 0.0
    %2067 = vmatpush1.msra.mxu0 0.0
    %2068 = vmatprep.subr.mxu0 0.0
    %2069 = vmatpush1.msra.mxu0 0.0
    %2070 = vmatprep.subr.mxu0 0.0
    %2071 = vmatpush1.msra.mxu0 0.0
    %2072 = vmatprep.subr.mxu0 0.0
    %2073 = vmatpush1.msra.mxu0 0.0
    %2074 = vmatprep.subr.mxu0 0.0
    %2075 = vmatpush1.msra.mxu0 0.0
    %2076 = vmatprep.subr.mxu0 0.0
    %2077 = vmatpush1.msra.mxu0 0.0
    %2078 = vmatprep.subr.mxu0 0.0
    %2079 = vmatpush1.msra.mxu0 0.0
    %2080 = vmatprep.mubr.f32.mxu0 0.0
    %2081 = vmatmul.mubr.f32.gmra.mrb[0].mxu0 %v2014
    %v2082 = vpop.f32.mrb[0].mxu0
    %v2083 = vadd.f32 0.0, %v2082
    %v2084 = vpop.f32.mrb[0].mxu0
    %2085 = vdwg.mxu0
    %v2086 = vadd.f32 %v1565, %v2083
    %v2087 = vxor.u32 %v2086, 2147483648
    %v2088 = vmul.f32 %v2087, 1.442695
    %v2089 = vpow.pop %v2088
    %v2090 = vadd.f32 %v2089, 1.0
    %v2091 = vrcp.pop %v2090
    %v2092 = vmul.f32 1.0, %v2091
    %v2093 = vtanh.pop %v2086
    %2095 = vrot.lane.b32.xlu0 %v2004, 32
    %v2096 = vpop.permute.xlu0 %2095
    %v2098 = vmul.f32 %v2092, %v2096
    %2100 = vrot.lane.b32.xlu0 %v2093, 64
    %v2101 = vpop.permute.xlu0 %2100
    %v2103 = vmul.f32 %v2092, %v2101
    %2105 = vrot.lane.b32.xlu0 %v2103, 32
    %v2106 = vpop.permute.xlu0 %2105
    %v2108 = vadd.f32 %v2098, %v2106
    %v2109 = vtanh.pop %v2108
    %2111 = vrot.lane.b32.xlu0 %v2109, 64
    %v2112 = vpop.permute.xlu0 %2111
    %v2114 = vmul.f32 %v2092, %v2112
    %2116 = vrot.lane.b32.xlu0 %v2114, 32
    %v2117 = vpop.permute.xlu0 %2116
    %v2118 = vsel %vm711, %v2117, 0
    %2120 = vmatprep.subr.mxu0 0.0
    %2121 = vmatpush1.msra.mxu0 %v1417
    %2122 = vmatprep.subr.mxu0 0.0
    %2123 = vmatpush1.msra.mxu0 %v1418
    %2124 = vmatprep.subr.mxu0 0.0
    %2125 = vmatpush1.msra.mxu0 %v1419
    %2126 = vmatprep.subr.mxu0 0.0
    %2127 = vmatpush1.msra.mxu0 %v1420
    %2128 = vmatprep.subr.mxu0 0.0
    %2129 = vmatpush1.msra.mxu0 0.0
    %2130 = vmatprep.subr.mxu0 0.0
    %2131 = vmatpush1.msra.mxu0 0.0
    %2132 = vmatprep.subr.mxu0 0.0
    %2133 = vmatpush1.msra.mxu0 0.0
    %2134 = vmatprep.subr.mxu0 0.0
    %2135 = vmatpush1.msra.mxu0 0.0
    %2136 = vmatprep.subr.mxu0 0.0
    %2137 = vmatpush1.msra.mxu0 0.0
    %2138 = vmatprep.subr.mxu0 0.0
    %2139 = vmatpush1.msra.mxu0 0.0
    %2140 = vmatprep.subr.mxu0 0.0
    %2141 = vmatpush1.msra.mxu0 0.0
    %2142 = vmatprep.subr.mxu0 0.0
    %2143 = vmatpush1.msra.mxu0 0.0
    %2144 = vmatprep.subr.mxu0 0.0
    %2145 = vmatpush1.msra.mxu0 0.0
    %2146 = vmatprep.subr.mxu0 0.0
    %2147 = vmatpush1.msra.mxu0 0.0
    %2148 = vmatprep.subr.mxu0 0.0
    %2149 = vmatpush1.msra.mxu0 0.0
    %2150 = vmatprep.subr.mxu0 0.0
    %2151 = vmatpush1.msra.mxu0 0.0
    %2152 = vmatprep.subr.mxu0 0.0
    %2153 = vmatpush1.msra.mxu0 0.0
    %2154 = vmatprep.subr.mxu0 0.0
    %2155 = vmatpush1.msra.mxu0 0.0
    %2156 = vmatprep.subr.mxu0 0.0
    %2157 = vmatpush1.msra.mxu0 0.0
    %2158 = vmatprep.subr.mxu0 0.0
    %2159 = vmatpush1.msra.mxu0 0.0
    %2160 = vmatprep.subr.mxu0 0.0
    %2161 = vmatpush1.msra.mxu0 0.0
    %2162 = vmatprep.subr.mxu0 0.0
    %2163 = vmatpush1.msra.mxu0 0.0
    %2164 = vmatprep.subr.mxu0 0.0
    %2165 = vmatpush1.msra.mxu0 0.0
    %2166 = vmatprep.subr.mxu0 0.0
    %2167 = vmatpush1.msra.mxu0 0.0
    %2168 = vmatprep.subr.mxu0 0.0
    %2169 = vmatpush1.msra.mxu0 0.0
    %2170 = vmatprep.subr.mxu0 0.0
    %2171 = vmatpush1.msra.mxu0 0.0
    %2172 = vmatprep.subr.mxu0 0.0
    %2173 = vmatpush1.msra.mxu0 0.0
    %2174 = vmatprep.subr.mxu0 0.0
    %2175 = vmatpush1.msra.mxu0 0.0
    %2176 = vmatprep.subr.mxu0 0.0
    %2177 = vmatpush1.msra.mxu0 0.0
    %2178 = vmatprep.subr.mxu0 0.0
    %2179 = vmatpush1.msra.mxu0 0.0
    %2180 = vmatprep.subr.mxu0 0.0
    %2181 = vmatpush1.msra.mxu0 0.0
    %2182 = vmatprep.subr.mxu0 0.0
    %2183 = vmatpush1.msra.mxu0 0.0
    %2184 = vmatprep.mubr.f32.mxu0 0.0
    %2185 = vmatmul.mubr.f32.gmra.mrb[0].mxu0 %v2118
    %v2186 = vpop.f32.mrb[0].mxu0
    %v2187 = vadd.f32 0.0, %v2186
    %v2188 = vpop.f32.mrb[0].mxu0
    %2189 = vdwg.mxu0
    %v2190 = vadd.f32 %v1635, %v2187
    %v2191 = vxor.u32 %v2190, 2147483648
    %v2192 = vmul.f32 %v2191, 1.442695
    %v2193 = vpow.pop %v2192
    %v2194 = vadd.f32 %v2193, 1.0
    %v2195 = vrcp.pop %v2194
    %v2196 = vmul.f32 1.0, %v2195
    %v2197 = vtanh.pop %v2190
    %v2198 = vmul.f32 %v2196, %v2108
    %2200 = vrot.lane.b32.xlu0 %v2197, 64
    %v2201 = vpop.permute.xlu0 %2200
    %v2203 = vmul.f32 %v2196, %v2201
    %2205 = vrot.lane.b32.xlu0 %v2203, 32
    %v2206 = vpop.permute.xlu0 %2205
    %v2208 = vadd.f32 %v2198, %v2206
    %v2209 = vtanh.pop %v2208
    %2211 = vrot.lane.b32.xlu0 %v2209, 64
    %v2212 = vpop.permute.xlu0 %2211
    %v2214 = vmul.f32 %v2196, %v2212
    %2216 = vrot.lane.b32.xlu0 %v2214, 32
    %v2217 = vpop.permute.xlu0 %2216
    %v2218 = vsel %vm711, %v2217, 0
    %2220 = vmatprep.subr.mxu0 0.0
    %2221 = vmatpush1.msra.mxu0 %v1417
    %2222 = vmatprep.subr.mxu0 0.0
    %2223 = vmatpush1.msra.mxu0 %v1418
    %2224 = vmatprep.subr.mxu0 0.0
    %2225 = vmatpush1.msra.mxu0 %v1419
    %2226 = vmatprep.subr.mxu0 0.0
    %2227 = vmatpush1.msra.mxu0 %v1420
    %2228 = vmatprep.subr.mxu0 0.0
    %2229 = vmatpush1.msra.mxu0 0.0
    %2230 = vmatprep.subr.mxu0 0.0
    %2231 = vmatpush1.msra.mxu0 0.0
    %2232 = vmatprep.subr.mxu0 0.0
    %2233 = vmatpush1.msra.mxu0 0.0
    %2234 = vmatprep.subr.mxu0 0.0
    %2235 = vmatpush1.msra.mxu0 0.0
    %2236 = vmatprep.subr.mxu0 0.0
    %2237 = vmatpush1.msra.mxu0 0.0
    %2238 = vmatprep.subr.mxu0 0.0
    %2239 = vmatpush1.msra.mxu0 0.0
    %2240 = vmatprep.subr.mxu0 0.0
    %2241 = vmatpush1.msra.mxu0 0.0
    %2242 = vmatprep.subr.mxu0 0.0
    %2243 = vmatpush1.msra.mxu0 0.0
    %2244 = vmatprep.subr.mxu0 0.0
    %2245 = vmatpush1.msra.mxu0 0.0
    %2246 = vmatprep.subr.mxu0 0.0
    %2247 = vmatpush1.msra.mxu0 0.0
    %2248 = vmatprep.subr.mxu0 0.0
    %2249 = vmatpush1.msra.mxu0 0.0
    %2250 = vmatprep.subr.mxu0 0.0
    %2251 = vmatpush1.msra.mxu0 0.0
    %2252 = vmatprep.subr.mxu0 0.0
    %2253 = vmatpush1.msra.mxu0 0.0
    %2254 = vmatprep.subr.mxu0 0.0
    %2255 = vmatpush1.msra.mxu0 0.0
    %2256 = vmatprep.subr.mxu0 0.0
    %2257 = vmatpush1.msra.mxu0 0.0
    %2258 = vmatprep.subr.mxu0 0.0
    %2259 = vmatpush1.msra.mxu0 0.0
    %2260 = vmatprep.subr.mxu0 0.0
    %2261 = vmatpush1.msra.mxu0 0.0
    %2262 = vmatprep.subr.mxu0 0.0
    %2263 = vmatpush1.msra.mxu0 0.0
    %2264 = vmatprep.subr.mxu0 0.0
    %2265 = vmatpush1.msra.mxu0 0.0
    %2266 = vmatprep.subr.mxu0 0.0
    %2267 = vmatpush1.msra.mxu0 0.0
    %2268 = vmatprep.subr.mxu0 0.0
    %2269 = vmatpush1.msra.mxu0 0.0
    %2270 = vmatprep.subr.mxu0 0.0
    %2271 = vmatpush1.msra.mxu0 0.0
    %2272 = vmatprep.subr.mxu0 0.0
    %2273 = vmatpush1.msra.mxu0 0.0
    %2274 = vmatprep.subr.mxu0 0.0
    %2275 = vmatpush1.msra.mxu0 0.0
    %2276 = vmatprep.subr.mxu0 0.0
    %2277 = vmatpush1.msra.mxu0 0.0
    %2278 = vmatprep.subr.mxu0 0.0
    %2279 = vmatpush1.msra.mxu0 0.0
    %2280 = vmatprep.subr.mxu0 0.0
    %2281 = vmatpush1.msra.mxu0 0.0
    %2282 = vmatprep.subr.mxu0 0.0
    %2283 = vmatpush1.msra.mxu0 0.0
    %2284 = vmatprep.mubr.f32.mxu0 0.0
    %2285 = vmatmul.mubr.f32.gmra.mrb[0].mxu0 %v2218
    %v2286 = vpop.f32.mrb[0].mxu0
    %v2287 = vadd.f32 0.0, %v2286
    %v2288 = vpop.f32.mrb[0].mxu0
    %2289 = vdwg.mxu0
    %v2290 = vadd.f32 %v1705, %v2287
    %v2291 = vxor.u32 %v2290, 2147483648
    %v2292 = vmul.f32 %v2291, 1.442695
    %v2293 = vpow.pop %v2292
    %v2294 = vadd.f32 %v2293, 1.0
    %v2295 = vrcp.pop %v2294
    %v2296 = vmul.f32 1.0, %v2295
    %v2297 = vtanh.pop %v2290
    %v2298 = vmul.f32 %v2296, %v2208
    %2300 = vrot.lane.b32.xlu0 %v2297, 64
    %v2301 = vpop.permute.xlu0 %2300
    %v2303 = vmul.f32 %v2296, %v2301
    %2305 = vrot.lane.b32.xlu0 %v2303, 32
    %v2306 = vpop.permute.xlu0 %2305
    %v2308 = vadd.f32 %v2298, %v2306
    %v2309 = vtanh.pop %v2308
    %2311 = vrot.lane.b32.xlu0 %v2309, 64
    %v2312 = vpop.permute.xlu0 %2311
    %v2314 = vmul.f32 %v2296, %v2312
    %2316 = vrot.lane.b32.xlu0 %v2314, 32
    %v2317 = vpop.permute.xlu0 %2316
    %v2318 = vsel %vm711, %v2317, 0
    %2320 = vmatprep.subr.mxu0 0.0
    %2321 = vmatpush1.msra.mxu0 %v1417
    %2322 = vmatprep.subr.mxu0 0.0
    %2323 = vmatpush1.msra.mxu0 %v1418
    %2324 = vmatprep.subr.mxu0 0.0
    %2325 = vmatpush1.msra.mxu0 %v1419
    %2326 = vmatprep.subr.mxu0 0.0
    %2327 = vmatpush1.msra.mxu0 %v1420
    %2328 = vmatprep.subr.mxu0 0.0
    %2329 = vmatpush1.msra.mxu0 0.0
    %2330 = vmatprep.subr.mxu0 0.0
    %2331 = vmatpush1.msra.mxu0 0.0
    %2332 = vmatprep.subr.mxu0 0.0
    %2333 = vmatpush1.msra.mxu0 0.0
    %2334 = vmatprep.subr.mxu0 0.0
    %2335 = vmatpush1.msra.mxu0 0.0
    %2336 = vmatprep.subr.mxu0 0.0
    %2337 = vmatpush1.msra.mxu0 0.0
    %2338 = vmatprep.subr.mxu0 0.0
    %2339 = vmatpush1.msra.mxu0 0.0
    %2340 = vmatprep.subr.mxu0 0.0
    %2341 = vmatpush1.msra.mxu0 0.0
    %2342 = vmatprep.subr.mxu0 0.0
    %2343 = vmatpush1.msra.mxu0 0.0
    %2344 = vmatprep.subr.mxu0 0.0
    %2345 = vmatpush1.msra.mxu0 0.0
    %2346 = vmatprep.subr.mxu0 0.0
    %2347 = vmatpush1.msra.mxu0 0.0
    %2348 = vmatprep.subr.mxu0 0.0
    %2349 = vmatpush1.msra.mxu0 0.0
    %2350 = vmatprep.subr.mxu0 0.0
    %2351 = vmatpush1.msra.mxu0 0.0
    %2352 = vmatprep.subr.mxu0 0.0
    %2353 = vmatpush1.msra.mxu0 0.0
    %2354 = vmatprep.subr.mxu0 0.0
    %2355 = vmatpush1.msra.mxu0 0.0
    %2356 = vmatprep.subr.mxu0 0.0
    %2357 = vmatpush1.msra.mxu0 0.0
    %2358 = vmatprep.subr.mxu0 0.0
    %2359 = vmatpush1.msra.mxu0 0.0
    %2360 = vmatprep.subr.mxu0 0.0
    %2361 = vmatpush1.msra.mxu0 0.0
    %2362 = vmatprep.subr.mxu0 0.0
    %2363 = vmatpush1.msra.mxu0 0.0
    %2364 = vmatprep.subr.mxu0 0.0
    %2365 = vmatpush1.msra.mxu0 0.0
    %2366 = vmatprep.subr.mxu0 0.0
    %2367 = vmatpush1.msra.mxu0 0.0
    %2368 = vmatprep.subr.mxu0 0.0
    %2369 = vmatpush1.msra.mxu0 0.0
    %2370 = vmatprep.subr.mxu0 0.0
    %2371 = vmatpush1.msra.mxu0 0.0
    %2372 = vmatprep.subr.mxu0 0.0
    %2373 = vmatpush1.msra.mxu0 0.0
    %2374 = vmatprep.subr.mxu0 0.0
    %2375 = vmatpush1.msra.mxu0 0.0
    %2376 = vmatprep.subr.mxu0 0.0
    %2377 = vmatpush1.msra.mxu0 0.0
    %2378 = vmatprep.subr.mxu0 0.0
    %2379 = vmatpush1.msra.mxu0 0.0
    %2380 = vmatprep.subr.mxu0 0.0
    %2381 = vmatpush1.msra.mxu0 0.0
    %2382 = vmatprep.subr.mxu0 0.0
    %2383 = vmatpush1.msra.mxu0 0.0
    %2384 = vmatprep.mubr.f32.mxu0 0.0
    %2385 = vmatmul.mubr.f32.gmra.mrb[0].mxu0 %v2318
    %v2386 = vpop.f32.mrb[0].mxu0
    %v2387 = vadd.f32 0.0, %v2386
    %v2388 = vpop.f32.mrb[0].mxu0
    %2389 = vdwg.mxu0
    %v2390 = vadd.f32 %v1775, %v2387
    %v2391 = vxor.u32 %v2390, 2147483648
    %v2392 = vmul.f32 %v2391, 1.442695
    %v2393 = vpow.pop %v2392
    %v2394 = vadd.f32 %v2393, 1.0
    %v2395 = vrcp.pop %v2394
    %v2396 = vmul.f32 1.0, %v2395
    %v2397 = vtanh.pop %v2390
    %v2398 = vmul.f32 %v2396, %v2308
    %2400 = vrot.lane.b32.xlu0 %v2397, 64
    %v2401 = vpop.permute.xlu0 %2400
    %v2403 = vmul.f32 %v2396, %v2401
    %2405 = vrot.lane.b32.xlu0 %v2403, 32
    %v2406 = vpop.permute.xlu0 %2405
    %v2408 = vadd.f32 %v2398, %v2406
    %v2409 = vtanh.pop %v2408
    %2411 = vrot.lane.b32.xlu0 %v2409, 64
    %v2412 = vpop.permute.xlu0 %2411
    %v2414 = vmul.f32 %v2396, %v2412
    %2416 = vrot.lane.b32.xlu0 %v2414, 32
    %v2417 = vpop.permute.xlu0 %2416
    %v2418 = vsel %vm711, %v2417, 0
    %2420 = vmatprep.subr.mxu0 0.0
    %2421 = vmatpush1.msra.mxu0 %v1417
    %2422 = vmatprep.subr.mxu0 0.0
    %2423 = vmatpush1.msra.mxu0 %v1418
    %2424 = vmatprep.subr.mxu0 0.0
    %2425 = vmatpush1.msra.mxu0 %v1419
    %2426 = vmatprep.subr.mxu0 0.0
    %2427 = vmatpush1.msra.mxu0 %v1420
    %2428 = vmatprep.subr.mxu0 0.0
    %2429 = vmatpush1.msra.mxu0 0.0
    %2430 = vmatprep.subr.mxu0 0.0
    %2431 = vmatpush1.msra.mxu0 0.0
    %2432 = vmatprep.subr.mxu0 0.0
    %2433 = vmatpush1.msra.mxu0 0.0
    %2434 = vmatprep.subr.mxu0 0.0
    %2435 = vmatpush1.msra.mxu0 0.0
    %2436 = vmatprep.subr.mxu0 0.0
    %2437 = vmatpush1.msra.mxu0 0.0
    %2438 = vmatprep.subr.mxu0 0.0
    %2439 = vmatpush1.msra.mxu0 0.0
    %2440 = vmatprep.subr.mxu0 0.0
    %2441 = vmatpush1.msra.mxu0 0.0
    %2442 = vmatprep.subr.mxu0 0.0
    %2443 = vmatpush1.msra.mxu0 0.0
    %2444 = vmatprep.subr.mxu0 0.0
    %2445 = vmatpush1.msra.mxu0 0.0
    %2446 = vmatprep.subr.mxu0 0.0
    %2447 = vmatpush1.msra.mxu0 0.0
    %2448 = vmatprep.subr.mxu0 0.0
    %2449 = vmatpush1.msra.mxu0 0.0
    %2450 = vmatprep.subr.mxu0 0.0
    %2451 = vmatpush1.msra.mxu0 0.0
    %2452 = vmatprep.subr.mxu0 0.0
    %2453 = vmatpush1.msra.mxu0 0.0
    %2454 = vmatprep.subr.mxu0 0.0
    %2455 = vmatpush1.msra.mxu0 0.0
    %2456 = vmatprep.subr.mxu0 0.0
    %2457 = vmatpush1.msra.mxu0 0.0
    %2458 = vmatprep.subr.mxu0 0.0
    %2459 = vmatpush1.msra.mxu0 0.0
    %2460 = vmatprep.subr.mxu0 0.0
    %2461 = vmatpush1.msra.mxu0 0.0
    %2462 = vmatprep.subr.mxu0 0.0
    %2463 = vmatpush1.msra.mxu0 0.0
    %2464 = vmatprep.subr.mxu0 0.0
    %2465 = vmatpush1.msra.mxu0 0.0
    %2466 = vmatprep.subr.mxu0 0.0
    %2467 = vmatpush1.msra.mxu0 0.0
    %2468 = vmatprep.subr.mxu0 0.0
    %2469 = vmatpush1.msra.mxu0 0.0
    %2470 = vmatprep.subr.mxu0 0.0
    %2471 = vmatpush1.msra.mxu0 0.0
    %2472 = vmatprep.subr.mxu0 0.0
    %2473 = vmatpush1.msra.mxu0 0.0
    %2474 = vmatprep.subr.mxu0 0.0
    %2475 = vmatpush1.msra.mxu0 0.0
    %2476 = vmatprep.subr.mxu0 0.0
    %2477 = vmatpush1.msra.mxu0 0.0
    %2478 = vmatprep.subr.mxu0 0.0
    %2479 = vmatpush1.msra.mxu0 0.0
    %2480 = vmatprep.subr.mxu0 0.0
    %2481 = vmatpush1.msra.mxu0 0.0
    %2482 = vmatprep.subr.mxu0 0.0
    %2483 = vmatpush1.msra.mxu0 0.0
    %2484 = vmatprep.mubr.f32.mxu0 0.0
    %2485 = vmatmul.mubr.f32.gmra.mrb[0].mxu0 %v2418
    %v2486 = vpop.f32.mrb[0].mxu0
    %v2487 = vadd.f32 0.0, %v2486
    %v2488 = vpop.f32.mrb[0].mxu0
    %2489 = vdwg.mxu0
    %v2490 = vadd.f32 %v1845, %v2487
    %v2491 = vxor.u32 %v2490, 2147483648
    %v2492 = vmul.f32 %v2491, 1.442695
    %v2493 = vpow.pop %v2492
    %v2494 = vadd.f32 %v2493, 1.0
    %v2495 = vrcp.pop %v2494
    %v2496 = vmul.f32 1.0, %v2495
    %v2497 = vtanh.pop %v2490
    %v2498 = vmul.f32 %v2496, %v2408
    %2500 = vrot.lane.b32.xlu0 %v2497, 64
    %v2501 = vpop.permute.xlu0 %2500
    %v2503 = vmul.f32 %v2496, %v2501
    %2505 = vrot.lane.b32.xlu0 %v2503, 32
    %v2506 = vpop.permute.xlu0 %2505
    %v2508 = vadd.f32 %v2498, %v2506
    %v2509 = vtanh.pop %v2508
    %2511 = vrot.lane.b32.xlu0 %v2509, 64
    %v2512 = vpop.permute.xlu0 %2511
    %v2514 = vmul.f32 %v2496, %v2512
    %2516 = vrot.lane.b32.xlu0 %v2514, 32
    %v2517 = vpop.permute.xlu0 %2516
    %v2518 = vsel %vm711, %v2517, 0
    %2520 = vmatprep.subr.mxu0 0.0
    %2521 = vmatpush1.msra.mxu0 %v1417
    %2522 = vmatprep.subr.mxu0 0.0
    %2523 = vmatpush1.msra.mxu0 %v1418
    %2524 = vmatprep.subr.mxu0 0.0
    %2525 = vmatpush1.msra.mxu0 %v1419
    %2526 = vmatprep.subr.mxu0 0.0
    %2527 = vmatpush1.msra.mxu0 %v1420
    %2528 = vmatprep.subr.mxu0 0.0
    %2529 = vmatpush1.msra.mxu0 0.0
    %2530 = vmatprep.subr.mxu0 0.0
    %2531 = vmatpush1.msra.mxu0 0.0
    %2532 = vmatprep.subr.mxu0 0.0
    %2533 = vmatpush1.msra.mxu0 0.0
    %2534 = vmatprep.subr.mxu0 0.0
    %2535 = vmatpush1.msra.mxu0 0.0
    %2536 = vmatprep.subr.mxu0 0.0
    %2537 = vmatpush1.msra.mxu0 0.0
    %2538 = vmatprep.subr.mxu0 0.0
    %2539 = vmatpush1.msra.mxu0 0.0
    %2540 = vmatprep.subr.mxu0 0.0
    %2541 = vmatpush1.msra.mxu0 0.0
    %2542 = vmatprep.subr.mxu0 0.0
    %2543 = vmatpush1.msra.mxu0 0.0
    %2544 = vmatprep.subr.mxu0 0.0
    %2545 = vmatpush1.msra.mxu0 0.0
    %2546 = vmatprep.subr.mxu0 0.0
    %2547 = vmatpush1.msra.mxu0 0.0
    %2548 = vmatprep.subr.mxu0 0.0
    %2549 = vmatpush1.msra.mxu0 0.0
    %2550 = vmatprep.subr.mxu0 0.0
    %2551 = vmatpush1.msra.mxu0 0.0
    %2552 = vmatprep.subr.mxu0 0.0
    %2553 = vmatpush1.msra.mxu0 0.0
    %2554 = vmatprep.subr.mxu0 0.0
    %2555 = vmatpush1.msra.mxu0 0.0
    %2556 = vmatprep.subr.mxu0 0.0
    %2557 = vmatpush1.msra.mxu0 0.0
    %2558 = vmatprep.subr.mxu0 0.0
    %2559 = vmatpush1.msra.mxu0 0.0
    %2560 = vmatprep.subr.mxu0 0.0
    %2561 = vmatpush1.msra.mxu0 0.0
    %2562 = vmatprep.subr.mxu0 0.0
    %2563 = vmatpush1.msra.mxu0 0.0
    %2564 = vmatprep.subr.mxu0 0.0
    %2565 = vmatpush1.msra.mxu0 0.0
    %2566 = vmatprep.subr.mxu0 0.0
    %2567 = vmatpush1.msra.mxu0 0.0
    %2568 = vmatprep.subr.mxu0 0.0
    %2569 = vmatpush1.msra.mxu0 0.0
    %2570 = vmatprep.subr.mxu0 0.0
    %2571 = vmatpush1.msra.mxu0 0.0
    %2572 = vmatprep.subr.mxu0 0.0
    %2573 = vmatpush1.msra.mxu0 0.0
    %2574 = vmatprep.subr.mxu0 0.0
    %2575 = vmatpush1.msra.mxu0 0.0
    %2576 = vmatprep.subr.mxu0 0.0
    %2577 = vmatpush1.msra.mxu0 0.0
    %2578 = vmatprep.subr.mxu0 0.0
    %2579 = vmatpush1.msra.mxu0 0.0
    %2580 = vmatprep.subr.mxu0 0.0
    %2581 = vmatpush1.msra.mxu0 0.0
    %2582 = vmatprep.subr.mxu0 0.0
    %2583 = vmatpush1.msra.mxu0 0.0
    %2584 = vmatprep.mubr.f32.mxu0 0.0
    %2585 = vmatmul.mubr.f32.gmra.mrb[0].mxu0 %v2518
    %v2586 = vpop.f32.mrb[0].mxu0
    %v2587 = vadd.f32 0.0, %v2586
    %v2588 = vpop.f32.mrb[0].mxu0
    %2589 = vdwg.mxu0
    %v2590 = vadd.f32 %v1915, %v2587
    %v2591 = vxor.u32 %v2590, 2147483648
    %v2592 = vmul.f32 %v2591, 1.442695
    %v2593 = vpow.pop %v2592
    %v2594 = vadd.f32 %v2593, 1.0
    %v2595 = vrcp.pop %v2594
    %v2596 = vmul.f32 1.0, %v2595
    %v2597 = vtanh.pop %v2590
    %v2598 = vmul.f32 %v2596, %v2508
    %2600 = vrot.lane.b32.xlu0 %v2597, 64
    %v2601 = vpop.permute.xlu0 %2600
    %v2603 = vmul.f32 %v2596, %v2601
    %2605 = vrot.lane.b32.xlu0 %v2603, 32
    %v2606 = vpop.permute.xlu0 %2605
    %v2608 = vadd.f32 %v2598, %v2606
    %v2609 = vtanh.pop %v2608
    %2611 = vrot.lane.b32.xlu0 %v2609, 64
    %v2612 = vpop.permute.xlu0 %2611
    %v2614 = vmul.f32 %v2596, %v2612
    %2616 = vrot.lane.b32.xlu0 %v2614, 32
    %v2617 = vpop.permute.xlu0 %2616
    %v2618 = vsel %vm711, %v2617, 0
    %2620 = vmatprep.subr.mxu0 0.0
    %2621 = vmatpush1.msra.mxu0 %v1417
    %2622 = vmatprep.subr.mxu0 0.0
    %2623 = vmatpush1.msra.mxu0 %v1418
    %2624 = vmatprep.subr.mxu0 0.0
    %2625 = vmatpush1.msra.mxu0 %v1419
    %2626 = vmatprep.subr.mxu0 0.0
    %2627 = vmatpush1.msra.mxu0 %v1420
    %2628 = vmatprep.subr.mxu0 0.0
    %2629 = vmatpush1.msra.mxu0 0.0
    %2630 = vmatprep.subr.mxu0 0.0
    %2631 = vmatpush1.msra.mxu0 0.0
    %2632 = vmatprep.subr.mxu0 0.0
    %2633 = vmatpush1.msra.mxu0 0.0
    %2634 = vmatprep.subr.mxu0 0.0
    %2635 = vmatpush1.msra.mxu0 0.0
    %2636 = vmatprep.subr.mxu0 0.0
    %2637 = vmatpush1.msra.mxu0 0.0
    %2638 = vmatprep.subr.mxu0 0.0
    %2639 = vmatpush1.msra.mxu0 0.0
    %2640 = vmatprep.subr.mxu0 0.0
    %2641 = vmatpush1.msra.mxu0 0.0
    %2642 = vmatprep.subr.mxu0 0.0
    %2643 = vmatpush1.msra.mxu0 0.0
    %2644 = vmatprep.subr.mxu0 0.0
    %2645 = vmatpush1.msra.mxu0 0.0
    %2646 = vmatprep.subr.mxu0 0.0
    %2647 = vmatpush1.msra.mxu0 0.0
    %2648 = vmatprep.subr.mxu0 0.0
    %2649 = vmatpush1.msra.mxu0 0.0
    %2650 = vmatprep.subr.mxu0 0.0
    %2651 = vmatpush1.msra.mxu0 0.0
    %2652 = vmatprep.subr.mxu0 0.0
    %2653 = vmatpush1.msra.mxu0 0.0
    %2654 = vmatprep.subr.mxu0 0.0
    %2655 = vmatpush1.msra.mxu0 0.0
    %2656 = vmatprep.subr.mxu0 0.0
    %2657 = vmatpush1.msra.mxu0 0.0
    %2658 = vmatprep.subr.mxu0 0.0
    %2659 = vmatpush1.msra.mxu0 0.0
    %2660 = vmatprep.subr.mxu0 0.0
    %2661 = vmatpush1.msra.mxu0 0.0
    %2662 = vmatprep.subr.mxu0 0.0
    %2663 = vmatpush1.msra.mxu0 0.0
    %2664 = vmatprep.subr.mxu0 0.0
    %2665 = vmatpush1.msra.mxu0 0.0
    %2666 = vmatprep.subr.mxu0 0.0
    %2667 = vmatpush1.msra.mxu0 0.0
    %2668 = vmatprep.subr.mxu0 0.0
    %2669 = vmatpush1.msra.mxu0 0.0
    %2670 = vmatprep.subr.mxu0 0.0
    %2671 = vmatpush1.msra.mxu0 0.0
    %2672 = vmatprep.subr.mxu0 0.0
    %2673 = vmatpush1.msra.mxu0 0.0
    %2674 = vmatprep.subr.mxu0 0.0
    %2675 = vmatpush1.msra.mxu0 0.0
    %2676 = vmatprep.subr.mxu0 0.0
    %2677 = vmatpush1.msra.mxu0 0.0
    %2678 = vmatprep.subr.mxu0 0.0
    %2679 = vmatpush1.msra.mxu0 0.0
    %2680 = vmatprep.subr.mxu0 0.0
    %2681 = vmatpush1.msra.mxu0 0.0
    %2682 = vmatprep.subr.mxu0 0.0
    %2683 = vmatpush1.msra.mxu0 0.0
    %2684 = vmatprep.mubr.f32.mxu0 0.0
    %2685 = vmatmul.mubr.f32.gmra.mrb[0].mxu0 %v2618
    %v2686 = vpop.f32.mrb[0].mxu0
    %v2687 = vadd.f32 0.0, %v2686
    %v2688 = vpop.f32.mrb[0].mxu0
    %2689 = vdwg.mxu0
    %v2690 = vadd.f32 %v1990, %v2687
    %v2691 = vxor.u32 %v2690, 2147483648
    %v2692 = vmul.f32 %v2691, 1.442695
    %v2693 = vpow.pop %v2692
    %v2694 = vadd.f32 %v2693, 1.0
    %v2695 = vrcp.pop %v2694
    %v2696 = vmul.f32 1.0, %v2695
    %v2697 = vtanh.pop %v2690
    %v2698 = vmul.f32 %v2696, %v2608
    %2700 = vrot.lane.b32.xlu0 %v2697, 64
    %v2701 = vpop.permute.xlu0 %2700
    %v2703 = vmul.f32 %v2696, %v2701
    %2705 = vrot.lane.b32.xlu0 %v2703, 32
    %v2706 = vpop.permute.xlu0 %2705
    %v2708 = vadd.f32 %v2698, %v2706
    %v2709 = vtanh.pop %v2708
    %2711 = vrot.lane.b32.xlu0 %v2709, 64
    %v2712 = vpop.permute.xlu0 %2711
    %v2714 = vmul.f32 %v2696, %v2712
    %v2715 = vld [vmem:[%s7] sm:$0xff]
    %v2716 = vld [vmem:[%s7 + $0x8] sm:$0xff]
    %v2717 = vld [vmem:[%s7 + $0x10] sm:$0xff]
    %v2718 = vld [vmem:[%s7 + $0x18] sm:$0xff]
    %v2719 = vld [vmem:[#allocation5] sm:$0x1]
    %v2721 = vlaneseq
    %v2722 = vshrl.u32 %v2721, 7
    %v2723 = vsub.s32 0, %v2722
    %v2724 = vrot.slane %v2719, %v2723
    %2727 = vrot.lane.b32.xlu0 %v2714, 32
    %v2728 = vpop.permute.xlu0 %2727
    %v2729 = vsel %vm711, %v2728, 0
    %2731 = vmatprep.subr.mxu0 0.0
    %2732 = vmatpush1.msra.mxu0 %v2715
    %2733 = vmatprep.subr.mxu0 0.0
    %2734 = vmatpush1.msra.mxu0 %v2716
    %2735 = vmatprep.subr.mxu0 0.0
    %2736 = vmatpush1.msra.mxu0 %v2717
    %2737 = vmatprep.subr.mxu0 0.0
    %2738 = vmatpush1.msra.mxu0 %v2718
    %2739 = vmatprep.subr.mxu0 0.0
    %2740 = vmatpush1.msra.mxu0 0.0
    %2741 = vmatprep.subr.mxu0 0.0
    %2742 = vmatpush1.msra.mxu0 0.0
    %2743 = vmatprep.subr.mxu0 0.0
    %2744 = vmatpush1.msra.mxu0 0.0
    %2745 = vmatprep.subr.mxu0 0.0
    %2746 = vmatpush1.msra.mxu0 0.0
    %2747 = vmatprep.subr.mxu0 0.0
    %2748 = vmatpush1.msra.mxu0 0.0
    %2749 = vmatprep.subr.mxu0 0.0
    %2750 = vmatpush1.msra.mxu0 0.0
    %2751 = vmatprep.subr.mxu0 0.0
    %2752 = vmatpush1.msra.mxu0 0.0
    %2753 = vmatprep.subr.mxu0 0.0
    %2754 = vmatpush1.msra.mxu0 0.0
    %2755 = vmatprep.subr.mxu0 0.0
    %2756 = vmatpush1.msra.mxu0 0.0
    %2757 = vmatprep.subr.mxu0 0.0
    %2758 = vmatpush1.msra.mxu0 0.0
    %2759 = vmatprep.subr.mxu0 0.0
    %2760 = vmatpush1.msra.mxu0 0.0
    %2761 = vmatprep.subr.mxu0 0.0
    %2762 = vmatpush1.msra.mxu0 0.0
    %2763 = vmatprep.subr.mxu0 0.0
    %2764 = vmatpush1.msra.mxu0 0.0
    %2765 = vmatprep.subr.mxu0 0.0
    %2766 = vmatpush1.msra.mxu0 0.0
    %2767 = vmatprep.subr.mxu0 0.0
    %2768 = vmatpush1.msra.mxu0 0.0
    %2769 = vmatprep.subr.mxu0 0.0
    %2770 = vmatpush1.msra.mxu0 0.0
    %2771 = vmatprep.subr.mxu0 0.0
    %2772 = vmatpush1.msra.mxu0 0.0
    %2773 = vmatprep.subr.mxu0 0.0
    %2774 = vmatpush1.msra.mxu0 0.0
    %2775 = vmatprep.subr.mxu0 0.0
    %2776 = vmatpush1.msra.mxu0 0.0
    %2777 = vmatprep.subr.mxu0 0.0
    %2778 = vmatpush1.msra.mxu0 0.0
    %2779 = vmatprep.subr.mxu0 0.0
    %2780 = vmatpush1.msra.mxu0 0.0
    %2781 = vmatprep.subr.mxu0 0.0
    %2782 = vmatpush1.msra.mxu0 0.0
    %2783 = vmatprep.subr.mxu0 0.0
    %2784 = vmatpush1.msra.mxu0 0.0
    %2785 = vmatprep.subr.mxu0 0.0
    %2786 = vmatpush1.msra.mxu0 0.0
    %2787 = vmatprep.subr.mxu0 0.0
    %2788 = vmatpush1.msra.mxu0 0.0
    %2789 = vmatprep.subr.mxu0 0.0
    %2790 = vmatpush1.msra.mxu0 0.0
    %2791 = vmatprep.subr.mxu0 0.0
    %2792 = vmatpush1.msra.mxu0 0.0
    %2793 = vmatprep.subr.mxu0 0.0
    %2794 = vmatpush1.msra.mxu0 0.0
    %2795 = vmatprep.mubr.f32.mxu0 0.0
    %2796 = vmatmul.mubr.f32.gmra.mrb[0].mxu0 %v2729
    %v2797 = vpop.f32.mrb[0].mxu0
    %v2798 = vadd.f32 %v2724, %v2797
    %v2799 = vpop.f32.mrb[0].mxu0
    %2800 = vdwg.mxu0
    %vm2801 = vcmp.ge.f32.partialorder %v2798, 0.0
    %v2802 = vmul.f32 %v2798, 0.01
    %v2803 = vsel %vm2801, %v2798, %v2802
    %v2804 = vld [vmem:[#allocation7] sm:$0x1]
    %v2806 = vlaneseq
    %v2807 = vshrl.u32 %v2806, 7
    %v2808 = vsub.s32 0, %v2807
    %v2809 = vrot.slane %v2804, %v2808
    %v2811 = vmul.f32 %v2803, %v2809
    %vm2812 = vcmask 123904
    %v2813 = vsel %vm2812, %v2811, 0.0
    %2814 = vadd.xlane.f32.xlu0 %v2813
    %v2815 = vpop.xlane.xlu0 %2814
    %s2816 = sld [smem:[#allocation2]]
    %v2817 = vstv %s2816
    %v2818 = vadd.f32 %v2815, %v2817
    %vm2819 = vcmask 1024
    %2820 = vst.msk [vmem:[%s11] sm:$0x3] %vm2819, %v2818
    // Predicated region
    $region58: #{sohlstm_forward.1} parent=1 // pred_check
      _
    $region59: #{sohlstm_forward.1} parent=1 // pred_check_branch
      %2822 = sbr.rel (0) target = $region61
    $region60: #{sohlstm_forward.1} parent=1 // pred_region
      _
    $region61: #{sohlstm_forward.1} parent=1 // pred_fallthru
      _
    // Predicated region
    $region62: #{sohlstm_forward.1} parent=1 // pred_check
      _
    $region63: #{sohlstm_forward.1} parent=1 // pred_check_branch
      %2824 = sbr.rel (0) target = $region65
    $region64: #{sohlstm_forward.1} parent=1 // pred_region
      _
    $region65: #{sohlstm_forward.1} parent=1 // pred_fallthru
      _
    %2825 = vsyncpa [#allocation4], 1
    %2826 = vsyncpa [#allocation6], 1

</llo_original>
